<compile_context>
chip_gen: v7x
topology: tpu7x:2x2x1
jax: 0.10.0
libtpu: 0.0.40
codegen_flags: <defaults>
</compile_context>

<pallas_src>
import math

import jax
import jax.numpy as jnp
from jax.experimental import pallas as pl
from jax.experimental.pallas import tpu as pltpu

# ---- static module config ----
EMBED_DIM = 128
N_HEADS = 4
HEAD_DIM = EMBED_DIM // N_HEADS
MLP_RATIO = 4.0
HIDDEN_DIM = int(MLP_RATIO * EMBED_DIM)
LN_EPS = 1e-6                     # nn.LayerNorm(embed_dim, eps=1e-06)
SCALE = HEAD_DIM ** -0.5          # torch: (embed_dim // n_heads) ** -0.5


# ------------------------- in-kernel helpers -------------------------
def _erf(x):
    # Abramowitz & Stegun 7.1.26 rational approximation (|err| < 1.5e-7, fp32-exact)
    # so we match torch.nn.GELU() (exact erf form).  Kept (vs lax.erf) for guaranteed
    # Mosaic lowering; cost is negligible at these shapes.
    p = 0.3275911
    a1, a2, a3, a4, a5 = 0.254829592, -0.284496736, 1.421413741, -1.453152027, 1.061405429
    sgn = jnp.where(x >= 0.0, 1.0, -1.0)
    ax = jnp.abs(x)
    t = 1.0 / (1.0 + p * ax)
    poly = ((((a5 * t + a4) * t + a3) * t + a2) * t + a1) * t
    return sgn * (1.0 - poly * jnp.exp(-ax * ax))


def _gelu(x):
    return 0.5 * x * (1.0 + _erf(x * (1.0 / math.sqrt(2.0))))


def _layernorm(x, gamma, beta):
    mu = jnp.mean(x, axis=-1, keepdims=True)
    var = jnp.mean(jnp.square(x - mu), axis=-1, keepdims=True)
    return (x - mu) * jax.lax.rsqrt(var + LN_EPS) * gamma + beta


def _softmax_last(x):
    x = x - jnp.max(x, axis=-1, keepdims=True)
    e = jnp.exp(x)
    return e / jnp.sum(e, axis=-1, keepdims=True)


# ------------------------- fused block kernel -------------------------
def _block_kernel(x_ref,
                  ln1_g, ln1_b, wqkv, bqkv, wproj, bproj,
                  ln2_g, ln2_b, w1, b1, w2, b2,
                  out_ref):
    # TODO(synk): optional attention mask path (mask != None) not implemented.
    x = x_ref[0]                                  # (N, D)
    n_tok = x.shape[0]

    # ---------------- attention branch (pre_norm_attn -> attn -> residual) ----------------
    h = _layernorm(x, ln1_g[...], ln1_b[...])

    # Per-head Q/K/V via ONE head-batched matmul; weights are pre-stacked as
    # (3*H, hd, D) so there is no lane-axis slicing or reshape inside the kernel.
    hb = jnp.broadcast_to(h, (3 * N_HEADS, n_tok, EMBED_DIM))             # (3H, N, D)
    qkv = jnp.einsum('gnd,gkd->gnk', hb, wqkv[...],
                     preferred_element_type=jnp.float32) + bqkv[...]      # (3H, N, hd)
    q = qkv[:N_HEADS]                                                     # (H, N, hd)
    k = qkv[N_HEADS:2 * N_HEADS]
    v = qkv[2 * N_HEADS:]

    s = jnp.einsum('hqd,hkd->hqk', q, k,
                   preferred_element_type=jnp.float32) * SCALE            # (H, N, N)
    p = _softmax_last(s)
    o = jnp.einsum('hqk,hkd->hqd', p, v,
                   preferred_element_type=jnp.float32)                    # (H, N, hd)

    # Output projection: one batched (hd, D) matmul per head, then a tiny unrolled
    # head-sum (equivalent to concat(heads) @ Wproj).
    oh = jnp.einsum('hqd,hde->hqe', o, wproj[...],
                    preferred_element_type=jnp.float32)                   # (H, N, D)
    attn = bproj[...]
    for i in range(N_HEADS):
        attn = attn + oh[i]
    x1 = x + attn                                  # residual (dropout p=0.0 == identity)

    # ---------------- MLP branch (pre_norm_mlp -> Linear -> GELU -> Linear -> residual) ----
    h2 = _layernorm(x1, ln2_g[...], ln2_b[...])
    m = jnp.dot(h2, w1[...], preferred_element_type=jnp.float32) + b1[...]
    m = _gelu(m)
    y = jnp.dot(m, w2[...], preferred_element_type=jnp.float32) + b2[...]
    out_ref[0] = x1 + y


# ------------------------- pallas_call wrapper -------------------------
def _const_spec(shape):
    n = len(shape)
    return pl.BlockSpec(shape, lambda b, _n=n: (0,) * _n)


def transformer_block(x, p):
    B, N, D = x.shape
    w_args = (p["ln1_g"], p["ln1_b"], p["wqkv"], p["bqkv"], p["wproj"], p["bproj"],
              p["ln2_g"], p["ln2_b"], p["w1"], p["b1"], p["w2"], p["b2"])
    in_specs = ([pl.BlockSpec((1, N, D), lambda b: (b, 0, 0))] +
                [_const_spec(w.shape) for w in w_args])
    return pl.pallas_call(
        _block_kernel,
        out_shape=jax.ShapeDtypeStruct((B, N, D), jnp.float32),
        grid=(B,),
        in_specs=in_specs,
        out_specs=pl.BlockSpec((1, N, D), lambda b: (b, 0, 0)),
        compiler_params=pltpu.CompilerParams(dimension_semantics=("parallel",)),
    )(x, *w_args)


# ------------------------- pure-JAX reference (same math) -------------------------
def reference_block(x, p):
    def ln(v, g, b):
        mu = jnp.mean(v, -1, keepdims=True)
        var = jnp.mean(jnp.square(v - mu), -1, keepdims=True)
        return (v - mu) * jax.lax.rsqrt(var + LN_EPS) * g + b

    h = ln(x, p["ln1_g"], p["ln1_b"])
    qkv = jnp.einsum('bnd,gkd->bgnk', h, p["wqkv"]) + p["bqkv"]           # (B,3H,N,hd)
    q, k, v = (qkv[:, :N_HEADS], qkv[:, N_HEADS:2 * N_HEADS], qkv[:, 2 * N_HEADS:])
    s = jnp.einsum('bhqd,bhkd->bhqk', q, k) * SCALE
    pa = jax.nn.softmax(s, axis=-1)
    o = jnp.einsum('bhqk,bhkd->bhqd', pa, v)
    attn = jnp.einsum('bhqd,hde->bqe', o, p["wproj"]) + p["bproj"]
    x1 = x + attn
    h2 = ln(x1, p["ln2_g"], p["ln2_b"])
    m = jax.nn.gelu(jnp.einsum('bnd,df->bnf', h2, p["w1"]) + p["b1"], approximate=False)
    y = jnp.einsum('bnf,fd->bnd', m, p["w2"]) + p["b2"]
    return x1 + y


# ------------------------- deterministic parameter init -------------------------
def init_params(key):
    ks = iter(jax.random.split(key, 16))

    def nrm(shape, scale=0.02):
        return scale * jax.random.normal(next(ks), shape, jnp.float32)

    D, H, hd, F = EMBED_DIM, N_HEADS, HEAD_DIM, HIDDEN_DIM
    return dict(
        ln1_g=jnp.ones((1, D), jnp.float32), ln1_b=jnp.zeros((1, D), jnp.float32),
        wqkv=nrm((3 * H, hd, D)),            # per-head-stacked qkv weight
        bqkv=nrm((3 * H, 1, hd)),
        wproj=nrm((H, hd, D)),               # per-head-stacked output projection
        bproj=nrm((1, D)),
        ln2_g=jnp.ones((1, D), jnp.float32), ln2_b=jnp.zeros((1, D), jnp.float32),
        w1=nrm((D, F)), b1=nrm((1, F)),
        w2=nrm((F, D)), b2=nrm((1, D)),
    )


# ------------------------- main -------------------------
if __name__ == "__main__":
    B, N = 2, 8
    key = jax.random.PRNGKey(0)
    k_x, k_p = jax.random.split(key)

    x = jax.random.normal(k_x, (B, N, EMBED_DIM), jnp.float32)
    params = init_params(k_p)

    out = transformer_block(x, params)
    jax.block_until_ready(out)

    ref = reference_block(x, params)
    assert out.shape == (B, N, EMBED_DIM)
    assert bool(jnp.allclose(out, ref, rtol=1e-2, atol=1e-2)), (
        f"max abs err {float(jnp.max(jnp.abs(out - ref)))}")
    print("KERNEL_OK")
</pallas_src>

<mosaic_0001>
module attributes {stable_mosaic.version = 11 : i64} {
  func.func @_block_kernel(%arg0: i32, %arg1: memref<1x8x128xf32, #tpu.memory_space<vmem>>, %arg2: memref<1x128xf32, #tpu.memory_space<vmem>>, %arg3: memref<1x128xf32, #tpu.memory_space<vmem>>, %arg4: memref<12x32x128xf32, #tpu.memory_space<vmem>>, %arg5: memref<12x1x32xf32, #tpu.memory_space<vmem>>, %arg6: memref<4x32x128xf32, #tpu.memory_space<vmem>>, %arg7: memref<1x128xf32, #tpu.memory_space<vmem>>, %arg8: memref<1x128xf32, #tpu.memory_space<vmem>>, %arg9: memref<1x128xf32, #tpu.memory_space<vmem>>, %arg10: memref<128x512xf32, #tpu.memory_space<vmem>>, %arg11: memref<1x512xf32, #tpu.memory_space<vmem>>, %arg12: memref<512x128xf32, #tpu.memory_space<vmem>>, %arg13: memref<1x128xf32, #tpu.memory_space<vmem>>, %arg14: memref<1x8x128xf32, #tpu.memory_space<vmem>>) attributes {dimension_semantics = [#tpu.dimension_semantics<parallel>], iteration_bounds = array<i64: 2>, scalar_prefetch = 0 : i64, scratch_operands = 0 : i64, tpu.core_type = #tpu.core_type<tc>, window_params = [{transform_indices = @transform_0, window_bounds = array<i64: 1, 8, 128>}, {pipeline_mode = #tpu.pipeline_mode<synchronous>, transform_indices = @transform_1, window_bounds = array<i64: 1, 128>}, {pipeline_mode = #tpu.pipeline_mode<synchronous>, transform_indices = @transform_2, window_bounds = array<i64: 1, 128>}, {pipeline_mode = #tpu.pipeline_mode<synchronous>, transform_indices = @transform_3, window_bounds = array<i64: 12, 32, 128>}, {pipeline_mode = #tpu.pipeline_mode<synchronous>, transform_indices = @transform_4, window_bounds = array<i64: 12, 1, 32>}, {pipeline_mode = #tpu.pipeline_mode<synchronous>, transform_indices = @transform_5, window_bounds = array<i64: 4, 32, 128>}, {pipeline_mode = #tpu.pipeline_mode<synchronous>, transform_indices = @transform_6, window_bounds = array<i64: 1, 128>}, {pipeline_mode = #tpu.pipeline_mode<synchronous>, transform_indices = @transform_7, window_bounds = array<i64: 1, 128>}, {pipeline_mode = #tpu.pipeline_mode<synchronous>, transform_indices = @transform_8, window_bounds = array<i64: 1, 128>}, {pipeline_mode = #tpu.pipeline_mode<synchronous>, transform_indices = @transform_9, window_bounds = array<i64: 128, 512>}, {pipeline_mode = #tpu.pipeline_mode<synchronous>, transform_indices = @transform_10, window_bounds = array<i64: 1, 512>}, {pipeline_mode = #tpu.pipeline_mode<synchronous>, transform_indices = @transform_11, window_bounds = array<i64: 512, 128>}, {pipeline_mode = #tpu.pipeline_mode<synchronous>, transform_indices = @transform_12, window_bounds = array<i64: 1, 128>}, {transform_indices = @transform_13, window_bounds = array<i64: 1, 8, 128>}]} {
    %c0 = arith.constant 0 : index
    %c0_0 = arith.constant 0 : index
    %c0_1 = arith.constant 0 : index
    %0 = vector.load %arg1[%c0, %c0_0, %c0_1] : memref<1x8x128xf32, #tpu.memory_space<vmem>>, vector<1x8x128xf32>
    %1 = vector.shape_cast %0 : vector<1x8x128xf32> to vector<8x128xf32>
    %c0_2 = arith.constant 0 : index
    %c0_3 = arith.constant 0 : index
    %2 = vector.load %arg2[%c0_2, %c0_3] : memref<1x128xf32, #tpu.memory_space<vmem>>, vector<1x128xf32>
    %c0_4 = arith.constant 0 : index
    %c0_5 = arith.constant 0 : index
    %3 = vector.load %arg3[%c0_4, %c0_5] : memref<1x128xf32, #tpu.memory_space<vmem>>, vector<1x128xf32>
    %cst = arith.constant dense<0.000000e+00> : vector<8xf32>
    %4 = vector.multi_reduction <add>, %1, %cst [1] : vector<8x128xf32> to vector<8xf32>
    %5 = vector.shape_cast %4 : vector<8xf32> to vector<8x1xf32>
    %cst_6 = arith.constant 1.280000e+02 : f32
    %6 = vector.broadcast %cst_6 : f32 to vector<8x1xf32>
    %7 = arith.divf %5, %6 : vector<8x1xf32>
    %8 = vector.broadcast %7 : vector<8x1xf32> to vector<8x128xf32>
    %9 = arith.subf %1, %8 : vector<8x128xf32>
    %10 = arith.mulf %9, %9 : vector<8x128xf32>
    %cst_7 = arith.constant dense<0.000000e+00> : vector<8xf32>
    %11 = vector.multi_reduction <add>, %10, %cst_7 [1] : vector<8x128xf32> to vector<8xf32>
    %12 = vector.shape_cast %11 : vector<8xf32> to vector<8x1xf32>
    %cst_8 = arith.constant 1.280000e+02 : f32
    %13 = vector.broadcast %cst_8 : f32 to vector<8x1xf32>
    %14 = arith.divf %12, %13 : vector<8x1xf32>
    %15 = vector.broadcast %7 : vector<8x1xf32> to vector<8x128xf32>
    %16 = arith.subf %1, %15 : vector<8x128xf32>
    %cst_9 = arith.constant 9.99999997E-7 : f32
    %17 = vector.broadcast %cst_9 : f32 to vector<8x1xf32>
    %18 = arith.addf %14, %17 : vector<8x1xf32>
    %19 = math.rsqrt %18 : vector<8x1xf32>
    %20 = vector.broadcast %19 : vector<8x1xf32> to vector<8x128xf32>
    %21 = arith.mulf %16, %20 : vector<8x128xf32>
    %22 = vector.broadcast %2 : vector<1x128xf32> to vector<8x128xf32>
    %23 = arith.mulf %21, %22 : vector<8x128xf32>
    %24 = vector.broadcast %3 : vector<1x128xf32> to vector<8x128xf32>
    %25 = arith.addf %23, %24 : vector<8x128xf32>
    %26 = vector.shape_cast %25 : vector<8x128xf32> to vector<1x8x128xf32>
    %27 = vector.broadcast %26 : vector<1x8x128xf32> to vector<12x8x128xf32>
    %c0_10 = arith.constant 0 : index
    %c0_11 = arith.constant 0 : index
    %c0_12 = arith.constant 0 : index
    %28 = vector.load %arg4[%c0_10, %c0_11, %c0_12] : memref<12x32x128xf32, #tpu.memory_space<vmem>>, vector<12x32x128xf32>
    "tpu.trace_start"() <{level = 10 : i32, message = "gnd,gkd->gnk"}> : () -> ()
    %cst_13 = arith.constant dense<0.000000e+00> : vector<12x8x32xf32>
    %29 = tpu.matmul %27, %28, %cst_13 {dimension_numbers = #tpu.dot_dimension_numbers<[2], [2], [1], [1], [0, 0, 0, 1, 1, 1], [0], [0]>} : vector<12x8x128xf32>, vector<12x32x128xf32>, vector<12x8x32xf32> -> vector<12x8x32xf32>
    "tpu.trace_stop"() : () -> ()
    %c0_14 = arith.constant 0 : index
    %c0_15 = arith.constant 0 : index
    %c0_16 = arith.constant 0 : index
    %30 = vector.load %arg5[%c0_14, %c0_15, %c0_16] : memref<12x1x32xf32, #tpu.memory_space<vmem>>, vector<12x1x32xf32>
    %31 = vector.broadcast %30 : vector<12x1x32xf32> to vector<12x8x32xf32>
    %32 = arith.addf %29, %31 : vector<12x8x32xf32>
    %33 = vector.extract_strided_slice %32 {offsets = [0, 0, 0], sizes = [4, 8, 32], strides = [1, 1, 1]} : vector<12x8x32xf32> to vector<4x8x32xf32>
    %34 = vector.extract_strided_slice %32 {offsets = [4, 0, 0], sizes = [4, 8, 32], strides = [1, 1, 1]} : vector<12x8x32xf32> to vector<4x8x32xf32>
    %35 = vector.extract_strided_slice %32 {offsets = [8, 0, 0], sizes = [4, 8, 32], strides = [1, 1, 1]} : vector<12x8x32xf32> to vector<4x8x32xf32>
    "tpu.trace_start"() <{level = 10 : i32, message = "hqd,hkd->hqk"}> : () -> ()
    %cst_17 = arith.constant dense<0.000000e+00> : vector<4x8x8xf32>
    %36 = tpu.matmul %33, %34, %cst_17 {dimension_numbers = #tpu.dot_dimension_numbers<[2], [2], [1], [1], [0, 0, 0, 1, 1, 1], [0], [0]>} : vector<4x8x32xf32>, vector<4x8x32xf32>, vector<4x8x8xf32> -> vector<4x8x8xf32>
    "tpu.trace_stop"() : () -> ()
    %cst_18 = arith.constant 0.176776692 : f32
    %37 = vector.broadcast %cst_18 : f32 to vector<4x8x8xf32>
    %38 = arith.mulf %36, %37 : vector<4x8x8xf32>
    %cst_19 = arith.constant dense<0xFF800000> : vector<4x8xf32>
    %39 = vector.multi_reduction <maximumf>, %38, %cst_19 [2] : vector<4x8x8xf32> to vector<4x8xf32>
    %40 = vector.shape_cast %39 : vector<4x8xf32> to vector<4x8x1xf32>
    %41 = vector.broadcast %40 : vector<4x8x1xf32> to vector<4x8x8xf32>
    %42 = arith.subf %38, %41 : vector<4x8x8xf32>
    %43 = math.exp %42 : vector<4x8x8xf32>
    %cst_20 = arith.constant dense<0.000000e+00> : vector<4x8xf32>
    %44 = vector.multi_reduction <add>, %43, %cst_20 [2] : vector<4x8x8xf32> to vector<4x8xf32>
    %45 = vector.shape_cast %44 : vector<4x8xf32> to vector<4x8x1xf32>
    %46 = vector.broadcast %45 : vector<4x8x1xf32> to vector<4x8x8xf32>
    %47 = arith.divf %43, %46 : vector<4x8x8xf32>
    "tpu.trace_start"() <{level = 10 : i32, message = "hqk,hkd->hqd"}> : () -> ()
    %cst_21 = arith.constant dense<0.000000e+00> : vector<4x8x32xf32>
    %48 = tpu.matmul %47, %35, %cst_21 {dimension_numbers = #tpu.dot_dimension_numbers<[2], [1], [1], [2], [0, 0, 0, 1, 1, 2], [0], [0]>} : vector<4x8x8xf32>, vector<4x8x32xf32>, vector<4x8x32xf32> -> vector<4x8x32xf32>
    "tpu.trace_stop"() : () -> ()
    %c0_22 = arith.constant 0 : index
    %c0_23 = arith.constant 0 : index
    %c0_24 = arith.constant 0 : index
    %49 = vector.load %arg6[%c0_22, %c0_23, %c0_24] : memref<4x32x128xf32, #tpu.memory_space<vmem>>, vector<4x32x128xf32>
    "tpu.trace_start"() <{level = 10 : i32, message = "hqd,hde->hqe"}> : () -> ()
    %cst_25 = arith.constant dense<0.000000e+00> : vector<4x8x128xf32>
    %50 = tpu.matmul %48, %49, %cst_25 {dimension_numbers = #tpu.dot_dimension_numbers<[2], [1], [1], [2], [0, 0, 0, 1, 1, 2], [0], [0]>} : vector<4x8x32xf32>, vector<4x32x128xf32>, vector<4x8x128xf32> -> vector<4x8x128xf32>
    "tpu.trace_stop"() : () -> ()
    %c0_26 = arith.constant 0 : index
    %c0_27 = arith.constant 0 : index
    %51 = vector.load %arg7[%c0_26, %c0_27] : memref<1x128xf32, #tpu.memory_space<vmem>>, vector<1x128xf32>
    %52 = vector.extract_strided_slice %50 {offsets = [0, 0, 0], sizes = [1, 8, 128], strides = [1, 1, 1]} : vector<4x8x128xf32> to vector<1x8x128xf32>
    %53 = vector.shape_cast %52 : vector<1x8x128xf32> to vector<8x128xf32>
    %54 = vector.broadcast %51 : vector<1x128xf32> to vector<8x128xf32>
    %55 = arith.addf %54, %53 : vector<8x128xf32>
    %56 = vector.extract_strided_slice %50 {offsets = [1, 0, 0], sizes = [1, 8, 128], strides = [1, 1, 1]} : vector<4x8x128xf32> to vector<1x8x128xf32>
    %57 = vector.shape_cast %56 : vector<1x8x128xf32> to vector<8x128xf32>
    %58 = arith.addf %55, %57 : vector<8x128xf32>
    %59 = vector.extract_strided_slice %50 {offsets = [2, 0, 0], sizes = [1, 8, 128], strides = [1, 1, 1]} : vector<4x8x128xf32> to vector<1x8x128xf32>
    %60 = vector.shape_cast %59 : vector<1x8x128xf32> to vector<8x128xf32>
    %61 = arith.addf %58, %60 : vector<8x128xf32>
    %62 = vector.extract_strided_slice %50 {offsets = [3, 0, 0], sizes = [1, 8, 128], strides = [1, 1, 1]} : vector<4x8x128xf32> to vector<1x8x128xf32>
    %63 = vector.shape_cast %62 : vector<1x8x128xf32> to vector<8x128xf32>
    %64 = arith.addf %61, %63 : vector<8x128xf32>
    %65 = arith.addf %1, %64 : vector<8x128xf32>
    %c0_28 = arith.constant 0 : index
    %c0_29 = arith.constant 0 : index
    %66 = vector.load %arg8[%c0_28, %c0_29] : memref<1x128xf32, #tpu.memory_space<vmem>>, vector<1x128xf32>
    %c0_30 = arith.constant 0 : index
    %c0_31 = arith.constant 0 : index
    %67 = vector.load %arg9[%c0_30, %c0_31] : memref<1x128xf32, #tpu.memory_space<vmem>>, vector<1x128xf32>
    %cst_32 = arith.constant dense<0.000000e+00> : vector<8xf32>
    %68 = vector.multi_reduction <add>, %65, %cst_32 [1] : vector<8x128xf32> to vector<8xf32>
    %69 = vector.shape_cast %68 : vector<8xf32> to vector<8x1xf32>
    %cst_33 = arith.constant 1.280000e+02 : f32
    %70 = vector.broadcast %cst_33 : f32 to vector<8x1xf32>
    %71 = arith.divf %69, %70 : vector<8x1xf32>
    %72 = vector.broadcast %71 : vector<8x1xf32> to vector<8x128xf32>
    %73 = arith.subf %65, %72 : vector<8x128xf32>
    %74 = arith.mulf %73, %73 : vector<8x128xf32>
    %cst_34 = arith.constant dense<0.000000e+00> : vector<8xf32>
    %75 = vector.multi_reduction <add>, %74, %cst_34 [1] : vector<8x128xf32> to vector<8xf32>
    %76 = vector.shape_cast %75 : vector<8xf32> to vector<8x1xf32>
    %cst_35 = arith.constant 1.280000e+02 : f32
    %77 = vector.broadcast %cst_35 : f32 to vector<8x1xf32>
    %78 = arith.divf %76, %77 : vector<8x1xf32>
    %79 = vector.broadcast %71 : vector<8x1xf32> to vector<8x128xf32>
    %80 = arith.subf %65, %79 : vector<8x128xf32>
    %cst_36 = arith.constant 9.99999997E-7 : f32
    %81 = vector.broadcast %cst_36 : f32 to vector<8x1xf32>
    %82 = arith.addf %78, %81 : vector<8x1xf32>
    %83 = math.rsqrt %82 : vector<8x1xf32>
    %84 = vector.broadcast %83 : vector<8x1xf32> to vector<8x128xf32>
    %85 = arith.mulf %80, %84 : vector<8x128xf32>
    %86 = vector.broadcast %66 : vector<1x128xf32> to vector<8x128xf32>
    %87 = arith.mulf %85, %86 : vector<8x128xf32>
    %88 = vector.broadcast %67 : vector<1x128xf32> to vector<8x128xf32>
    %89 = arith.addf %87, %88 : vector<8x128xf32>
    %c0_37 = arith.constant 0 : index
    %c0_38 = arith.constant 0 : index
    %90 = vector.load %arg10[%c0_37, %c0_38] : memref<128x512xf32, #tpu.memory_space<vmem>>, vector<128x512xf32>
    %cst_39 = arith.constant dense<0.000000e+00> : vector<8x512xf32>
    %91 = tpu.matmul %89, %90, %cst_39 {dimension_numbers = #tpu.dot_dimension_numbers<[1], [0], [0], [1], [0, 0, 1, 1], [], []>} : vector<8x128xf32>, vector<128x512xf32>, vector<8x512xf32> -> vector<8x512xf32>
    %c0_40 = arith.constant 0 : index
    %c0_41 = arith.constant 0 : index
    %92 = vector.load %arg11[%c0_40, %c0_41] : memref<1x512xf32, #tpu.memory_space<vmem>>, vector<1x512xf32>
    %93 = vector.broadcast %92 : vector<1x512xf32> to vector<8x512xf32>
    %94 = arith.addf %91, %93 : vector<8x512xf32>
    %cst_42 = arith.constant 5.000000e-01 : f32
    %95 = vector.broadcast %cst_42 : f32 to vector<8x512xf32>
    %96 = arith.mulf %95, %94 : vector<8x512xf32>
    %cst_43 = arith.constant 0.707106769 : f32
    %97 = vector.broadcast %cst_43 : f32 to vector<8x512xf32>
    %98 = arith.mulf %94, %97 : vector<8x512xf32>
    %cst_44 = arith.constant 0.000000e+00 : f32
    %99 = vector.broadcast %cst_44 : f32 to vector<8x512xf32>
    %100 = arith.cmpf oge, %98, %99 : vector<8x512xf32>
    %cst_45 = arith.constant 1.000000e+00 : f32
    %cst_46 = arith.constant -1.000000e+00 : f32
    %101 = vector.broadcast %cst_45 : f32 to vector<8x512xf32>
    %102 = vector.broadcast %cst_46 : f32 to vector<8x512xf32>
    %103 = arith.select %100, %101, %102 : vector<8x512xi1>, vector<8x512xf32>
    %104 = math.absf %98 : vector<8x512xf32>
    %cst_47 = arith.constant 0.327591091 : f32
    %105 = vector.broadcast %cst_47 : f32 to vector<8x512xf32>
    %106 = arith.mulf %105, %104 : vector<8x512xf32>
    %cst_48 = arith.constant 1.000000e+00 : f32
    %107 = vector.broadcast %cst_48 : f32 to vector<8x512xf32>
    %108 = arith.addf %107, %106 : vector<8x512xf32>
    %cst_49 = arith.constant 1.000000e+00 : f32
    %109 = vector.broadcast %cst_49 : f32 to vector<8x512xf32>
    %110 = arith.divf %109, %108 : vector<8x512xf32>
    %cst_50 = arith.constant 1.06140542 : f32
    %111 = vector.broadcast %cst_50 : f32 to vector<8x512xf32>
    %112 = arith.mulf %111, %110 : vector<8x512xf32>
    %cst_51 = arith.constant -1.45315206 : f32
    %113 = vector.broadcast %cst_51 : f32 to vector<8x512xf32>
    %114 = arith.addf %112, %113 : vector<8x512xf32>
    %115 = arith.mulf %114, %110 : vector<8x512xf32>
    %cst_52 = arith.constant 1.42141378 : f32
    %116 = vector.broadcast %cst_52 : f32 to vector<8x512xf32>
    %117 = arith.addf %115, %116 : vector<8x512xf32>
    %118 = arith.mulf %117, %110 : vector<8x512xf32>
    %cst_53 = arith.constant -0.284496725 : f32
    %119 = vector.broadcast %cst_53 : f32 to vector<8x512xf32>
    %120 = arith.addf %118, %119 : vector<8x512xf32>
    %121 = arith.mulf %120, %110 : vector<8x512xf32>
    %cst_54 = arith.constant 0.254829586 : f32
    %122 = vector.broadcast %cst_54 : f32 to vector<8x512xf32>
    %123 = arith.addf %121, %122 : vector<8x512xf32>
    %124 = arith.mulf %123, %110 : vector<8x512xf32>
    %cst_55 = arith.constant 0.000000e+00 : f32
    %125 = vector.broadcast %cst_55 : f32 to vector<8x512xf32>
    %126 = arith.subf %125, %104 : vector<8x512xf32>
    %127 = arith.mulf %126, %104 : vector<8x512xf32>
    %128 = math.exp %127 : vector<8x512xf32>
    %129 = arith.mulf %124, %128 : vector<8x512xf32>
    %cst_56 = arith.constant 1.000000e+00 : f32
    %130 = vector.broadcast %cst_56 : f32 to vector<8x512xf32>
    %131 = arith.subf %130, %129 : vector<8x512xf32>
    %132 = arith.mulf %103, %131 : vector<8x512xf32>
    %cst_57 = arith.constant 1.000000e+00 : f32
    %133 = vector.broadcast %cst_57 : f32 to vector<8x512xf32>
    %134 = arith.addf %133, %132 : vector<8x512xf32>
    %135 = arith.mulf %96, %134 : vector<8x512xf32>
    %c0_58 = arith.constant 0 : index
    %c0_59 = arith.constant 0 : index
    %136 = vector.load %arg12[%c0_58, %c0_59] : memref<512x128xf32, #tpu.memory_space<vmem>>, vector<512x128xf32>
    %cst_60 = arith.constant dense<0.000000e+00> : vector<8x128xf32>
    %137 = tpu.matmul %135, %136, %cst_60 {dimension_numbers = #tpu.dot_dimension_numbers<[1], [0], [0], [1], [0, 0, 1, 1], [], []>} : vector<8x512xf32>, vector<512x128xf32>, vector<8x128xf32> -> vector<8x128xf32>
    %c0_61 = arith.constant 0 : index
    %c0_62 = arith.constant 0 : index
    %138 = vector.load %arg13[%c0_61, %c0_62] : memref<1x128xf32, #tpu.memory_space<vmem>>, vector<1x128xf32>
    %139 = vector.broadcast %138 : vector<1x128xf32> to vector<8x128xf32>
    %140 = arith.addf %137, %139 : vector<8x128xf32>
    %141 = arith.addf %65, %140 : vector<8x128xf32>
    %c0_63 = arith.constant 0 : index
    %c0_64 = arith.constant 0 : index
    %c0_65 = arith.constant 0 : index
    %142 = vector.load %arg14[%c0_63, %c0_64, %c0_65] : memref<1x8x128xf32, #tpu.memory_space<vmem>>, vector<1x8x128xf32>
    %143 = vector.shape_cast %142 : vector<1x8x128xf32> to vector<8x128xf32>
    %144 = vector.shape_cast %141 : vector<8x128xf32> to vector<1x8x128xf32>
    tpu.vector_store %arg14[%c0_63, %c0_64, %c0_65], %144 {strides = array<i32>} : memref<1x8x128xf32, #tpu.memory_space<vmem>>, vector<1x8x128xf32>,
    return
  }
  func.func @transform_0(%arg0: i32) -> (i32, i32, i32) {
    %c0_i32 = arith.constant 0 : i32
    %c0_i32_0 = arith.constant 0 : i32
    %c0_i32_1 = arith.constant 0 : i32
    return %arg0, %c0_i32, %c0_i32_0 : i32, i32, i32
  }
  func.func @transform_1(%arg0: i32) -> (i32, i32) {
    %c0_i32 = arith.constant 0 : i32
    %c0_i32_0 = arith.constant 0 : i32
    %c0_i32_1 = arith.constant 0 : i32
    return %c0_i32, %c0_i32_0 : i32, i32
  }
  func.func @transform_2(%arg0: i32) -> (i32, i32) {
    %c0_i32 = arith.constant 0 : i32
    %c0_i32_0 = arith.constant 0 : i32
    %c0_i32_1 = arith.constant 0 : i32
    return %c0_i32, %c0_i32_0 : i32, i32
  }
  func.func @transform_3(%arg0: i32) -> (i32, i32, i32) {
    %c0_i32 = arith.constant 0 : i32
    %c0_i32_0 = arith.constant 0 : i32
    %c0_i32_1 = arith.constant 0 : i32
    %c0_i32_2 = arith.constant 0 : i32
    return %c0_i32, %c0_i32_0, %c0_i32_1 : i32, i32, i32
  }
  func.func @transform_4(%arg0: i32) -> (i32, i32, i32) {
    %c0_i32 = arith.constant 0 : i32
    %c0_i32_0 = arith.constant 0 : i32
    %c0_i32_1 = arith.constant 0 : i32
    %c0_i32_2 = arith.constant 0 : i32
    return %c0_i32, %c0_i32_0, %c0_i32_1 : i32, i32, i32
  }
  func.func @transform_5(%arg0: i32) -> (i32, i32, i32) {
    %c0_i32 = arith.constant 0 : i32
    %c0_i32_0 = arith.constant 0 : i32
    %c0_i32_1 = arith.constant 0 : i32
    %c0_i32_2 = arith.constant 0 : i32
    return %c0_i32, %c0_i32_0, %c0_i32_1 : i32, i32, i32
  }
  func.func @transform_6(%arg0: i32) -> (i32, i32) {
    %c0_i32 = arith.constant 0 : i32
    %c0_i32_0 = arith.constant 0 : i32
    %c0_i32_1 = arith.constant 0 : i32
    return %c0_i32, %c0_i32_0 : i32, i32
  }
  func.func @transform_7(%arg0: i32) -> (i32, i32) {
    %c0_i32 = arith.constant 0 : i32
    %c0_i32_0 = arith.constant 0 : i32
    %c0_i32_1 = arith.constant 0 : i32
    return %c0_i32, %c0_i32_0 : i32, i32
  }
  func.func @transform_8(%arg0: i32) -> (i32, i32) {
    %c0_i32 = arith.constant 0 : i32
    %c0_i32_0 = arith.constant 0 : i32
    %c0_i32_1 = arith.constant 0 : i32
    return %c0_i32, %c0_i32_0 : i32, i32
  }
  func.func @transform_9(%arg0: i32) -> (i32, i32) {
    %c0_i32 = arith.constant 0 : i32
    %c0_i32_0 = arith.constant 0 : i32
    %c0_i32_1 = arith.constant 0 : i32
    return %c0_i32, %c0_i32_0 : i32, i32
  }
  func.func @transform_10(%arg0: i32) -> (i32, i32) {
    %c0_i32 = arith.constant 0 : i32
    %c0_i32_0 = arith.constant 0 : i32
    %c0_i32_1 = arith.constant 0 : i32
    return %c0_i32, %c0_i32_0 : i32, i32
  }
  func.func @transform_11(%arg0: i32) -> (i32, i32) {
    %c0_i32 = arith.constant 0 : i32
    %c0_i32_0 = arith.constant 0 : i32
    %c0_i32_1 = arith.constant 0 : i32
    return %c0_i32, %c0_i32_0 : i32, i32
  }
  func.func @transform_12(%arg0: i32) -> (i32, i32) {
    %c0_i32 = arith.constant 0 : i32
    %c0_i32_0 = arith.constant 0 : i32
    %c0_i32_1 = arith.constant 0 : i32
    return %c0_i32, %c0_i32_0 : i32, i32
  }
  func.func @transform_13(%arg0: i32) -> (i32, i32, i32) {
    %c0_i32 = arith.constant 0 : i32
    %c0_i32_0 = arith.constant 0 : i32
    %c0_i32_1 = arith.constant 0 : i32
    return %arg0, %c0_i32, %c0_i32_0 : i32, i32, i32
  }
}

</mosaic_0001>

<llo_original>
// kernel: tpu_custom_call.1
$region0: #{tpu_custom_call.1}
  #allocation0 [shape = 'u32[]', space=smem, size = 0x4, offset = 0x4, fixed_abs, tag = 'smem constant byte address 0x4 - core index']
  #allocation1 [shape = 'u32[144,128]{1,0:T(1,128)}', space=vmem, size = 0x12000, scoped, tag = 'internal scratch']
  %s0 = inlined_call_operand.hbm [shape: f32[2,8,128], index: 0, kind: input, shape index: {}]
  %s1 = inlined_call_operand.vmem [shape: f32[1,128], index: 1, kind: input, shape index: {}]
  %s2 = inlined_call_operand.vmem [shape: f32[1,128], index: 2, kind: input, shape index: {}]
  %s3 = inlined_call_operand.hbm [shape: f32[12,32,128], index: 3, kind: input, shape index: {}]
  %s4 = inlined_call_operand.vmem [shape: f32[12,1,32], index: 4, kind: input, shape index: {}]
  %s5 = inlined_call_operand.hbm [shape: f32[4,32,128], index: 5, kind: input, shape index: {}]
  %s6 = inlined_call_operand.vmem [shape: f32[1,128], index: 6, kind: input, shape index: {}]
  %s7 = inlined_call_operand.vmem [shape: f32[1,128], index: 7, kind: input, shape index: {}]
  %s8 = inlined_call_operand.vmem [shape: f32[1,128], index: 8, kind: input, shape index: {}]
  %s9 = inlined_call_operand.hbm [shape: f32[128,512], index: 9, kind: input, shape index: {}]
  %s10 = inlined_call_operand.vmem [shape: f32[1,512], index: 10, kind: input, shape index: {}]
  %s11 = inlined_call_operand.hbm [shape: f32[512,128], index: 11, kind: input, shape index: {}]
  %s12 = inlined_call_operand.vmem [shape: f32[1,128], index: 12, kind: input, shape index: {}]
  %s13 = inlined_call_operand.hbm [shape: f32[2,8,128], index: 13, kind: output, shape index: {}]
  %s14 = sld [smem:[#allocation0]]
  $region105: #{tpu_custom_call.1} parent=0
    _
  %s16 = ssub.s32 1, %s14
  %s17 = scalar_select 0, %s16, %s14
  $region1: #{tpu_custom_call.1} parent=0
    #allocation2 [shape = 'u8[8192]{0}', space=vmem, size = 0x2000, scoped, tag = 'input window, operand 0']
    #allocation3 [shape = 's32[2]{0}', space=sflag, size = 0x8, scoped, tag = 'scoped memory for tpu_custom_call.1']
    #allocation4 [shape = 's32[2]{0}', space=sflag, size = 0x8, scoped, tag = 'scoped memory for tpu_custom_call.1']
    #allocation5 [shape = 'u8[196608]{0}', space=vmem, size = 0x30000, scoped, tag = 'input window, operand 3, single buffered']
    #allocation6 [shape = 's32[1]{0}', space=sflag, size = 0x4, scoped, tag = 'scoped memory for tpu_custom_call.1']
    #allocation7 [shape = 'u8[65536]{0}', space=vmem, size = 0x10000, scoped, tag = 'input window, operand 5, single buffered']
    #allocation8 [shape = 'u8[262144]{0}', space=vmem, size = 0x40000, scoped, tag = 'input window, operand 9, single buffered']
    #allocation9 [shape = 's32[1]{0}', space=sflag, size = 0x4, scoped, tag = 'scoped memory for tpu_custom_call.1']
    #allocation10 [shape = 'u8[262144]{0}', space=vmem, size = 0x40000, scoped, tag = 'input window, operand 11, single buffered']
    #allocation11 [shape = 'u8[8192]{0}', space=vmem, size = 0x2000, scoped, tag = 'output window, operand 0']
    %18 = vsyncpa [#allocation3], 0
    %s19 = scalar_lea.sflag [#allocation3], 1
    %20 = vsyncpa %s19, 0
    %21 = vsyncpa [#allocation6], 0
    %22 = vsyncpa [#allocation9], 0
    %23 = vsyncpa [#allocation4], 0
    %s24 = scalar_lea.sflag [#allocation4], 1
    %25 = vsyncpa %s24, 0
    loop: start=0, step=1, limit=4
    $region2: #{tpu_custom_call.1} parent=1 // loop_pre_header
      _
    $region3: #{tpu_custom_call.1} parent=1 // loop_header
      %s27 = sphi 0, %s31
      %p28 = scmp.ge.s32.totalorder %s27, 4
      %s37 = sphi 0, %s39
      %s40 = sphi 0, %s37
      %s41 = sphi 0, %s40
      %s57 = sphi 0, %s41
      %s61 = sphi 0, %s61
      %s63 = sphi 0, %s61
      %s64 = sphi 0, %s63
      %s78 = sphi 0, %s64
      %s82 = sphi 0, %s82
      %s84 = sphi 0, %s82
      %s85 = sphi 0, %s84
      %s99 = sphi 0, %s85
      %s103 = sphi 0, %s103
      %s105 = sphi 0, %s103
      %s106 = sphi 0, %s105
      %s120 = sphi 0, %s106
      %s124 = sphi 0, %s124
      %s126 = sphi 0, %s124
      %s127 = sphi 0, %s126
      %s141 = sphi 0, %s127
      %s145 = sphi 0, %s145
      %s147 = sphi 0, %s145
      %s148 = sphi 0, %s147
      %s162 = sphi 0, %s148
      %s166 = sphi 0, %s166
      %s168 = sphi 0, %s166
      %s169 = sphi 0, %s168
      %s183 = sphi 0, %s169
      %s187 = sphi 0, %s187
      %s189 = sphi 0, %s187
      %s190 = sphi 0, %s189
      %s204 = sphi 0, %s190
      %s208 = sphi 0, %s208
      %s210 = sphi 0, %s208
      %s211 = sphi 0, %s210
      %s225 = sphi 0, %s211
      %s229 = sphi 0, %s229
      %s231 = sphi 0, %s229
      %s232 = sphi 0, %s231
      %s246 = sphi 0, %s232
      %s250 = sphi 0, %s250
      %s252 = sphi 0, %s250
      %s253 = sphi 0, %s252
      %s267 = sphi 0, %s253
      %s271 = sphi 0, %s271
      %s273 = sphi 0, %s271
      %s274 = sphi 0, %s273
      %s288 = sphi 0, %s274
      %s292 = sphi 0, %s292
      %s294 = sphi 0, %s292
      %s295 = sphi 0, %s294
      %s309 = sphi 0, %s295
      %s315 = sphi 0, %s317
      %s318 = sphi 0, %s315
      %s319 = sphi 0, %s318
      %s335 = sphi 0, %s319
    $region4: #{tpu_custom_call.1} parent=1 // loop_header_branch
      %30 = sbr.rel (%p28) target = $region8
    $region5: #{tpu_custom_call.1} parent=1 // loop_body
      %s32 = ssub.s32 %s27, 1
      %s33 = ssub.s32 %s27, 2
      %s34 = sadd.s32 %s27, 1
      %s35 = ssub.s32 %s27, %s34
      %p36 = scmp.eq.s32.totalorder %s35, 0
      %s38 = sadd.s32 %s37, 1
      %s39 = scalar_select %p36, %s37, %s38
      %p42 = pneg %p36
      %p43 = scmp.eq.s32.totalorder %s27, 1
      %p44 = por %p42, %p43
      %p45 = scmp.ne.s32.totalorder %s37, %s40
      %p46 = scmp.eq.s32.totalorder %s27, 0
      %p47 = por %p45, %p46
      %p48 = scmp.ne.s32.totalorder %s37, %s40
      %p49 = scmp.eq.s32.totalorder %s32, 1
      %p50 = por %p48, %p49
      %p51 = scmp.ne.s32.totalorder %s40, %s41
      %p52 = scmp.eq.s32.totalorder %s32, 0
      %p53 = por %p51, %p52
      %p54 = scmp.ne.s32.totalorder %s40, %s41
      %p55 = scmp.eq.s32.totalorder %s33, 1
      %p56 = por %p54, %p55
      %p58 = scmp.ne.s32.totalorder %s41, %s57
      %p59 = scmp.eq.s32.totalorder %s33, 0
      %p60 = por %p58, %p59
      %s62 = sadd.s32 %s61, 1
      %p65 = scmp.eq.s32.totalorder %s27, 1
      %p66 = scmp.ne.s32.totalorder %s61, %s63
      %p67 = scmp.eq.s32.totalorder %s27, 0
      %p68 = por %p66, %p67
      %p69 = scmp.ne.s32.totalorder %s61, %s63
      %p70 = scmp.eq.s32.totalorder %s32, 1
      %p71 = por %p69, %p70
      %p72 = scmp.ne.s32.totalorder %s63, %s64
      %p73 = scmp.eq.s32.totalorder %s32, 0
      %p74 = por %p72, %p73
      %p75 = scmp.ne.s32.totalorder %s63, %s64
      %p76 = scmp.eq.s32.totalorder %s33, 1
      %p77 = por %p75, %p76
      %p79 = scmp.ne.s32.totalorder %s64, %s78
      %p80 = scmp.eq.s32.totalorder %s33, 0
      %p81 = por %p79, %p80
      %s83 = sadd.s32 %s82, 1
      %p86 = scmp.eq.s32.totalorder %s27, 1
      %p87 = scmp.ne.s32.totalorder %s82, %s84
      %p88 = scmp.eq.s32.totalorder %s27, 0
      %p89 = por %p87, %p88
      %p90 = scmp.ne.s32.totalorder %s82, %s84
      %p91 = scmp.eq.s32.totalorder %s32, 1
      %p92 = por %p90, %p91
      %p93 = scmp.ne.s32.totalorder %s84, %s85
      %p94 = scmp.eq.s32.totalorder %s32, 0
      %p95 = por %p93, %p94
      %p96 = scmp.ne.s32.totalorder %s84, %s85
      %p97 = scmp.eq.s32.totalorder %s33, 1
      %p98 = por %p96, %p97
      %p100 = scmp.ne.s32.totalorder %s85, %s99
      %p101 = scmp.eq.s32.totalorder %s33, 0
      %p102 = por %p100, %p101
      %s104 = sadd.s32 %s103, 1
      %p107 = scmp.eq.s32.totalorder %s27, 1
      %p108 = scmp.ne.s32.totalorder %s103, %s105
      %p109 = scmp.eq.s32.totalorder %s27, 0
      %p110 = por %p108, %p109
      %p111 = scmp.ne.s32.totalorder %s103, %s105
      %p112 = scmp.eq.s32.totalorder %s32, 1
      %p113 = por %p111, %p112
      %p114 = scmp.ne.s32.totalorder %s105, %s106
      %p115 = scmp.eq.s32.totalorder %s32, 0
      %p116 = por %p114, %p115
      %p117 = scmp.ne.s32.totalorder %s105, %s106
      %p118 = scmp.eq.s32.totalorder %s33, 1
      %p119 = por %p117, %p118
      %p121 = scmp.ne.s32.totalorder %s106, %s120
      %p122 = scmp.eq.s32.totalorder %s33, 0
      %p123 = por %p121, %p122
      %s125 = sadd.s32 %s124, 1
      %p128 = scmp.eq.s32.totalorder %s27, 1
      %p129 = scmp.ne.s32.totalorder %s124, %s126
      %p130 = scmp.eq.s32.totalorder %s27, 0
      %p131 = por %p129, %p130
      %p132 = scmp.ne.s32.totalorder %s124, %s126
      %p133 = scmp.eq.s32.totalorder %s32, 1
      %p134 = por %p132, %p133
      %p135 = scmp.ne.s32.totalorder %s126, %s127
      %p136 = scmp.eq.s32.totalorder %s32, 0
      %p137 = por %p135, %p136
      %p138 = scmp.ne.s32.totalorder %s126, %s127
      %p139 = scmp.eq.s32.totalorder %s33, 1
      %p140 = por %p138, %p139
      %p142 = scmp.ne.s32.totalorder %s127, %s141
      %p143 = scmp.eq.s32.totalorder %s33, 0
      %p144 = por %p142, %p143
      %s146 = sadd.s32 %s145, 1
      %p149 = scmp.eq.s32.totalorder %s27, 1
      %p150 = scmp.ne.s32.totalorder %s145, %s147
      %p151 = scmp.eq.s32.totalorder %s27, 0
      %p152 = por %p150, %p151
      %p153 = scmp.ne.s32.totalorder %s145, %s147
      %p154 = scmp.eq.s32.totalorder %s32, 1
      %p155 = por %p153, %p154
      %p156 = scmp.ne.s32.totalorder %s147, %s148
      %p157 = scmp.eq.s32.totalorder %s32, 0
      %p158 = por %p156, %p157
      %p159 = scmp.ne.s32.totalorder %s147, %s148
      %p160 = scmp.eq.s32.totalorder %s33, 1
      %p161 = por %p159, %p160
      %p163 = scmp.ne.s32.totalorder %s148, %s162
      %p164 = scmp.eq.s32.totalorder %s33, 0
      %p165 = por %p163, %p164
      %s167 = sadd.s32 %s166, 1
      %p170 = scmp.eq.s32.totalorder %s27, 1
      %p171 = scmp.ne.s32.totalorder %s166, %s168
      %p172 = scmp.eq.s32.totalorder %s27, 0
      %p173 = por %p171, %p172
      %p174 = scmp.ne.s32.totalorder %s166, %s168
      %p175 = scmp.eq.s32.totalorder %s32, 1
      %p176 = por %p174, %p175
      %p177 = scmp.ne.s32.totalorder %s168, %s169
      %p178 = scmp.eq.s32.totalorder %s32, 0
      %p179 = por %p177, %p178
      %p180 = scmp.ne.s32.totalorder %s168, %s169
      %p181 = scmp.eq.s32.totalorder %s33, 1
      %p182 = por %p180, %p181
      %p184 = scmp.ne.s32.totalorder %s169, %s183
      %p185 = scmp.eq.s32.totalorder %s33, 0
      %p186 = por %p184, %p185
      %s188 = sadd.s32 %s187, 1
      %p191 = scmp.eq.s32.totalorder %s27, 1
      %p192 = scmp.ne.s32.totalorder %s187, %s189
      %p193 = scmp.eq.s32.totalorder %s27, 0
      %p194 = por %p192, %p193
      %p195 = scmp.ne.s32.totalorder %s187, %s189
      %p196 = scmp.eq.s32.totalorder %s32, 1
      %p197 = por %p195, %p196
      %p198 = scmp.ne.s32.totalorder %s189, %s190
      %p199 = scmp.eq.s32.totalorder %s32, 0
      %p200 = por %p198, %p199
      %p201 = scmp.ne.s32.totalorder %s189, %s190
      %p202 = scmp.eq.s32.totalorder %s33, 1
      %p203 = por %p201, %p202
      %p205 = scmp.ne.s32.totalorder %s190, %s204
      %p206 = scmp.eq.s32.totalorder %s33, 0
      %p207 = por %p205, %p206
      %s209 = sadd.s32 %s208, 1
      %p212 = scmp.eq.s32.totalorder %s27, 1
      %p213 = scmp.ne.s32.totalorder %s208, %s210
      %p214 = scmp.eq.s32.totalorder %s27, 0
      %p215 = por %p213, %p214
      %p216 = scmp.ne.s32.totalorder %s208, %s210
      %p217 = scmp.eq.s32.totalorder %s32, 1
      %p218 = por %p216, %p217
      %p219 = scmp.ne.s32.totalorder %s210, %s211
      %p220 = scmp.eq.s32.totalorder %s32, 0
      %p221 = por %p219, %p220
      %p222 = scmp.ne.s32.totalorder %s210, %s211
      %p223 = scmp.eq.s32.totalorder %s33, 1
      %p224 = por %p222, %p223
      %p226 = scmp.ne.s32.totalorder %s211, %s225
      %p227 = scmp.eq.s32.totalorder %s33, 0
      %p228 = por %p226, %p227
      %s230 = sadd.s32 %s229, 1
      %p233 = scmp.eq.s32.totalorder %s27, 1
      %p234 = scmp.ne.s32.totalorder %s229, %s231
      %p235 = scmp.eq.s32.totalorder %s27, 0
      %p236 = por %p234, %p235
      %p237 = scmp.ne.s32.totalorder %s229, %s231
      %p238 = scmp.eq.s32.totalorder %s32, 1
      %p239 = por %p237, %p238
      %p240 = scmp.ne.s32.totalorder %s231, %s232
      %p241 = scmp.eq.s32.totalorder %s32, 0
      %p242 = por %p240, %p241
      %p243 = scmp.ne.s32.totalorder %s231, %s232
      %p244 = scmp.eq.s32.totalorder %s33, 1
      %p245 = por %p243, %p244
      %p247 = scmp.ne.s32.totalorder %s232, %s246
      %p248 = scmp.eq.s32.totalorder %s33, 0
      %p249 = por %p247, %p248
      %s251 = sadd.s32 %s250, 1
      %p254 = scmp.eq.s32.totalorder %s27, 1
      %p255 = scmp.ne.s32.totalorder %s250, %s252
      %p256 = scmp.eq.s32.totalorder %s27, 0
      %p257 = por %p255, %p256
      %p258 = scmp.ne.s32.totalorder %s250, %s252
      %p259 = scmp.eq.s32.totalorder %s32, 1
      %p260 = por %p258, %p259
      %p261 = scmp.ne.s32.totalorder %s252, %s253
      %p262 = scmp.eq.s32.totalorder %s32, 0
      %p263 = por %p261, %p262
      %p264 = scmp.ne.s32.totalorder %s252, %s253
      %p265 = scmp.eq.s32.totalorder %s33, 1
      %p266 = por %p264, %p265
      %p268 = scmp.ne.s32.totalorder %s253, %s267
      %p269 = scmp.eq.s32.totalorder %s33, 0
      %p270 = por %p268, %p269
      %s272 = sadd.s32 %s271, 1
      %p275 = scmp.eq.s32.totalorder %s27, 1
      %p276 = scmp.ne.s32.totalorder %s271, %s273
      %p277 = scmp.eq.s32.totalorder %s27, 0
      %p278 = por %p276, %p277
      %p279 = scmp.ne.s32.totalorder %s271, %s273
      %p280 = scmp.eq.s32.totalorder %s32, 1
      %p281 = por %p279, %p280
      %p282 = scmp.ne.s32.totalorder %s273, %s274
      %p283 = scmp.eq.s32.totalorder %s32, 0
      %p284 = por %p282, %p283
      %p285 = scmp.ne.s32.totalorder %s273, %s274
      %p286 = scmp.eq.s32.totalorder %s33, 1
      %p287 = por %p285, %p286
      %p289 = scmp.ne.s32.totalorder %s274, %s288
      %p290 = scmp.eq.s32.totalorder %s33, 0
      %p291 = por %p289, %p290
      %s293 = sadd.s32 %s292, 1
      %p296 = scmp.eq.s32.totalorder %s27, 1
      %p297 = scmp.ne.s32.totalorder %s292, %s294
      %p298 = scmp.eq.s32.totalorder %s27, 0
      %p299 = por %p297, %p298
      %p300 = scmp.ne.s32.totalorder %s292, %s294
      %p301 = scmp.eq.s32.totalorder %s32, 1
      %p302 = por %p300, %p301
      %p303 = scmp.ne.s32.totalorder %s294, %s295
      %p304 = scmp.eq.s32.totalorder %s32, 0
      %p305 = por %p303, %p304
      %p306 = scmp.ne.s32.totalorder %s294, %s295
      %p307 = scmp.eq.s32.totalorder %s33, 1
      %p308 = por %p306, %p307
      %p310 = scmp.ne.s32.totalorder %s295, %s309
      %p311 = scmp.eq.s32.totalorder %s33, 0
      %p312 = por %p310, %p311
      %s313 = ssub.s32 %s27, %s34
      %p314 = scmp.eq.s32.totalorder %s313, 0
      %s316 = sadd.s32 %s315, 1
      %s317 = scalar_select %p314, %s315, %s316
      %p320 = pneg %p314
      %p321 = scmp.eq.s32.totalorder %s27, 1
      %p322 = por %p320, %p321
      %p323 = scmp.ne.s32.totalorder %s315, %s318
      %p324 = scmp.eq.s32.totalorder %s27, 0
      %p325 = por %p323, %p324
      %p326 = scmp.ne.s32.totalorder %s315, %s318
      %p327 = scmp.eq.s32.totalorder %s32, 1
      %p328 = por %p326, %p327
      %p329 = scmp.ne.s32.totalorder %s318, %s319
      %p330 = scmp.eq.s32.totalorder %s32, 0
      %p331 = por %p329, %p330
      %p332 = scmp.ne.s32.totalorder %s318, %s319
      %p333 = scmp.eq.s32.totalorder %s33, 1
      %p334 = por %p332, %p333
      %p336 = scmp.ne.s32.totalorder %s319, %s335
      %p337 = scmp.eq.s32.totalorder %s33, 0
      %p338 = por %p336, %p337
      %p339 = scmp.le.s32.totalorder 1, %s27
      %p340 = scmp.lt.s32.totalorder %s27, 3
      %p341 = pnand %p339, %p340
      %p342 = pneg %p341
      // Predicated region
      $region9: #{tpu_custom_call.1} parent=5 // pred_check
        _
      $region10: #{tpu_custom_call.1} parent=5 // pred_check_branch
        %344 = sbr.rel (%p341) target = $region12
      $region11: #{tpu_custom_call.1} parent=5 // pred_region
        %s345 = ssub.s32 %s27, 1
        // Predicated region
        $region13: #{tpu_custom_call.1} parent=11 // pred_check
          %p346 = pneg %p74
        $region14: #{tpu_custom_call.1} parent=11 // pred_check_branch
          %348 = sbr.rel (%p346) target = $region16
        $region15: #{tpu_custom_call.1} parent=11 // pred_region
          _
        $region16: #{tpu_custom_call.1} parent=11 // pred_fallthru
          _
        // Predicated region
        $region17: #{tpu_custom_call.1} parent=11 // pred_check
          %p349 = pneg %p95
        $region18: #{tpu_custom_call.1} parent=11 // pred_check_branch
          %351 = sbr.rel (%p349) target = $region20
        $region19: #{tpu_custom_call.1} parent=11 // pred_region
          _
        $region20: #{tpu_custom_call.1} parent=11 // pred_fallthru
          _
        // Predicated region
        $region21: #{tpu_custom_call.1} parent=11 // pred_check
          %p352 = pneg %p116
        $region22: #{tpu_custom_call.1} parent=11 // pred_check_branch
          %354 = sbr.rel (%p352) target = $region24
        $region23: #{tpu_custom_call.1} parent=11 // pred_region
          %s356 = ssub.s32 6144, 6144
          %357 = vsyncadd [#allocation6], %s356
          %s358 = sshll.u32 [#allocation5], 4
          %s359 = int_to_ptr.vmem [resolvable:$true] %s358
          %364 = dma.hbm_to_vmem [thread:$0]  %s3, 6144, %s359, [#allocation6], 128, 128, 8
        $region24: #{tpu_custom_call.1} parent=11 // pred_fallthru
          _
        // Predicated region
        $region25: #{tpu_custom_call.1} parent=11 // pred_check
          %p365 = pneg %p137
        $region26: #{tpu_custom_call.1} parent=11 // pred_check_branch
          %367 = sbr.rel (%p365) target = $region28
        $region27: #{tpu_custom_call.1} parent=11 // pred_region
          _
        $region28: #{tpu_custom_call.1} parent=11 // pred_fallthru
          _
        // Predicated region
        $region29: #{tpu_custom_call.1} parent=11 // pred_check
          %p368 = pneg %p158
        $region30: #{tpu_custom_call.1} parent=11 // pred_check_branch
          %370 = sbr.rel (%p368) target = $region32
        $region31: #{tpu_custom_call.1} parent=11 // pred_region
          %s372 = ssub.s32 2048, 2048
          %373 = vsyncadd [#allocation6], %s372
          %s374 = sshll.u32 [#allocation7], 4
          %s375 = int_to_ptr.vmem [resolvable:$true] %s374
          %380 = dma.hbm_to_vmem [thread:$0]  %s5, 2048, %s375, [#allocation6], 128, 128, 8
        $region32: #{tpu_custom_call.1} parent=11 // pred_fallthru
          _
        // Predicated region
        $region33: #{tpu_custom_call.1} parent=11 // pred_check
          %p381 = pneg %p179
        $region34: #{tpu_custom_call.1} parent=11 // pred_check_branch
          %383 = sbr.rel (%p381) target = $region36
        $region35: #{tpu_custom_call.1} parent=11 // pred_region
          _
        $region36: #{tpu_custom_call.1} parent=11 // pred_fallthru
          _
        // Predicated region
        $region37: #{tpu_custom_call.1} parent=11 // pred_check
          %p384 = pneg %p200
        $region38: #{tpu_custom_call.1} parent=11 // pred_check_branch
          %386 = sbr.rel (%p384) target = $region40
        $region39: #{tpu_custom_call.1} parent=11 // pred_region
          _
        $region40: #{tpu_custom_call.1} parent=11 // pred_fallthru
          _
        // Predicated region
        $region41: #{tpu_custom_call.1} parent=11 // pred_check
          %p387 = pneg %p221
        $region42: #{tpu_custom_call.1} parent=11 // pred_check_branch
          %389 = sbr.rel (%p387) target = $region44
        $region43: #{tpu_custom_call.1} parent=11 // pred_region
          _
        $region44: #{tpu_custom_call.1} parent=11 // pred_fallthru
          _
        // Predicated region
        $region45: #{tpu_custom_call.1} parent=11 // pred_check
          %p390 = pneg %p242
        $region46: #{tpu_custom_call.1} parent=11 // pred_check_branch
          %392 = sbr.rel (%p390) target = $region48
        $region47: #{tpu_custom_call.1} parent=11 // pred_region
          %s394 = ssub.s32 8192, 8192
          %395 = vsyncadd [#allocation9], %s394
          %s396 = sshll.u32 [#allocation8], 4
          %s397 = int_to_ptr.vmem [resolvable:$true] %s396
          %402 = dma.hbm_to_vmem [thread:$0]  %s9, 8192, %s397, [#allocation9], 512, 512, 32
        $region48: #{tpu_custom_call.1} parent=11 // pred_fallthru
          _
        // Predicated region
        $region49: #{tpu_custom_call.1} parent=11 // pred_check
          %p403 = pneg %p263
        $region50: #{tpu_custom_call.1} parent=11 // pred_check_branch
          %405 = sbr.rel (%p403) target = $region52
        $region51: #{tpu_custom_call.1} parent=11 // pred_region
          _
        $region52: #{tpu_custom_call.1} parent=11 // pred_fallthru
          _
        // Predicated region
        $region53: #{tpu_custom_call.1} parent=11 // pred_check
          %p406 = pneg %p284
        $region54: #{tpu_custom_call.1} parent=11 // pred_check_branch
          %408 = sbr.rel (%p406) target = $region56
        $region55: #{tpu_custom_call.1} parent=11 // pred_region
          %s410 = ssub.s32 8192, 8192
          %411 = vsyncadd [#allocation9], %s410
          %s412 = sshll.u32 [#allocation10], 4
          %s413 = int_to_ptr.vmem [resolvable:$true] %s412
          %418 = dma.hbm_to_vmem [thread:$0]  %s11, 8192, %s413, [#allocation9], 128, 128, 8
        $region56: #{tpu_custom_call.1} parent=11 // pred_fallthru
          _
        // Predicated region
        $region57: #{tpu_custom_call.1} parent=11 // pred_check
          %p419 = pneg %p305
        $region58: #{tpu_custom_call.1} parent=11 // pred_check_branch
          %421 = sbr.rel (%p419) target = $region60
        $region59: #{tpu_custom_call.1} parent=11 // pred_region
          _
        $region60: #{tpu_custom_call.1} parent=11 // pred_fallthru
          _
      $region12: #{tpu_custom_call.1} parent=5 // pred_fallthru
        _
      %p422 = scmp.lt.s32.totalorder %s27, 2
      // Predicated region
      $region61: #{tpu_custom_call.1} parent=5 // pred_check
        %p423 = pneg %p422
      $region62: #{tpu_custom_call.1} parent=5 // pred_check_branch
        %425 = sbr.rel (%p423) target = $region64
      $region63: #{tpu_custom_call.1} parent=5 // pred_region
        // Predicated region
        $region65: #{tpu_custom_call.1} parent=63 // pred_check
          %p426 = pneg %p47
        $region66: #{tpu_custom_call.1} parent=63 // pred_check_branch
          %428 = sbr.rel (%p426) target = $region68
        $region67: #{tpu_custom_call.1} parent=63 // pred_region
          %s429 = sand.u32 %s37, 1
          %s430 = scalar_lea.sflag [#allocation3], %s429
          %s431 = sand.u32 %s37, 1
          %s432 = smul.addr %s431, 8
          %s433 = scalar_lea.vmem [#allocation2], %s432
          %s435 = ssub.s32 128, 128
          %436 = vsyncadd %s430, %s435
          %s437 = smul.addr %s27, 128
          %s438 = scalar_lea.hbm %s0, %s437
          %s440 = sshll.u32 %s433, 4
          %s441 = int_to_ptr.vmem [resolvable:$true] %s440
          %443 = dma.hbm_to_vmem [thread:$0]  %s438, 128, %s441, %s430
        $region68: #{tpu_custom_call.1} parent=63 // pred_fallthru
          _
      $region64: #{tpu_custom_call.1} parent=5 // pred_fallthru
        _
      %p444 = scmp.le.s32.totalorder 1, %s27
      %p445 = scmp.lt.s32.totalorder %s27, 3
      %p446 = pnand %p444, %p445
      %p447 = pneg %p446
      // Predicated region
      $region69: #{tpu_custom_call.1} parent=5 // pred_check
        _
      $region70: #{tpu_custom_call.1} parent=5 // pred_check_branch
        %449 = sbr.rel (%p446) target = $region72
      $region71: #{tpu_custom_call.1} parent=5 // pred_region
        %s450 = ssub.s32 %s27, 1
        %s451 = sand.u32 %s40, 1
        %s452 = scalar_lea.sflag [#allocation3], %s451
        %s453 = sand.u32 %s40, 1
        %s454 = smul.addr %s453, 8
        %s455 = scalar_lea.vmem [#allocation2], %s454
        // Predicated region
        $region73: #{tpu_custom_call.1} parent=71 // pred_check
          %p456 = pneg %p53
        $region74: #{tpu_custom_call.1} parent=71 // pred_check_branch
          %458 = sbr.rel (%p456) target = $region76
        $region75: #{tpu_custom_call.1} parent=71 // pred_region
          %459 = dma.done %s452, 128
        $region76: #{tpu_custom_call.1} parent=71 // pred_fallthru
          _
        // Predicated region
        $region77: #{tpu_custom_call.1} parent=71 // pred_check
          %p460 = pneg %p116
        $region78: #{tpu_custom_call.1} parent=71 // pred_check_branch
          %462 = sbr.rel (%p460) target = $region80
        $region79: #{tpu_custom_call.1} parent=71 // pred_region
          %463 = dma.done [#allocation6], 6144
        $region80: #{tpu_custom_call.1} parent=71 // pred_fallthru
          _
        // Predicated region
        $region81: #{tpu_custom_call.1} parent=71 // pred_check
          %p464 = pneg %p158
        $region82: #{tpu_custom_call.1} parent=71 // pred_check_branch
          %466 = sbr.rel (%p464) target = $region84
        $region83: #{tpu_custom_call.1} parent=71 // pred_region
          %467 = dma.done [#allocation6], 2048
        $region84: #{tpu_custom_call.1} parent=71 // pred_fallthru
          _
        // Predicated region
        $region85: #{tpu_custom_call.1} parent=71 // pred_check
          %p468 = pneg %p242
        $region86: #{tpu_custom_call.1} parent=71 // pred_check_branch
          %470 = sbr.rel (%p468) target = $region88
        $region87: #{tpu_custom_call.1} parent=71 // pred_region
          %471 = dma.done [#allocation9], 8192
        $region88: #{tpu_custom_call.1} parent=71 // pred_fallthru
          _
        // Predicated region
        $region89: #{tpu_custom_call.1} parent=71 // pred_check
          %p472 = pneg %p284
        $region90: #{tpu_custom_call.1} parent=71 // pred_check_branch
          %474 = sbr.rel (%p472) target = $region92
        $region91: #{tpu_custom_call.1} parent=71 // pred_region
          %475 = dma.done [#allocation9], 8192
        $region92: #{tpu_custom_call.1} parent=71 // pred_fallthru
          _
        %s476 = sand.u32 %s40, 1
        %s477 = scalar_lea.sflag [#allocation3], %s476
        %s478 = sand.u32 %s40, 1
        %s479 = smul.addr %s478, 8
        %s480 = scalar_lea.vmem [#allocation2], %s479
        %p481 = pneg %p53
        %p482 = pneg %p50
        %p483 = pneg %p74
        %p484 = pneg %p71
        %p485 = pneg %p95
        %p486 = pneg %p92
        %p487 = pneg %p116
        %p488 = pneg %p113
        %p489 = pneg %p137
        %p490 = pneg %p134
        %p491 = pneg %p158
        %p492 = pneg %p155
        %p493 = pneg %p179
        %p494 = pneg %p176
        %p495 = pneg %p200
        %p496 = pneg %p197
        %p497 = pneg %p221
        %p498 = pneg %p218
        %p499 = pneg %p242
        %p500 = pneg %p239
        %p501 = pneg %p263
        %p502 = pneg %p260
        %p503 = pneg %p284
        %p504 = pneg %p281
        %p505 = pneg %p305
        %p506 = pneg %p302
        %p507 = pneg %p331
        %p508 = pneg %p328
        %s509 = sand.u32 %s318, 1
        %s510 = scalar_lea.sflag [#allocation4], %s509
        %s511 = sand.u32 %s318, 1
        %s512 = smul.addr %s511, 8
        %s513 = scalar_lea.vmem [#allocation11], %s512
        %v514 = vld [vmem:[%s455] sm:$0xff]
        %v515 = vld [vmem:[%s1] sm:$0x1]
        %v516 = vld [vmem:[%s2] sm:$0x1]
        %517 = vadd.xlane.f32.xlu0 %v514
        %v518 = vpop.xlane.xlu0 %517
        %v519 = vrcp.pop 128.0
        %v520 = vmul.f32 %v518, %v519
        %v521 = vsub.f32 %v514, %v520
        %v522 = vmul.f32 %v521, %v521
        %523 = vadd.xlane.f32.xlu0 %v522
        %v524 = vpop.xlane.xlu0 %523
        %v525 = vmul.f32 %v524, %v519
        %v526 = vadd.f32 %v525, 1e-06
        %v527 = vrsqrt.pop %v526
        %v528 = vmul.f32 %v521, %v527
        %v530 = vlaneseq
        %v531 = vshrl.u32 %v530, 7
        %v532 = vsub.s32 0, %v531
        %v533 = vrot.slane %v515, %v532
        %v535 = vmul.f32 %v528, %v533
        %v537 = vlaneseq
        %v538 = vshrl.u32 %v537, 7
        %v539 = vsub.s32 0, %v538
        %v540 = vrot.slane %v516, %v539
        %v542 = vadd.f32 %v535, %v540
        %v543 = vld [vmem:[#allocation5] sm:$0xff]
        %v544 = vld [vmem:[#allocation5 + $0x8] sm:$0xff]
        %v545 = vld [vmem:[#allocation5 + $0x10] sm:$0xff]
        %v546 = vld [vmem:[#allocation5 + $0x18] sm:$0xff]
        %v547 = vld [vmem:[#allocation5 + $0x20] sm:$0xff]
        %v548 = vld [vmem:[#allocation5 + $0x28] sm:$0xff]
        %v549 = vld [vmem:[#allocation5 + $0x30] sm:$0xff]
        %v550 = vld [vmem:[#allocation5 + $0x38] sm:$0xff]
        %v551 = vld [vmem:[#allocation5 + $0x40] sm:$0xff]
        %v552 = vld [vmem:[#allocation5 + $0x48] sm:$0xff]
        %v553 = vld [vmem:[#allocation5 + $0x50] sm:$0xff]
        %v554 = vld [vmem:[#allocation5 + $0x58] sm:$0xff]
        %v555 = vld [vmem:[#allocation5 + $0x60] sm:$0xff]
        %v556 = vld [vmem:[#allocation5 + $0x68] sm:$0xff]
        %v557 = vld [vmem:[#allocation5 + $0x70] sm:$0xff]
        %v558 = vld [vmem:[#allocation5 + $0x78] sm:$0xff]
        %v559 = vld [vmem:[#allocation5 + $0x80] sm:$0xff]
        %v560 = vld [vmem:[#allocation5 + $0x88] sm:$0xff]
        %v561 = vld [vmem:[#allocation5 + $0x90] sm:$0xff]
        %v562 = vld [vmem:[#allocation5 + $0x98] sm:$0xff]
        %v563 = vld [vmem:[#allocation5 + $0xa0] sm:$0xff]
        %v564 = vld [vmem:[#allocation5 + $0xa8] sm:$0xff]
        %v565 = vld [vmem:[#allocation5 + $0xb0] sm:$0xff]
        %v566 = vld [vmem:[#allocation5 + $0xb8] sm:$0xff]
        %v567 = vld [vmem:[#allocation5 + $0xc0] sm:$0xff]
        %v568 = vld [vmem:[#allocation5 + $0xc8] sm:$0xff]
        %v569 = vld [vmem:[#allocation5 + $0xd0] sm:$0xff]
        %v570 = vld [vmem:[#allocation5 + $0xd8] sm:$0xff]
        %v571 = vld [vmem:[#allocation5 + $0xe0] sm:$0xff]
        %v572 = vld [vmem:[#allocation5 + $0xe8] sm:$0xff]
        %v573 = vld [vmem:[#allocation5 + $0xf0] sm:$0xff]
        %v574 = vld [vmem:[#allocation5 + $0xf8] sm:$0xff]
        %v575 = vld [vmem:[#allocation5 + $0x100] sm:$0xff]
        %v576 = vld [vmem:[#allocation5 + $0x108] sm:$0xff]
        %v577 = vld [vmem:[#allocation5 + $0x110] sm:$0xff]
        %v578 = vld [vmem:[#allocation5 + $0x118] sm:$0xff]
        %v579 = vld [vmem:[#allocation5 + $0x120] sm:$0xff]
        %v580 = vld [vmem:[#allocation5 + $0x128] sm:$0xff]
        %v581 = vld [vmem:[#allocation5 + $0x130] sm:$0xff]
        %v582 = vld [vmem:[#allocation5 + $0x138] sm:$0xff]
        %v583 = vld [vmem:[#allocation5 + $0x140] sm:$0xff]
        %v584 = vld [vmem:[#allocation5 + $0x148] sm:$0xff]
        %v585 = vld [vmem:[#allocation5 + $0x150] sm:$0xff]
        %v586 = vld [vmem:[#allocation5 + $0x158] sm:$0xff]
        %v587 = vld [vmem:[#allocation5 + $0x160] sm:$0xff]
        %v588 = vld [vmem:[#allocation5 + $0x168] sm:$0xff]
        %v589 = vld [vmem:[#allocation5 + $0x170] sm:$0xff]
        %v590 = vld [vmem:[#allocation5 + $0x178] sm:$0xff]
        %v591 = vld [vmem:[%s4] sm:$0x1]
        %v592 = vld [vmem:[%s4 + $0x1] sm:$0x1]
        %v593 = vld [vmem:[%s4 + $0x2] sm:$0x1]
        %v594 = vld [vmem:[%s4 + $0x3] sm:$0x1]
        %v595 = vld [vmem:[%s4 + $0x4] sm:$0x1]
        %v596 = vld [vmem:[%s4 + $0x5] sm:$0x1]
        %v597 = vld [vmem:[%s4 + $0x6] sm:$0x1]
        %v598 = vld [vmem:[%s4 + $0x7] sm:$0x1]
        %v599 = vld [vmem:[%s4 + $0x8] sm:$0x1]
        %v600 = vld [vmem:[%s4 + $0x9] sm:$0x1]
        %v601 = vld [vmem:[%s4 + $0xa] sm:$0x1]
        %v602 = vld [vmem:[%s4 + $0xb] sm:$0x1]
        %v615 = vlaneseq
        %v616 = vshrl.u32 %v615, 7
        %v617 = vsub.s32 0, %v616
        %v618 = vrot.slane %v591, %v617
        %v619 = vlaneseq
        %v620 = vshrl.u32 %v619, 7
        %v621 = vsub.s32 0, %v620
        %v622 = vrot.slane %v592, %v621
        %v623 = vlaneseq
        %v624 = vshrl.u32 %v623, 7
        %v625 = vsub.s32 0, %v624
        %v626 = vrot.slane %v593, %v625
        %v627 = vlaneseq
        %v628 = vshrl.u32 %v627, 7
        %v629 = vsub.s32 0, %v628
        %v630 = vrot.slane %v594, %v629
        %v631 = vlaneseq
        %v632 = vshrl.u32 %v631, 7
        %v633 = vsub.s32 0, %v632
        %v634 = vrot.slane %v595, %v633
        %v635 = vlaneseq
        %v636 = vshrl.u32 %v635, 7
        %v637 = vsub.s32 0, %v636
        %v638 = vrot.slane %v596, %v637
        %v639 = vlaneseq
        %v640 = vshrl.u32 %v639, 7
        %v641 = vsub.s32 0, %v640
        %v642 = vrot.slane %v597, %v641
        %v643 = vlaneseq
        %v644 = vshrl.u32 %v643, 7
        %v645 = vsub.s32 0, %v644
        %v646 = vrot.slane %v598, %v645
        %v647 = vlaneseq
        %v648 = vshrl.u32 %v647, 7
        %v649 = vsub.s32 0, %v648
        %v650 = vrot.slane %v599, %v649
        %v651 = vlaneseq
        %v652 = vshrl.u32 %v651, 7
        %v653 = vsub.s32 0, %v652
        %v654 = vrot.slane %v600, %v653
        %v655 = vlaneseq
        %v656 = vshrl.u32 %v655, 7
        %v657 = vsub.s32 0, %v656
        %v658 = vrot.slane %v601, %v657
        %v659 = vlaneseq
        %v660 = vshrl.u32 %v659, 7
        %v661 = vsub.s32 0, %v660
        %v662 = vrot.slane %v602, %v661
        %675 = vmatprep.subr.mxu0 0.0
        %676 = vmatpush1.xpose.msra.mxu0 %v543
        %677 = vmatprep.subr.mxu0 0.0
        %678 = vmatpush1.xpose.msra.mxu0 %v544
        %679 = vmatprep.subr.mxu0 0.0
        %680 = vmatpush1.xpose.msra.mxu0 %v545
        %681 = vmatprep.subr.mxu0 0.0
        %682 = vmatpush1.xpose.msra.mxu0 %v546
        %683 = vmatprep.subr.mxu0 0.0
        %684 = vmatpush1.xpose.msra.mxu0 0.0
        %685 = vmatprep.subr.mxu0 0.0
        %686 = vmatpush1.xpose.msra.mxu0 0.0
        %687 = vmatprep.subr.mxu0 0.0
        %688 = vmatpush1.xpose.msra.mxu0 0.0
        %689 = vmatprep.subr.mxu0 0.0
        %690 = vmatpush1.xpose.msra.mxu0 0.0
        %691 = vmatprep.subr.mxu0 0.0
        %692 = vmatpush1.xpose.msra.mxu0 0.0
        %693 = vmatprep.subr.mxu0 0.0
        %694 = vmatpush1.xpose.msra.mxu0 0.0
        %695 = vmatprep.subr.mxu0 0.0
        %696 = vmatpush1.xpose.msra.mxu0 0.0
        %697 = vmatprep.subr.mxu0 0.0
        %698 = vmatpush1.xpose.msra.mxu0 0.0
        %699 = vmatprep.subr.mxu0 0.0
        %700 = vmatpush1.xpose.msra.mxu0 0.0
        %701 = vmatprep.subr.mxu0 0.0
        %702 = vmatpush1.xpose.msra.mxu0 0.0
        %703 = vmatprep.subr.mxu0 0.0
        %704 = vmatpush1.xpose.msra.mxu0 0.0
        %705 = vmatprep.subr.mxu0 0.0
        %706 = vmatpush1.xpose.msra.mxu0 0.0
        %707 = vmatprep.subr.mxu0 0.0
        %708 = vmatpush1.xpose.msra.mxu0 0.0
        %709 = vmatprep.subr.mxu0 0.0
        %710 = vmatpush1.xpose.msra.mxu0 0.0
        %711 = vmatprep.subr.mxu0 0.0
        %712 = vmatpush1.xpose.msra.mxu0 0.0
        %713 = vmatprep.subr.mxu0 0.0
        %714 = vmatpush1.xpose.msra.mxu0 0.0
        %715 = vmatprep.subr.mxu0 0.0
        %716 = vmatpush1.xpose.msra.mxu0 0.0
        %717 = vmatprep.subr.mxu0 0.0
        %718 = vmatpush1.xpose.msra.mxu0 0.0
        %719 = vmatprep.subr.mxu0 0.0
        %720 = vmatpush1.xpose.msra.mxu0 0.0
        %721 = vmatprep.subr.mxu0 0.0
        %722 = vmatpush1.xpose.msra.mxu0 0.0
        %723 = vmatprep.subr.mxu0 0.0
        %724 = vmatpush1.xpose.msra.mxu0 0.0
        %725 = vmatprep.subr.mxu0 0.0
        %726 = vmatpush1.xpose.msra.mxu0 0.0
        %727 = vmatprep.subr.mxu0 0.0
        %728 = vmatpush1.xpose.msra.mxu0 0.0
        %729 = vmatprep.subr.mxu0 0.0
        %730 = vmatpush1.xpose.msra.mxu0 0.0
        %731 = vmatprep.subr.mxu0 0.0
        %732 = vmatpush1.xpose.msra.mxu0 0.0
        %733 = vmatprep.subr.mxu0 0.0
        %734 = vmatpush1.xpose.msra.mxu0 0.0
        %735 = vmatprep.subr.mxu0 0.0
        %736 = vmatpush1.xpose.msra.mxu0 0.0
        %737 = vmatprep.subr.mxu0 0.0
        %738 = vmatpush1.xpose.msra.mxu0 0.0
        %739 = vmatprep.mubr.f32.mxu0 0.0
        %740 = vmatmul.mubr.f32.gmra.mrb[0].mxu0 %v542
        %v741 = vpop.f32.mrb[0].mxu0
        %v742 = vadd.f32 %v618, %v741
        %v743 = vpop.f32.mrb[0].mxu0
        %744 = vdwg.mxu0
        %745 = vmatprep.subr.mxu0 0.0
        %746 = vmatpush1.xpose.msra.mxu0 %v547
        %747 = vmatprep.subr.mxu0 0.0
        %748 = vmatpush1.xpose.msra.mxu0 %v548
        %749 = vmatprep.subr.mxu0 0.0
        %750 = vmatpush1.xpose.msra.mxu0 %v549
        %751 = vmatprep.subr.mxu0 0.0
        %752 = vmatpush1.xpose.msra.mxu0 %v550
        %753 = vmatprep.subr.mxu0 0.0
        %754 = vmatpush1.xpose.msra.mxu0 0.0
        %755 = vmatprep.subr.mxu0 0.0
        %756 = vmatpush1.xpose.msra.mxu0 0.0
        %757 = vmatprep.subr.mxu0 0.0
        %758 = vmatpush1.xpose.msra.mxu0 0.0
        %759 = vmatprep.subr.mxu0 0.0
        %760 = vmatpush1.xpose.msra.mxu0 0.0
        %761 = vmatprep.subr.mxu0 0.0
        %762 = vmatpush1.xpose.msra.mxu0 0.0
        %763 = vmatprep.subr.mxu0 0.0
        %764 = vmatpush1.xpose.msra.mxu0 0.0
        %765 = vmatprep.subr.mxu0 0.0
        %766 = vmatpush1.xpose.msra.mxu0 0.0
        %767 = vmatprep.subr.mxu0 0.0
        %768 = vmatpush1.xpose.msra.mxu0 0.0
        %769 = vmatprep.subr.mxu0 0.0
        %770 = vmatpush1.xpose.msra.mxu0 0.0
        %771 = vmatprep.subr.mxu0 0.0
        %772 = vmatpush1.xpose.msra.mxu0 0.0
        %773 = vmatprep.subr.mxu0 0.0
        %774 = vmatpush1.xpose.msra.mxu0 0.0
        %775 = vmatprep.subr.mxu0 0.0
        %776 = vmatpush1.xpose.msra.mxu0 0.0
        %777 = vmatprep.subr.mxu0 0.0
        %778 = vmatpush1.xpose.msra.mxu0 0.0
        %779 = vmatprep.subr.mxu0 0.0
        %780 = vmatpush1.xpose.msra.mxu0 0.0
        %781 = vmatprep.subr.mxu0 0.0
        %782 = vmatpush1.xpose.msra.mxu0 0.0
        %783 = vmatprep.subr.mxu0 0.0
        %784 = vmatpush1.xpose.msra.mxu0 0.0
        %785 = vmatprep.subr.mxu0 0.0
        %786 = vmatpush1.xpose.msra.mxu0 0.0
        %787 = vmatprep.subr.mxu0 0.0
        %788 = vmatpush1.xpose.msra.mxu0 0.0
        %789 = vmatprep.subr.mxu0 0.0
        %790 = vmatpush1.xpose.msra.mxu0 0.0
        %791 = vmatprep.subr.mxu0 0.0
        %792 = vmatpush1.xpose.msra.mxu0 0.0
        %793 = vmatprep.subr.mxu0 0.0
        %794 = vmatpush1.xpose.msra.mxu0 0.0
        %795 = vmatprep.subr.mxu0 0.0
        %796 = vmatpush1.xpose.msra.mxu0 0.0
        %797 = vmatprep.subr.mxu0 0.0
        %798 = vmatpush1.xpose.msra.mxu0 0.0
        %799 = vmatprep.subr.mxu0 0.0
        %800 = vmatpush1.xpose.msra.mxu0 0.0
        %801 = vmatprep.subr.mxu0 0.0
        %802 = vmatpush1.xpose.msra.mxu0 0.0
        %803 = vmatprep.subr.mxu0 0.0
        %804 = vmatpush1.xpose.msra.mxu0 0.0
        %805 = vmatprep.subr.mxu0 0.0
        %806 = vmatpush1.xpose.msra.mxu0 0.0
        %807 = vmatprep.subr.mxu0 0.0
        %808 = vmatpush1.xpose.msra.mxu0 0.0
        %809 = vmatprep.mubr.f32.mxu0 0.0
        %810 = vmatmul.mubr.f32.gmra.mrb[0].mxu0 %v542
        %v811 = vpop.f32.mrb[0].mxu0
        %v812 = vadd.f32 %v622, %v811
        %v813 = vpop.f32.mrb[0].mxu0
        %814 = vdwg.mxu0
        %815 = vmatprep.subr.mxu0 0.0
        %816 = vmatpush1.xpose.msra.mxu0 %v551
        %817 = vmatprep.subr.mxu0 0.0
        %818 = vmatpush1.xpose.msra.mxu0 %v552
        %819 = vmatprep.subr.mxu0 0.0
        %820 = vmatpush1.xpose.msra.mxu0 %v553
        %821 = vmatprep.subr.mxu0 0.0
        %822 = vmatpush1.xpose.msra.mxu0 %v554
        %823 = vmatprep.subr.mxu0 0.0
        %824 = vmatpush1.xpose.msra.mxu0 0.0
        %825 = vmatprep.subr.mxu0 0.0
        %826 = vmatpush1.xpose.msra.mxu0 0.0
        %827 = vmatprep.subr.mxu0 0.0
        %828 = vmatpush1.xpose.msra.mxu0 0.0
        %829 = vmatprep.subr.mxu0 0.0
        %830 = vmatpush1.xpose.msra.mxu0 0.0
        %831 = vmatprep.subr.mxu0 0.0
        %832 = vmatpush1.xpose.msra.mxu0 0.0
        %833 = vmatprep.subr.mxu0 0.0
        %834 = vmatpush1.xpose.msra.mxu0 0.0
        %835 = vmatprep.subr.mxu0 0.0
        %836 = vmatpush1.xpose.msra.mxu0 0.0
        %837 = vmatprep.subr.mxu0 0.0
        %838 = vmatpush1.xpose.msra.mxu0 0.0
        %839 = vmatprep.subr.mxu0 0.0
        %840 = vmatpush1.xpose.msra.mxu0 0.0
        %841 = vmatprep.subr.mxu0 0.0
        %842 = vmatpush1.xpose.msra.mxu0 0.0
        %843 = vmatprep.subr.mxu0 0.0
        %844 = vmatpush1.xpose.msra.mxu0 0.0
        %845 = vmatprep.subr.mxu0 0.0
        %846 = vmatpush1.xpose.msra.mxu0 0.0
        %847 = vmatprep.subr.mxu0 0.0
        %848 = vmatpush1.xpose.msra.mxu0 0.0
        %849 = vmatprep.subr.mxu0 0.0
        %850 = vmatpush1.xpose.msra.mxu0 0.0
        %851 = vmatprep.subr.mxu0 0.0
        %852 = vmatpush1.xpose.msra.mxu0 0.0
        %853 = vmatprep.subr.mxu0 0.0
        %854 = vmatpush1.xpose.msra.mxu0 0.0
        %855 = vmatprep.subr.mxu0 0.0
        %856 = vmatpush1.xpose.msra.mxu0 0.0
        %857 = vmatprep.subr.mxu0 0.0
        %858 = vmatpush1.xpose.msra.mxu0 0.0
        %859 = vmatprep.subr.mxu0 0.0
        %860 = vmatpush1.xpose.msra.mxu0 0.0
        %861 = vmatprep.subr.mxu0 0.0
        %862 = vmatpush1.xpose.msra.mxu0 0.0
        %863 = vmatprep.subr.mxu0 0.0
        %864 = vmatpush1.xpose.msra.mxu0 0.0
        %865 = vmatprep.subr.mxu0 0.0
        %866 = vmatpush1.xpose.msra.mxu0 0.0
        %867 = vmatprep.subr.mxu0 0.0
        %868 = vmatpush1.xpose.msra.mxu0 0.0
        %869 = vmatprep.subr.mxu0 0.0
        %870 = vmatpush1.xpose.msra.mxu0 0.0
        %871 = vmatprep.subr.mxu0 0.0
        %872 = vmatpush1.xpose.msra.mxu0 0.0
        %873 = vmatprep.subr.mxu0 0.0
        %874 = vmatpush1.xpose.msra.mxu0 0.0
        %875 = vmatprep.subr.mxu0 0.0
        %876 = vmatpush1.xpose.msra.mxu0 0.0
        %877 = vmatprep.subr.mxu0 0.0
        %878 = vmatpush1.xpose.msra.mxu0 0.0
        %879 = vmatprep.mubr.f32.mxu0 0.0
        %880 = vmatmul.mubr.f32.gmra.mrb[0].mxu0 %v542
        %v881 = vpop.f32.mrb[0].mxu0
        %v882 = vadd.f32 %v626, %v881
        %v883 = vpop.f32.mrb[0].mxu0
        %884 = vdwg.mxu0
        %885 = vmatprep.subr.mxu0 0.0
        %886 = vmatpush1.xpose.msra.mxu0 %v555
        %887 = vmatprep.subr.mxu0 0.0
        %888 = vmatpush1.xpose.msra.mxu0 %v556
        %889 = vmatprep.subr.mxu0 0.0
        %890 = vmatpush1.xpose.msra.mxu0 %v557
        %891 = vmatprep.subr.mxu0 0.0
        %892 = vmatpush1.xpose.msra.mxu0 %v558
        %893 = vmatprep.subr.mxu0 0.0
        %894 = vmatpush1.xpose.msra.mxu0 0.0
        %895 = vmatprep.subr.mxu0 0.0
        %896 = vmatpush1.xpose.msra.mxu0 0.0
        %897 = vmatprep.subr.mxu0 0.0
        %898 = vmatpush1.xpose.msra.mxu0 0.0
        %899 = vmatprep.subr.mxu0 0.0
        %900 = vmatpush1.xpose.msra.mxu0 0.0
        %901 = vmatprep.subr.mxu0 0.0
        %902 = vmatpush1.xpose.msra.mxu0 0.0
        %903 = vmatprep.subr.mxu0 0.0
        %904 = vmatpush1.xpose.msra.mxu0 0.0
        %905 = vmatprep.subr.mxu0 0.0
        %906 = vmatpush1.xpose.msra.mxu0 0.0
        %907 = vmatprep.subr.mxu0 0.0
        %908 = vmatpush1.xpose.msra.mxu0 0.0
        %909 = vmatprep.subr.mxu0 0.0
        %910 = vmatpush1.xpose.msra.mxu0 0.0
        %911 = vmatprep.subr.mxu0 0.0
        %912 = vmatpush1.xpose.msra.mxu0 0.0
        %913 = vmatprep.subr.mxu0 0.0
        %914 = vmatpush1.xpose.msra.mxu0 0.0
        %915 = vmatprep.subr.mxu0 0.0
        %916 = vmatpush1.xpose.msra.mxu0 0.0
        %917 = vmatprep.subr.mxu0 0.0
        %918 = vmatpush1.xpose.msra.mxu0 0.0
        %919 = vmatprep.subr.mxu0 0.0
        %920 = vmatpush1.xpose.msra.mxu0 0.0
        %921 = vmatprep.subr.mxu0 0.0
        %922 = vmatpush1.xpose.msra.mxu0 0.0
        %923 = vmatprep.subr.mxu0 0.0
        %924 = vmatpush1.xpose.msra.mxu0 0.0
        %925 = vmatprep.subr.mxu0 0.0
        %926 = vmatpush1.xpose.msra.mxu0 0.0
        %927 = vmatprep.subr.mxu0 0.0
        %928 = vmatpush1.xpose.msra.mxu0 0.0
        %929 = vmatprep.subr.mxu0 0.0
        %930 = vmatpush1.xpose.msra.mxu0 0.0
        %931 = vmatprep.subr.mxu0 0.0
        %932 = vmatpush1.xpose.msra.mxu0 0.0
        %933 = vmatprep.subr.mxu0 0.0
        %934 = vmatpush1.xpose.msra.mxu0 0.0
        %935 = vmatprep.subr.mxu0 0.0
        %936 = vmatpush1.xpose.msra.mxu0 0.0
        %937 = vmatprep.subr.mxu0 0.0
        %938 = vmatpush1.xpose.msra.mxu0 0.0
        %939 = vmatprep.subr.mxu0 0.0
        %940 = vmatpush1.xpose.msra.mxu0 0.0
        %941 = vmatprep.subr.mxu0 0.0
        %942 = vmatpush1.xpose.msra.mxu0 0.0
        %943 = vmatprep.subr.mxu0 0.0
        %944 = vmatpush1.xpose.msra.mxu0 0.0
        %945 = vmatprep.subr.mxu0 0.0
        %946 = vmatpush1.xpose.msra.mxu0 0.0
        %947 = vmatprep.subr.mxu0 0.0
        %948 = vmatpush1.xpose.msra.mxu0 0.0
        %949 = vmatprep.mubr.f32.mxu0 0.0
        %950 = vmatmul.mubr.f32.gmra.mrb[0].mxu0 %v542
        %v951 = vpop.f32.mrb[0].mxu0
        %v952 = vadd.f32 %v630, %v951
        %v953 = vpop.f32.mrb[0].mxu0
        %954 = vdwg.mxu0
        %955 = vmatprep.subr.mxu0 0.0
        %956 = vmatpush1.xpose.msra.mxu0 %v559
        %957 = vmatprep.subr.mxu0 0.0
        %958 = vmatpush1.xpose.msra.mxu0 %v560
        %959 = vmatprep.subr.mxu0 0.0
        %960 = vmatpush1.xpose.msra.mxu0 %v561
        %961 = vmatprep.subr.mxu0 0.0
        %962 = vmatpush1.xpose.msra.mxu0 %v562
        %963 = vmatprep.subr.mxu0 0.0
        %964 = vmatpush1.xpose.msra.mxu0 0.0
        %965 = vmatprep.subr.mxu0 0.0
        %966 = vmatpush1.xpose.msra.mxu0 0.0
        %967 = vmatprep.subr.mxu0 0.0
        %968 = vmatpush1.xpose.msra.mxu0 0.0
        %969 = vmatprep.subr.mxu0 0.0
        %970 = vmatpush1.xpose.msra.mxu0 0.0
        %971 = vmatprep.subr.mxu0 0.0
        %972 = vmatpush1.xpose.msra.mxu0 0.0
        %973 = vmatprep.subr.mxu0 0.0
        %974 = vmatpush1.xpose.msra.mxu0 0.0
        %975 = vmatprep.subr.mxu0 0.0
        %976 = vmatpush1.xpose.msra.mxu0 0.0
        %977 = vmatprep.subr.mxu0 0.0
        %978 = vmatpush1.xpose.msra.mxu0 0.0
        %979 = vmatprep.subr.mxu0 0.0
        %980 = vmatpush1.xpose.msra.mxu0 0.0
        %981 = vmatprep.subr.mxu0 0.0
        %982 = vmatpush1.xpose.msra.mxu0 0.0
        %983 = vmatprep.subr.mxu0 0.0
        %984 = vmatpush1.xpose.msra.mxu0 0.0
        %985 = vmatprep.subr.mxu0 0.0
        %986 = vmatpush1.xpose.msra.mxu0 0.0
        %987 = vmatprep.subr.mxu0 0.0
        %988 = vmatpush1.xpose.msra.mxu0 0.0
        %989 = vmatprep.subr.mxu0 0.0
        %990 = vmatpush1.xpose.msra.mxu0 0.0
        %991 = vmatprep.subr.mxu0 0.0
        %992 = vmatpush1.xpose.msra.mxu0 0.0
        %993 = vmatprep.subr.mxu0 0.0
        %994 = vmatpush1.xpose.msra.mxu0 0.0
        %995 = vmatprep.subr.mxu0 0.0
        %996 = vmatpush1.xpose.msra.mxu0 0.0
        %997 = vmatprep.subr.mxu0 0.0
        %998 = vmatpush1.xpose.msra.mxu0 0.0
        %999 = vmatprep.subr.mxu0 0.0
        %1000 = vmatpush1.xpose.msra.mxu0 0.0
        %1001 = vmatprep.subr.mxu0 0.0
        %1002 = vmatpush1.xpose.msra.mxu0 0.0
        %1003 = vmatprep.subr.mxu0 0.0
        %1004 = vmatpush1.xpose.msra.mxu0 0.0
        %1005 = vmatprep.subr.mxu0 0.0
        %1006 = vmatpush1.xpose.msra.mxu0 0.0
        %1007 = vmatprep.subr.mxu0 0.0
        %1008 = vmatpush1.xpose.msra.mxu0 0.0
        %1009 = vmatprep.subr.mxu0 0.0
        %1010 = vmatpush1.xpose.msra.mxu0 0.0
        %1011 = vmatprep.subr.mxu0 0.0
        %1012 = vmatpush1.xpose.msra.mxu0 0.0
        %1013 = vmatprep.subr.mxu0 0.0
        %1014 = vmatpush1.xpose.msra.mxu0 0.0
        %1015 = vmatprep.subr.mxu0 0.0
        %1016 = vmatpush1.xpose.msra.mxu0 0.0
        %1017 = vmatprep.subr.mxu0 0.0
        %1018 = vmatpush1.xpose.msra.mxu0 0.0
        %1019 = vmatprep.mubr.f32.mxu0 0.0
        %1020 = vmatmul.mubr.f32.gmra.mrb[0].mxu0 %v542
        %v1021 = vpop.f32.mrb[0].mxu0
        %v1022 = vadd.f32 %v634, %v1021
        %v1023 = vpop.f32.mrb[0].mxu0
        %1024 = vdwg.mxu0
        %1025 = vmatprep.subr.mxu0 0.0
        %1026 = vmatpush1.xpose.msra.mxu0 %v563
        %1027 = vmatprep.subr.mxu0 0.0
        %1028 = vmatpush1.xpose.msra.mxu0 %v564
        %1029 = vmatprep.subr.mxu0 0.0
        %1030 = vmatpush1.xpose.msra.mxu0 %v565
        %1031 = vmatprep.subr.mxu0 0.0
        %1032 = vmatpush1.xpose.msra.mxu0 %v566
        %1033 = vmatprep.subr.mxu0 0.0
        %1034 = vmatpush1.xpose.msra.mxu0 0.0
        %1035 = vmatprep.subr.mxu0 0.0
        %1036 = vmatpush1.xpose.msra.mxu0 0.0
        %1037 = vmatprep.subr.mxu0 0.0
        %1038 = vmatpush1.xpose.msra.mxu0 0.0
        %1039 = vmatprep.subr.mxu0 0.0
        %1040 = vmatpush1.xpose.msra.mxu0 0.0
        %1041 = vmatprep.subr.mxu0 0.0
        %1042 = vmatpush1.xpose.msra.mxu0 0.0
        %1043 = vmatprep.subr.mxu0 0.0
        %1044 = vmatpush1.xpose.msra.mxu0 0.0
        %1045 = vmatprep.subr.mxu0 0.0
        %1046 = vmatpush1.xpose.msra.mxu0 0.0
        %1047 = vmatprep.subr.mxu0 0.0
        %1048 = vmatpush1.xpose.msra.mxu0 0.0
        %1049 = vmatprep.subr.mxu0 0.0
        %1050 = vmatpush1.xpose.msra.mxu0 0.0
        %1051 = vmatprep.subr.mxu0 0.0
        %1052 = vmatpush1.xpose.msra.mxu0 0.0
        %1053 = vmatprep.subr.mxu0 0.0
        %1054 = vmatpush1.xpose.msra.mxu0 0.0
        %1055 = vmatprep.subr.mxu0 0.0
        %1056 = vmatpush1.xpose.msra.mxu0 0.0
        %1057 = vmatprep.subr.mxu0 0.0
        %1058 = vmatpush1.xpose.msra.mxu0 0.0
        %1059 = vmatprep.subr.mxu0 0.0
        %1060 = vmatpush1.xpose.msra.mxu0 0.0
        %1061 = vmatprep.subr.mxu0 0.0
        %1062 = vmatpush1.xpose.msra.mxu0 0.0
        %1063 = vmatprep.subr.mxu0 0.0
        %1064 = vmatpush1.xpose.msra.mxu0 0.0
        %1065 = vmatprep.subr.mxu0 0.0
        %1066 = vmatpush1.xpose.msra.mxu0 0.0
        %1067 = vmatprep.subr.mxu0 0.0
        %1068 = vmatpush1.xpose.msra.mxu0 0.0
        %1069 = vmatprep.subr.mxu0 0.0
        %1070 = vmatpush1.xpose.msra.mxu0 0.0
        %1071 = vmatprep.subr.mxu0 0.0
        %1072 = vmatpush1.xpose.msra.mxu0 0.0
        %1073 = vmatprep.subr.mxu0 0.0
        %1074 = vmatpush1.xpose.msra.mxu0 0.0
        %1075 = vmatprep.subr.mxu0 0.0
        %1076 = vmatpush1.xpose.msra.mxu0 0.0
        %1077 = vmatprep.subr.mxu0 0.0
        %1078 = vmatpush1.xpose.msra.mxu0 0.0
        %1079 = vmatprep.subr.mxu0 0.0
        %1080 = vmatpush1.xpose.msra.mxu0 0.0
        %1081 = vmatprep.subr.mxu0 0.0
        %1082 = vmatpush1.xpose.msra.mxu0 0.0
        %1083 = vmatprep.subr.mxu0 0.0
        %1084 = vmatpush1.xpose.msra.mxu0 0.0
        %1085 = vmatprep.subr.mxu0 0.0
        %1086 = vmatpush1.xpose.msra.mxu0 0.0
        %1087 = vmatprep.subr.mxu0 0.0
        %1088 = vmatpush1.xpose.msra.mxu0 0.0
        %1089 = vmatprep.mubr.f32.mxu0 0.0
        %1090 = vmatmul.mubr.f32.gmra.mrb[0].mxu0 %v542
        %v1091 = vpop.f32.mrb[0].mxu0
        %v1092 = vadd.f32 %v638, %v1091
        %v1093 = vpop.f32.mrb[0].mxu0
        %1094 = vdwg.mxu0
        %1095 = vmatprep.subr.mxu0 0.0
        %1096 = vmatpush1.xpose.msra.mxu0 %v567
        %1097 = vmatprep.subr.mxu0 0.0
        %1098 = vmatpush1.xpose.msra.mxu0 %v568
        %1099 = vmatprep.subr.mxu0 0.0
        %1100 = vmatpush1.xpose.msra.mxu0 %v569
        %1101 = vmatprep.subr.mxu0 0.0
        %1102 = vmatpush1.xpose.msra.mxu0 %v570
        %1103 = vmatprep.subr.mxu0 0.0
        %1104 = vmatpush1.xpose.msra.mxu0 0.0
        %1105 = vmatprep.subr.mxu0 0.0
        %1106 = vmatpush1.xpose.msra.mxu0 0.0
        %1107 = vmatprep.subr.mxu0 0.0
        %1108 = vmatpush1.xpose.msra.mxu0 0.0
        %1109 = vmatprep.subr.mxu0 0.0
        %1110 = vmatpush1.xpose.msra.mxu0 0.0
        %1111 = vmatprep.subr.mxu0 0.0
        %1112 = vmatpush1.xpose.msra.mxu0 0.0
        %1113 = vmatprep.subr.mxu0 0.0
        %1114 = vmatpush1.xpose.msra.mxu0 0.0
        %1115 = vmatprep.subr.mxu0 0.0
        %1116 = vmatpush1.xpose.msra.mxu0 0.0
        %1117 = vmatprep.subr.mxu0 0.0
        %1118 = vmatpush1.xpose.msra.mxu0 0.0
        %1119 = vmatprep.subr.mxu0 0.0
        %1120 = vmatpush1.xpose.msra.mxu0 0.0
        %1121 = vmatprep.subr.mxu0 0.0
        %1122 = vmatpush1.xpose.msra.mxu0 0.0
        %1123 = vmatprep.subr.mxu0 0.0
        %1124 = vmatpush1.xpose.msra.mxu0 0.0
        %1125 = vmatprep.subr.mxu0 0.0
        %1126 = vmatpush1.xpose.msra.mxu0 0.0
        %1127 = vmatprep.subr.mxu0 0.0
        %1128 = vmatpush1.xpose.msra.mxu0 0.0
        %1129 = vmatprep.subr.mxu0 0.0
        %1130 = vmatpush1.xpose.msra.mxu0 0.0
        %1131 = vmatprep.subr.mxu0 0.0
        %1132 = vmatpush1.xpose.msra.mxu0 0.0
        %1133 = vmatprep.subr.mxu0 0.0
        %1134 = vmatpush1.xpose.msra.mxu0 0.0
        %1135 = vmatprep.subr.mxu0 0.0
        %1136 = vmatpush1.xpose.msra.mxu0 0.0
        %1137 = vmatprep.subr.mxu0 0.0
        %1138 = vmatpush1.xpose.msra.mxu0 0.0
        %1139 = vmatprep.subr.mxu0 0.0
        %1140 = vmatpush1.xpose.msra.mxu0 0.0
        %1141 = vmatprep.subr.mxu0 0.0
        %1142 = vmatpush1.xpose.msra.mxu0 0.0
        %1143 = vmatprep.subr.mxu0 0.0
        %1144 = vmatpush1.xpose.msra.mxu0 0.0
        %1145 = vmatprep.subr.mxu0 0.0
        %1146 = vmatpush1.xpose.msra.mxu0 0.0
        %1147 = vmatprep.subr.mxu0 0.0
        %1148 = vmatpush1.xpose.msra.mxu0 0.0
        %1149 = vmatprep.subr.mxu0 0.0
        %1150 = vmatpush1.xpose.msra.mxu0 0.0
        %1151 = vmatprep.subr.mxu0 0.0
        %1152 = vmatpush1.xpose.msra.mxu0 0.0
        %1153 = vmatprep.subr.mxu0 0.0
        %1154 = vmatpush1.xpose.msra.mxu0 0.0
        %1155 = vmatprep.subr.mxu0 0.0
        %1156 = vmatpush1.xpose.msra.mxu0 0.0
        %1157 = vmatprep.subr.mxu0 0.0
        %1158 = vmatpush1.xpose.msra.mxu0 0.0
        %1159 = vmatprep.mubr.f32.mxu0 0.0
        %1160 = vmatmul.mubr.f32.gmra.mrb[0].mxu0 %v542
        %v1161 = vpop.f32.mrb[0].mxu0
        %v1162 = vadd.f32 %v642, %v1161
        %v1163 = vpop.f32.mrb[0].mxu0
        %1164 = vdwg.mxu0
        %1165 = vmatprep.subr.mxu0 0.0
        %1166 = vmatpush1.xpose.msra.mxu0 %v571
        %1167 = vmatprep.subr.mxu0 0.0
        %1168 = vmatpush1.xpose.msra.mxu0 %v572
        %1169 = vmatprep.subr.mxu0 0.0
        %1170 = vmatpush1.xpose.msra.mxu0 %v573
        %1171 = vmatprep.subr.mxu0 0.0
        %1172 = vmatpush1.xpose.msra.mxu0 %v574
        %1173 = vmatprep.subr.mxu0 0.0
        %1174 = vmatpush1.xpose.msra.mxu0 0.0
        %1175 = vmatprep.subr.mxu0 0.0
        %1176 = vmatpush1.xpose.msra.mxu0 0.0
        %1177 = vmatprep.subr.mxu0 0.0
        %1178 = vmatpush1.xpose.msra.mxu0 0.0
        %1179 = vmatprep.subr.mxu0 0.0
        %1180 = vmatpush1.xpose.msra.mxu0 0.0
        %1181 = vmatprep.subr.mxu0 0.0
        %1182 = vmatpush1.xpose.msra.mxu0 0.0
        %1183 = vmatprep.subr.mxu0 0.0
        %1184 = vmatpush1.xpose.msra.mxu0 0.0
        %1185 = vmatprep.subr.mxu0 0.0
        %1186 = vmatpush1.xpose.msra.mxu0 0.0
        %1187 = vmatprep.subr.mxu0 0.0
        %1188 = vmatpush1.xpose.msra.mxu0 0.0
        %1189 = vmatprep.subr.mxu0 0.0
        %1190 = vmatpush1.xpose.msra.mxu0 0.0
        %1191 = vmatprep.subr.mxu0 0.0
        %1192 = vmatpush1.xpose.msra.mxu0 0.0
        %1193 = vmatprep.subr.mxu0 0.0
        %1194 = vmatpush1.xpose.msra.mxu0 0.0
        %1195 = vmatprep.subr.mxu0 0.0
        %1196 = vmatpush1.xpose.msra.mxu0 0.0
        %1197 = vmatprep.subr.mxu0 0.0
        %1198 = vmatpush1.xpose.msra.mxu0 0.0
        %1199 = vmatprep.subr.mxu0 0.0
        %1200 = vmatpush1.xpose.msra.mxu0 0.0
        %1201 = vmatprep.subr.mxu0 0.0
        %1202 = vmatpush1.xpose.msra.mxu0 0.0
        %1203 = vmatprep.subr.mxu0 0.0
        %1204 = vmatpush1.xpose.msra.mxu0 0.0
        %1205 = vmatprep.subr.mxu0 0.0
        %1206 = vmatpush1.xpose.msra.mxu0 0.0
        %1207 = vmatprep.subr.mxu0 0.0
        %1208 = vmatpush1.xpose.msra.mxu0 0.0
        %1209 = vmatprep.subr.mxu0 0.0
        %1210 = vmatpush1.xpose.msra.mxu0 0.0
        %1211 = vmatprep.subr.mxu0 0.0
        %1212 = vmatpush1.xpose.msra.mxu0 0.0
        %1213 = vmatprep.subr.mxu0 0.0
        %1214 = vmatpush1.xpose.msra.mxu0 0.0
        %1215 = vmatprep.subr.mxu0 0.0
        %1216 = vmatpush1.xpose.msra.mxu0 0.0
        %1217 = vmatprep.subr.mxu0 0.0
        %1218 = vmatpush1.xpose.msra.mxu0 0.0
        %1219 = vmatprep.subr.mxu0 0.0
        %1220 = vmatpush1.xpose.msra.mxu0 0.0
        %1221 = vmatprep.subr.mxu0 0.0
        %1222 = vmatpush1.xpose.msra.mxu0 0.0
        %1223 = vmatprep.subr.mxu0 0.0
        %1224 = vmatpush1.xpose.msra.mxu0 0.0
        %1225 = vmatprep.subr.mxu0 0.0
        %1226 = vmatpush1.xpose.msra.mxu0 0.0
        %1227 = vmatprep.subr.mxu0 0.0
        %1228 = vmatpush1.xpose.msra.mxu0 0.0
        %1229 = vmatprep.mubr.f32.mxu0 0.0
        %1230 = vmatmul.mubr.f32.gmra.mrb[0].mxu0 %v542
        %v1231 = vpop.f32.mrb[0].mxu0
        %v1232 = vadd.f32 %v646, %v1231
        %v1233 = vpop.f32.mrb[0].mxu0
        %1234 = vdwg.mxu0
        %1235 = vmatprep.subr.mxu0 0.0
        %1236 = vmatpush1.xpose.msra.mxu0 %v575
        %1237 = vmatprep.subr.mxu0 0.0
        %1238 = vmatpush1.xpose.msra.mxu0 %v576
        %1239 = vmatprep.subr.mxu0 0.0
        %1240 = vmatpush1.xpose.msra.mxu0 %v577
        %1241 = vmatprep.subr.mxu0 0.0
        %1242 = vmatpush1.xpose.msra.mxu0 %v578
        %1243 = vmatprep.subr.mxu0 0.0
        %1244 = vmatpush1.xpose.msra.mxu0 0.0
        %1245 = vmatprep.subr.mxu0 0.0
        %1246 = vmatpush1.xpose.msra.mxu0 0.0
        %1247 = vmatprep.subr.mxu0 0.0
        %1248 = vmatpush1.xpose.msra.mxu0 0.0
        %1249 = vmatprep.subr.mxu0 0.0
        %1250 = vmatpush1.xpose.msra.mxu0 0.0
        %1251 = vmatprep.subr.mxu0 0.0
        %1252 = vmatpush1.xpose.msra.mxu0 0.0
        %1253 = vmatprep.subr.mxu0 0.0
        %1254 = vmatpush1.xpose.msra.mxu0 0.0
        %1255 = vmatprep.subr.mxu0 0.0
        %1256 = vmatpush1.xpose.msra.mxu0 0.0
        %1257 = vmatprep.subr.mxu0 0.0
        %1258 = vmatpush1.xpose.msra.mxu0 0.0
        %1259 = vmatprep.subr.mxu0 0.0
        %1260 = vmatpush1.xpose.msra.mxu0 0.0
        %1261 = vmatprep.subr.mxu0 0.0
        %1262 = vmatpush1.xpose.msra.mxu0 0.0
        %1263 = vmatprep.subr.mxu0 0.0
        %1264 = vmatpush1.xpose.msra.mxu0 0.0
        %1265 = vmatprep.subr.mxu0 0.0
        %1266 = vmatpush1.xpose.msra.mxu0 0.0
        %1267 = vmatprep.subr.mxu0 0.0
        %1268 = vmatpush1.xpose.msra.mxu0 0.0
        %1269 = vmatprep.subr.mxu0 0.0
        %1270 = vmatpush1.xpose.msra.mxu0 0.0
        %1271 = vmatprep.subr.mxu0 0.0
        %1272 = vmatpush1.xpose.msra.mxu0 0.0
        %1273 = vmatprep.subr.mxu0 0.0
        %1274 = vmatpush1.xpose.msra.mxu0 0.0
        %1275 = vmatprep.subr.mxu0 0.0
        %1276 = vmatpush1.xpose.msra.mxu0 0.0
        %1277 = vmatprep.subr.mxu0 0.0
        %1278 = vmatpush1.xpose.msra.mxu0 0.0
        %1279 = vmatprep.subr.mxu0 0.0
        %1280 = vmatpush1.xpose.msra.mxu0 0.0
        %1281 = vmatprep.subr.mxu0 0.0
        %1282 = vmatpush1.xpose.msra.mxu0 0.0
        %1283 = vmatprep.subr.mxu0 0.0
        %1284 = vmatpush1.xpose.msra.mxu0 0.0
        %1285 = vmatprep.subr.mxu0 0.0
        %1286 = vmatpush1.xpose.msra.mxu0 0.0
        %1287 = vmatprep.subr.mxu0 0.0
        %1288 = vmatpush1.xpose.msra.mxu0 0.0
        %1289 = vmatprep.subr.mxu0 0.0
        %1290 = vmatpush1.xpose.msra.mxu0 0.0
        %1291 = vmatprep.subr.mxu0 0.0
        %1292 = vmatpush1.xpose.msra.mxu0 0.0
        %1293 = vmatprep.subr.mxu0 0.0
        %1294 = vmatpush1.xpose.msra.mxu0 0.0
        %1295 = vmatprep.subr.mxu0 0.0
        %1296 = vmatpush1.xpose.msra.mxu0 0.0
        %1297 = vmatprep.subr.mxu0 0.0
        %1298 = vmatpush1.xpose.msra.mxu0 0.0
        %1299 = vmatprep.mubr.f32.mxu0 0.0
        %1300 = vmatmul.mubr.f32.gmra.mrb[0].mxu0 %v542
        %v1301 = vpop.f32.mrb[0].mxu0
        %v1302 = vadd.f32 %v650, %v1301
        %v1303 = vpop.f32.mrb[0].mxu0
        %1304 = vdwg.mxu0
        %1305 = vmatprep.subr.mxu0 0.0
        %1306 = vmatpush1.xpose.msra.mxu0 %v579
        %1307 = vmatprep.subr.mxu0 0.0
        %1308 = vmatpush1.xpose.msra.mxu0 %v580
        %1309 = vmatprep.subr.mxu0 0.0
        %1310 = vmatpush1.xpose.msra.mxu0 %v581
        %1311 = vmatprep.subr.mxu0 0.0
        %1312 = vmatpush1.xpose.msra.mxu0 %v582
        %1313 = vmatprep.subr.mxu0 0.0
        %1314 = vmatpush1.xpose.msra.mxu0 0.0
        %1315 = vmatprep.subr.mxu0 0.0
        %1316 = vmatpush1.xpose.msra.mxu0 0.0
        %1317 = vmatprep.subr.mxu0 0.0
        %1318 = vmatpush1.xpose.msra.mxu0 0.0
        %1319 = vmatprep.subr.mxu0 0.0
        %1320 = vmatpush1.xpose.msra.mxu0 0.0
        %1321 = vmatprep.subr.mxu0 0.0
        %1322 = vmatpush1.xpose.msra.mxu0 0.0
        %1323 = vmatprep.subr.mxu0 0.0
        %1324 = vmatpush1.xpose.msra.mxu0 0.0
        %1325 = vmatprep.subr.mxu0 0.0
        %1326 = vmatpush1.xpose.msra.mxu0 0.0
        %1327 = vmatprep.subr.mxu0 0.0
        %1328 = vmatpush1.xpose.msra.mxu0 0.0
        %1329 = vmatprep.subr.mxu0 0.0
        %1330 = vmatpush1.xpose.msra.mxu0 0.0
        %1331 = vmatprep.subr.mxu0 0.0
        %1332 = vmatpush1.xpose.msra.mxu0 0.0
        %1333 = vmatprep.subr.mxu0 0.0
        %1334 = vmatpush1.xpose.msra.mxu0 0.0
        %1335 = vmatprep.subr.mxu0 0.0
        %1336 = vmatpush1.xpose.msra.mxu0 0.0
        %1337 = vmatprep.subr.mxu0 0.0
        %1338 = vmatpush1.xpose.msra.mxu0 0.0
        %1339 = vmatprep.subr.mxu0 0.0
        %1340 = vmatpush1.xpose.msra.mxu0 0.0
        %1341 = vmatprep.subr.mxu0 0.0
        %1342 = vmatpush1.xpose.msra.mxu0 0.0
        %1343 = vmatprep.subr.mxu0 0.0
        %1344 = vmatpush1.xpose.msra.mxu0 0.0
        %1345 = vmatprep.subr.mxu0 0.0
        %1346 = vmatpush1.xpose.msra.mxu0 0.0
        %1347 = vmatprep.subr.mxu0 0.0
        %1348 = vmatpush1.xpose.msra.mxu0 0.0
        %1349 = vmatprep.subr.mxu0 0.0
        %1350 = vmatpush1.xpose.msra.mxu0 0.0
        %1351 = vmatprep.subr.mxu0 0.0
        %1352 = vmatpush1.xpose.msra.mxu0 0.0
        %1353 = vmatprep.subr.mxu0 0.0
        %1354 = vmatpush1.xpose.msra.mxu0 0.0
        %1355 = vmatprep.subr.mxu0 0.0
        %1356 = vmatpush1.xpose.msra.mxu0 0.0
        %1357 = vmatprep.subr.mxu0 0.0
        %1358 = vmatpush1.xpose.msra.mxu0 0.0
        %1359 = vmatprep.subr.mxu0 0.0
        %1360 = vmatpush1.xpose.msra.mxu0 0.0
        %1361 = vmatprep.subr.mxu0 0.0
        %1362 = vmatpush1.xpose.msra.mxu0 0.0
        %1363 = vmatprep.subr.mxu0 0.0
        %1364 = vmatpush1.xpose.msra.mxu0 0.0
        %1365 = vmatprep.subr.mxu0 0.0
        %1366 = vmatpush1.xpose.msra.mxu0 0.0
        %1367 = vmatprep.subr.mxu0 0.0
        %1368 = vmatpush1.xpose.msra.mxu0 0.0
        %1369 = vmatprep.mubr.f32.mxu0 0.0
        %1370 = vmatmul.mubr.f32.gmra.mrb[0].mxu0 %v542
        %v1371 = vpop.f32.mrb[0].mxu0
        %v1372 = vadd.f32 %v654, %v1371
        %v1373 = vpop.f32.mrb[0].mxu0
        %1374 = vdwg.mxu0
        %1375 = vmatprep.subr.mxu0 0.0
        %1376 = vmatpush1.xpose.msra.mxu0 %v583
        %1377 = vmatprep.subr.mxu0 0.0
        %1378 = vmatpush1.xpose.msra.mxu0 %v584
        %1379 = vmatprep.subr.mxu0 0.0
        %1380 = vmatpush1.xpose.msra.mxu0 %v585
        %1381 = vmatprep.subr.mxu0 0.0
        %1382 = vmatpush1.xpose.msra.mxu0 %v586
        %1383 = vmatprep.subr.mxu0 0.0
        %1384 = vmatpush1.xpose.msra.mxu0 0.0
        %1385 = vmatprep.subr.mxu0 0.0
        %1386 = vmatpush1.xpose.msra.mxu0 0.0
        %1387 = vmatprep.subr.mxu0 0.0
        %1388 = vmatpush1.xpose.msra.mxu0 0.0
        %1389 = vmatprep.subr.mxu0 0.0
        %1390 = vmatpush1.xpose.msra.mxu0 0.0
        %1391 = vmatprep.subr.mxu0 0.0
        %1392 = vmatpush1.xpose.msra.mxu0 0.0
        %1393 = vmatprep.subr.mxu0 0.0
        %1394 = vmatpush1.xpose.msra.mxu0 0.0
        %1395 = vmatprep.subr.mxu0 0.0
        %1396 = vmatpush1.xpose.msra.mxu0 0.0
        %1397 = vmatprep.subr.mxu0 0.0
        %1398 = vmatpush1.xpose.msra.mxu0 0.0
        %1399 = vmatprep.subr.mxu0 0.0
        %1400 = vmatpush1.xpose.msra.mxu0 0.0
        %1401 = vmatprep.subr.mxu0 0.0
        %1402 = vmatpush1.xpose.msra.mxu0 0.0
        %1403 = vmatprep.subr.mxu0 0.0
        %1404 = vmatpush1.xpose.msra.mxu0 0.0
        %1405 = vmatprep.subr.mxu0 0.0
        %1406 = vmatpush1.xpose.msra.mxu0 0.0
        %1407 = vmatprep.subr.mxu0 0.0
        %1408 = vmatpush1.xpose.msra.mxu0 0.0
        %1409 = vmatprep.subr.mxu0 0.0
        %1410 = vmatpush1.xpose.msra.mxu0 0.0
        %1411 = vmatprep.subr.mxu0 0.0
        %1412 = vmatpush1.xpose.msra.mxu0 0.0
        %1413 = vmatprep.subr.mxu0 0.0
        %1414 = vmatpush1.xpose.msra.mxu0 0.0
        %1415 = vmatprep.subr.mxu0 0.0
        %1416 = vmatpush1.xpose.msra.mxu0 0.0
        %1417 = vmatprep.subr.mxu0 0.0
        %1418 = vmatpush1.xpose.msra.mxu0 0.0
        %1419 = vmatprep.subr.mxu0 0.0
        %1420 = vmatpush1.xpose.msra.mxu0 0.0
        %1421 = vmatprep.subr.mxu0 0.0
        %1422 = vmatpush1.xpose.msra.mxu0 0.0
        %1423 = vmatprep.subr.mxu0 0.0
        %1424 = vmatpush1.xpose.msra.mxu0 0.0
        %1425 = vmatprep.subr.mxu0 0.0
        %1426 = vmatpush1.xpose.msra.mxu0 0.0
        %1427 = vmatprep.subr.mxu0 0.0
        %1428 = vmatpush1.xpose.msra.mxu0 0.0
        %1429 = vmatprep.subr.mxu0 0.0
        %1430 = vmatpush1.xpose.msra.mxu0 0.0
        %1431 = vmatprep.subr.mxu0 0.0
        %1432 = vmatpush1.xpose.msra.mxu0 0.0
        %1433 = vmatprep.subr.mxu0 0.0
        %1434 = vmatpush1.xpose.msra.mxu0 0.0
        %1435 = vmatprep.subr.mxu0 0.0
        %1436 = vmatpush1.xpose.msra.mxu0 0.0
        %1437 = vmatprep.subr.mxu0 0.0
        %1438 = vmatpush1.xpose.msra.mxu0 0.0
        %1439 = vmatprep.mubr.f32.mxu0 0.0
        %1440 = vmatmul.mubr.f32.gmra.mrb[0].mxu0 %v542
        %v1441 = vpop.f32.mrb[0].mxu0
        %v1442 = vadd.f32 %v658, %v1441
        %v1443 = vpop.f32.mrb[0].mxu0
        %1444 = vdwg.mxu0
        %1445 = vmatprep.subr.mxu0 0.0
        %1446 = vmatpush1.xpose.msra.mxu0 %v587
        %1447 = vmatprep.subr.mxu0 0.0
        %1448 = vmatpush1.xpose.msra.mxu0 %v588
        %1449 = vmatprep.subr.mxu0 0.0
        %1450 = vmatpush1.xpose.msra.mxu0 %v589
        %1451 = vmatprep.subr.mxu0 0.0
        %1452 = vmatpush1.xpose.msra.mxu0 %v590
        %1453 = vmatprep.subr.mxu0 0.0
        %1454 = vmatpush1.xpose.msra.mxu0 0.0
        %1455 = vmatprep.subr.mxu0 0.0
        %1456 = vmatpush1.xpose.msra.mxu0 0.0
        %1457 = vmatprep.subr.mxu0 0.0
        %1458 = vmatpush1.xpose.msra.mxu0 0.0
        %1459 = vmatprep.subr.mxu0 0.0
        %1460 = vmatpush1.xpose.msra.mxu0 0.0
        %1461 = vmatprep.subr.mxu0 0.0
        %1462 = vmatpush1.xpose.msra.mxu0 0.0
        %1463 = vmatprep.subr.mxu0 0.0
        %1464 = vmatpush1.xpose.msra.mxu0 0.0
        %1465 = vmatprep.subr.mxu0 0.0
        %1466 = vmatpush1.xpose.msra.mxu0 0.0
        %1467 = vmatprep.subr.mxu0 0.0
        %1468 = vmatpush1.xpose.msra.mxu0 0.0
        %1469 = vmatprep.subr.mxu0 0.0
        %1470 = vmatpush1.xpose.msra.mxu0 0.0
        %1471 = vmatprep.subr.mxu0 0.0
        %1472 = vmatpush1.xpose.msra.mxu0 0.0
        %1473 = vmatprep.subr.mxu0 0.0
        %1474 = vmatpush1.xpose.msra.mxu0 0.0
        %1475 = vmatprep.subr.mxu0 0.0
        %1476 = vmatpush1.xpose.msra.mxu0 0.0
        %1477 = vmatprep.subr.mxu0 0.0
        %1478 = vmatpush1.xpose.msra.mxu0 0.0
        %1479 = vmatprep.subr.mxu0 0.0
        %1480 = vmatpush1.xpose.msra.mxu0 0.0
        %1481 = vmatprep.subr.mxu0 0.0
        %1482 = vmatpush1.xpose.msra.mxu0 0.0
        %1483 = vmatprep.subr.mxu0 0.0
        %1484 = vmatpush1.xpose.msra.mxu0 0.0
        %1485 = vmatprep.subr.mxu0 0.0
        %1486 = vmatpush1.xpose.msra.mxu0 0.0
        %1487 = vmatprep.subr.mxu0 0.0
        %1488 = vmatpush1.xpose.msra.mxu0 0.0
        %1489 = vmatprep.subr.mxu0 0.0
        %1490 = vmatpush1.xpose.msra.mxu0 0.0
        %1491 = vmatprep.subr.mxu0 0.0
        %1492 = vmatpush1.xpose.msra.mxu0 0.0
        %1493 = vmatprep.subr.mxu0 0.0
        %1494 = vmatpush1.xpose.msra.mxu0 0.0
        %1495 = vmatprep.subr.mxu0 0.0
        %1496 = vmatpush1.xpose.msra.mxu0 0.0
        %1497 = vmatprep.subr.mxu0 0.0
        %1498 = vmatpush1.xpose.msra.mxu0 0.0
        %1499 = vmatprep.subr.mxu0 0.0
        %1500 = vmatpush1.xpose.msra.mxu0 0.0
        %1501 = vmatprep.subr.mxu0 0.0
        %1502 = vmatpush1.xpose.msra.mxu0 0.0
        %1503 = vmatprep.subr.mxu0 0.0
        %1504 = vmatpush1.xpose.msra.mxu0 0.0
        %1505 = vmatprep.subr.mxu0 0.0
        %1506 = vmatpush1.xpose.msra.mxu0 0.0
        %1507 = vmatprep.subr.mxu0 0.0
        %1508 = vmatpush1.xpose.msra.mxu0 0.0
        %1509 = vmatprep.mubr.f32.mxu0 0.0
        %1510 = vmatmul.mubr.f32.gmra.mrb[0].mxu0 %v542
        %v1511 = vpop.f32.mrb[0].mxu0
        %v1512 = vadd.f32 %v662, %v1511
        %v1513 = vpop.f32.mrb[0].mxu0
        %1514 = vdwg.mxu0
        %vm1515 = vcmask 261120
        %v1517 = vsel %vm1515, %v742, 0
        %v1520 = vsel %vm1515, %v1022, 0
        %1522 = vmatprep.subr.mxu0 0.0
        %1523 = vmatpush1.xpose.msra.mxu0 %v1520
        %1524 = vmatprep.subr.mxu0 0.0
        %1525 = vmatpush1.xpose.msra.mxu0 0.0
        %1526 = vmatprep.subr.mxu0 0.0
        %1527 = vmatpush1.xpose.msra.mxu0 0.0
        %1528 = vmatprep.subr.mxu0 0.0
        %1529 = vmatpush1.xpose.msra.mxu0 0.0
        %1530 = vmatprep.subr.mxu0 0.0
        %1531 = vmatpush1.xpose.msra.mxu0 0.0
        %1532 = vmatprep.subr.mxu0 0.0
        %1533 = vmatpush1.xpose.msra.mxu0 0.0
        %1534 = vmatprep.subr.mxu0 0.0
        %1535 = vmatpush1.xpose.msra.mxu0 0.0
        %1536 = vmatprep.subr.mxu0 0.0
        %1537 = vmatpush1.xpose.msra.mxu0 0.0
        %1538 = vmatprep.subr.mxu0 0.0
        %1539 = vmatpush1.xpose.msra.mxu0 0.0
        %1540 = vmatprep.subr.mxu0 0.0
        %1541 = vmatpush1.xpose.msra.mxu0 0.0
        %1542 = vmatprep.subr.mxu0 0.0
        %1543 = vmatpush1.xpose.msra.mxu0 0.0
        %1544 = vmatprep.subr.mxu0 0.0
        %1545 = vmatpush1.xpose.msra.mxu0 0.0
        %1546 = vmatprep.subr.mxu0 0.0
        %1547 = vmatpush1.xpose.msra.mxu0 0.0
        %1548 = vmatprep.subr.mxu0 0.0
        %1549 = vmatpush1.xpose.msra.mxu0 0.0
        %1550 = vmatprep.subr.mxu0 0.0
        %1551 = vmatpush1.xpose.msra.mxu0 0.0
        %1552 = vmatprep.subr.mxu0 0.0
        %1553 = vmatpush1.xpose.msra.mxu0 0.0
        %1554 = vmatprep.subr.mxu0 0.0
        %1555 = vmatpush1.xpose.msra.mxu0 0.0
        %1556 = vmatprep.subr.mxu0 0.0
        %1557 = vmatpush1.xpose.msra.mxu0 0.0
        %1558 = vmatprep.subr.mxu0 0.0
        %1559 = vmatpush1.xpose.msra.mxu0 0.0
        %1560 = vmatprep.subr.mxu0 0.0
        %1561 = vmatpush1.xpose.msra.mxu0 0.0
        %1562 = vmatprep.subr.mxu0 0.0
        %1563 = vmatpush1.xpose.msra.mxu0 0.0
        %1564 = vmatprep.subr.mxu0 0.0
        %1565 = vmatpush1.xpose.msra.mxu0 0.0
        %1566 = vmatprep.subr.mxu0 0.0
        %1567 = vmatpush1.xpose.msra.mxu0 0.0
        %1568 = vmatprep.subr.mxu0 0.0
        %1569 = vmatpush1.xpose.msra.mxu0 0.0
        %1570 = vmatprep.subr.mxu0 0.0
        %1571 = vmatpush1.xpose.msra.mxu0 0.0
        %1572 = vmatprep.subr.mxu0 0.0
        %1573 = vmatpush1.xpose.msra.mxu0 0.0
        %1574 = vmatprep.subr.mxu0 0.0
        %1575 = vmatpush1.xpose.msra.mxu0 0.0
        %1576 = vmatprep.subr.mxu0 0.0
        %1577 = vmatpush1.xpose.msra.mxu0 0.0
        %1578 = vmatprep.subr.mxu0 0.0
        %1579 = vmatpush1.xpose.msra.mxu0 0.0
        %1580 = vmatprep.subr.mxu0 0.0
        %1581 = vmatpush1.xpose.msra.mxu0 0.0
        %1582 = vmatprep.subr.mxu0 0.0
        %1583 = vmatpush1.xpose.msra.mxu0 0.0
        %1584 = vmatprep.subr.mxu0 0.0
        %1585 = vmatpush1.xpose.msra.mxu0 0.0
        %1586 = vmatprep.mubr.f32.mxu0 0.0
        %1587 = vmatmul.mubr.f32.gmra.mrb[0].mxu0 %v1517
        %v1588 = vpop.f32.mrb[0].mxu0
        %v1589 = vadd.f32 0.0, %v1588
        %v1590 = vpop.f32.mrb[0].mxu0
        %1591 = vdwg.mxu0
        %v1593 = vsel %vm1515, %v812, 0
        %v1596 = vsel %vm1515, %v1092, 0
        %1598 = vmatprep.subr.mxu0 0.0
        %1599 = vmatpush1.xpose.msra.mxu0 %v1596
        %1600 = vmatprep.subr.mxu0 0.0
        %1601 = vmatpush1.xpose.msra.mxu0 0.0
        %1602 = vmatprep.subr.mxu0 0.0
        %1603 = vmatpush1.xpose.msra.mxu0 0.0
        %1604 = vmatprep.subr.mxu0 0.0
        %1605 = vmatpush1.xpose.msra.mxu0 0.0
        %1606 = vmatprep.subr.mxu0 0.0
        %1607 = vmatpush1.xpose.msra.mxu0 0.0
        %1608 = vmatprep.subr.mxu0 0.0
        %1609 = vmatpush1.xpose.msra.mxu0 0.0
        %1610 = vmatprep.subr.mxu0 0.0
        %1611 = vmatpush1.xpose.msra.mxu0 0.0
        %1612 = vmatprep.subr.mxu0 0.0
        %1613 = vmatpush1.xpose.msra.mxu0 0.0
        %1614 = vmatprep.subr.mxu0 0.0
        %1615 = vmatpush1.xpose.msra.mxu0 0.0
        %1616 = vmatprep.subr.mxu0 0.0
        %1617 = vmatpush1.xpose.msra.mxu0 0.0
        %1618 = vmatprep.subr.mxu0 0.0
        %1619 = vmatpush1.xpose.msra.mxu0 0.0
        %1620 = vmatprep.subr.mxu0 0.0
        %1621 = vmatpush1.xpose.msra.mxu0 0.0
        %1622 = vmatprep.subr.mxu0 0.0
        %1623 = vmatpush1.xpose.msra.mxu0 0.0
        %1624 = vmatprep.subr.mxu0 0.0
        %1625 = vmatpush1.xpose.msra.mxu0 0.0
        %1626 = vmatprep.subr.mxu0 0.0
        %1627 = vmatpush1.xpose.msra.mxu0 0.0
        %1628 = vmatprep.subr.mxu0 0.0
        %1629 = vmatpush1.xpose.msra.mxu0 0.0
        %1630 = vmatprep.subr.mxu0 0.0
        %1631 = vmatpush1.xpose.msra.mxu0 0.0
        %1632 = vmatprep.subr.mxu0 0.0
        %1633 = vmatpush1.xpose.msra.mxu0 0.0
        %1634 = vmatprep.subr.mxu0 0.0
        %1635 = vmatpush1.xpose.msra.mxu0 0.0
        %1636 = vmatprep.subr.mxu0 0.0
        %1637 = vmatpush1.xpose.msra.mxu0 0.0
        %1638 = vmatprep.subr.mxu0 0.0
        %1639 = vmatpush1.xpose.msra.mxu0 0.0
        %1640 = vmatprep.subr.mxu0 0.0
        %1641 = vmatpush1.xpose.msra.mxu0 0.0
        %1642 = vmatprep.subr.mxu0 0.0
        %1643 = vmatpush1.xpose.msra.mxu0 0.0
        %1644 = vmatprep.subr.mxu0 0.0
        %1645 = vmatpush1.xpose.msra.mxu0 0.0
        %1646 = vmatprep.subr.mxu0 0.0
        %1647 = vmatpush1.xpose.msra.mxu0 0.0
        %1648 = vmatprep.subr.mxu0 0.0
        %1649 = vmatpush1.xpose.msra.mxu0 0.0
        %1650 = vmatprep.subr.mxu0 0.0
        %1651 = vmatpush1.xpose.msra.mxu0 0.0
        %1652 = vmatprep.subr.mxu0 0.0
        %1653 = vmatpush1.xpose.msra.mxu0 0.0
        %1654 = vmatprep.subr.mxu0 0.0
        %1655 = vmatpush1.xpose.msra.mxu0 0.0
        %1656 = vmatprep.subr.mxu0 0.0
        %1657 = vmatpush1.xpose.msra.mxu0 0.0
        %1658 = vmatprep.subr.mxu0 0.0
        %1659 = vmatpush1.xpose.msra.mxu0 0.0
        %1660 = vmatprep.subr.mxu0 0.0
        %1661 = vmatpush1.xpose.msra.mxu0 0.0
        %1662 = vmatprep.mubr.f32.mxu0 0.0
        %1663 = vmatmul.mubr.f32.gmra.mrb[0].mxu0 %v1593
        %v1664 = vpop.f32.mrb[0].mxu0
        %v1665 = vadd.f32 0.0, %v1664
        %v1666 = vpop.f32.mrb[0].mxu0
        %1667 = vdwg.mxu0
        %v1669 = vsel %vm1515, %v882, 0
        %v1672 = vsel %vm1515, %v1162, 0
        %1674 = vmatprep.subr.mxu0 0.0
        %1675 = vmatpush1.xpose.msra.mxu0 %v1672
        %1676 = vmatprep.subr.mxu0 0.0
        %1677 = vmatpush1.xpose.msra.mxu0 0.0
        %1678 = vmatprep.subr.mxu0 0.0
        %1679 = vmatpush1.xpose.msra.mxu0 0.0
        %1680 = vmatprep.subr.mxu0 0.0
        %1681 = vmatpush1.xpose.msra.mxu0 0.0
        %1682 = vmatprep.subr.mxu0 0.0
        %1683 = vmatpush1.xpose.msra.mxu0 0.0
        %1684 = vmatprep.subr.mxu0 0.0
        %1685 = vmatpush1.xpose.msra.mxu0 0.0
        %1686 = vmatprep.subr.mxu0 0.0
        %1687 = vmatpush1.xpose.msra.mxu0 0.0
        %1688 = vmatprep.subr.mxu0 0.0
        %1689 = vmatpush1.xpose.msra.mxu0 0.0
        %1690 = vmatprep.subr.mxu0 0.0
        %1691 = vmatpush1.xpose.msra.mxu0 0.0
        %1692 = vmatprep.subr.mxu0 0.0
        %1693 = vmatpush1.xpose.msra.mxu0 0.0
        %1694 = vmatprep.subr.mxu0 0.0
        %1695 = vmatpush1.xpose.msra.mxu0 0.0
        %1696 = vmatprep.subr.mxu0 0.0
        %1697 = vmatpush1.xpose.msra.mxu0 0.0
        %1698 = vmatprep.subr.mxu0 0.0
        %1699 = vmatpush1.xpose.msra.mxu0 0.0
        %1700 = vmatprep.subr.mxu0 0.0
        %1701 = vmatpush1.xpose.msra.mxu0 0.0
        %1702 = vmatprep.subr.mxu0 0.0
        %1703 = vmatpush1.xpose.msra.mxu0 0.0
        %1704 = vmatprep.subr.mxu0 0.0
        %1705 = vmatpush1.xpose.msra.mxu0 0.0
        %1706 = vmatprep.subr.mxu0 0.0
        %1707 = vmatpush1.xpose.msra.mxu0 0.0
        %1708 = vmatprep.subr.mxu0 0.0
        %1709 = vmatpush1.xpose.msra.mxu0 0.0
        %1710 = vmatprep.subr.mxu0 0.0
        %1711 = vmatpush1.xpose.msra.mxu0 0.0
        %1712 = vmatprep.subr.mxu0 0.0
        %1713 = vmatpush1.xpose.msra.mxu0 0.0
        %1714 = vmatprep.subr.mxu0 0.0
        %1715 = vmatpush1.xpose.msra.mxu0 0.0
        %1716 = vmatprep.subr.mxu0 0.0
        %1717 = vmatpush1.xpose.msra.mxu0 0.0
        %1718 = vmatprep.subr.mxu0 0.0
        %1719 = vmatpush1.xpose.msra.mxu0 0.0
        %1720 = vmatprep.subr.mxu0 0.0
        %1721 = vmatpush1.xpose.msra.mxu0 0.0
        %1722 = vmatprep.subr.mxu0 0.0
        %1723 = vmatpush1.xpose.msra.mxu0 0.0
        %1724 = vmatprep.subr.mxu0 0.0
        %1725 = vmatpush1.xpose.msra.mxu0 0.0
        %1726 = vmatprep.subr.mxu0 0.0
        %1727 = vmatpush1.xpose.msra.mxu0 0.0
        %1728 = vmatprep.subr.mxu0 0.0
        %1729 = vmatpush1.xpose.msra.mxu0 0.0
        %1730 = vmatprep.subr.mxu0 0.0
        %1731 = vmatpush1.xpose.msra.mxu0 0.0
        %1732 = vmatprep.subr.mxu0 0.0
        %1733 = vmatpush1.xpose.msra.mxu0 0.0
        %1734 = vmatprep.subr.mxu0 0.0
        %1735 = vmatpush1.xpose.msra.mxu0 0.0
        %1736 = vmatprep.subr.mxu0 0.0
        %1737 = vmatpush1.xpose.msra.mxu0 0.0
        %1738 = vmatprep.mubr.f32.mxu0 0.0
        %1739 = vmatmul.mubr.f32.gmra.mrb[0].mxu0 %v1669
        %v1740 = vpop.f32.mrb[0].mxu0
        %v1741 = vadd.f32 0.0, %v1740
        %v1742 = vpop.f32.mrb[0].mxu0
        %1743 = vdwg.mxu0
        %v1745 = vsel %vm1515, %v952, 0
        %v1748 = vsel %vm1515, %v1232, 0
        %1750 = vmatprep.subr.mxu0 0.0
        %1751 = vmatpush1.xpose.msra.mxu0 %v1748
        %1752 = vmatprep.subr.mxu0 0.0
        %1753 = vmatpush1.xpose.msra.mxu0 0.0
        %1754 = vmatprep.subr.mxu0 0.0
        %1755 = vmatpush1.xpose.msra.mxu0 0.0
        %1756 = vmatprep.subr.mxu0 0.0
        %1757 = vmatpush1.xpose.msra.mxu0 0.0
        %1758 = vmatprep.subr.mxu0 0.0
        %1759 = vmatpush1.xpose.msra.mxu0 0.0
        %1760 = vmatprep.subr.mxu0 0.0
        %1761 = vmatpush1.xpose.msra.mxu0 0.0
        %1762 = vmatprep.subr.mxu0 0.0
        %1763 = vmatpush1.xpose.msra.mxu0 0.0
        %1764 = vmatprep.subr.mxu0 0.0
        %1765 = vmatpush1.xpose.msra.mxu0 0.0
        %1766 = vmatprep.subr.mxu0 0.0
        %1767 = vmatpush1.xpose.msra.mxu0 0.0
        %1768 = vmatprep.subr.mxu0 0.0
        %1769 = vmatpush1.xpose.msra.mxu0 0.0
        %1770 = vmatprep.subr.mxu0 0.0
        %1771 = vmatpush1.xpose.msra.mxu0 0.0
        %1772 = vmatprep.subr.mxu0 0.0
        %1773 = vmatpush1.xpose.msra.mxu0 0.0
        %1774 = vmatprep.subr.mxu0 0.0
        %1775 = vmatpush1.xpose.msra.mxu0 0.0
        %1776 = vmatprep.subr.mxu0 0.0
        %1777 = vmatpush1.xpose.msra.mxu0 0.0
        %1778 = vmatprep.subr.mxu0 0.0
        %1779 = vmatpush1.xpose.msra.mxu0 0.0
        %1780 = vmatprep.subr.mxu0 0.0
        %1781 = vmatpush1.xpose.msra.mxu0 0.0
        %1782 = vmatprep.subr.mxu0 0.0
        %1783 = vmatpush1.xpose.msra.mxu0 0.0
        %1784 = vmatprep.subr.mxu0 0.0
        %1785 = vmatpush1.xpose.msra.mxu0 0.0
        %1786 = vmatprep.subr.mxu0 0.0
        %1787 = vmatpush1.xpose.msra.mxu0 0.0
        %1788 = vmatprep.subr.mxu0 0.0
        %1789 = vmatpush1.xpose.msra.mxu0 0.0
        %1790 = vmatprep.subr.mxu0 0.0
        %1791 = vmatpush1.xpose.msra.mxu0 0.0
        %1792 = vmatprep.subr.mxu0 0.0
        %1793 = vmatpush1.xpose.msra.mxu0 0.0
        %1794 = vmatprep.subr.mxu0 0.0
        %1795 = vmatpush1.xpose.msra.mxu0 0.0
        %1796 = vmatprep.subr.mxu0 0.0
        %1797 = vmatpush1.xpose.msra.mxu0 0.0
        %1798 = vmatprep.subr.mxu0 0.0
        %1799 = vmatpush1.xpose.msra.mxu0 0.0
        %1800 = vmatprep.subr.mxu0 0.0
        %1801 = vmatpush1.xpose.msra.mxu0 0.0
        %1802 = vmatprep.subr.mxu0 0.0
        %1803 = vmatpush1.xpose.msra.mxu0 0.0
        %1804 = vmatprep.subr.mxu0 0.0
        %1805 = vmatpush1.xpose.msra.mxu0 0.0
        %1806 = vmatprep.subr.mxu0 0.0
        %1807 = vmatpush1.xpose.msra.mxu0 0.0
        %1808 = vmatprep.subr.mxu0 0.0
        %1809 = vmatpush1.xpose.msra.mxu0 0.0
        %1810 = vmatprep.subr.mxu0 0.0
        %1811 = vmatpush1.xpose.msra.mxu0 0.0
        %1812 = vmatprep.subr.mxu0 0.0
        %1813 = vmatpush1.xpose.msra.mxu0 0.0
        %1814 = vmatprep.mubr.f32.mxu0 0.0
        %1815 = vmatmul.mubr.f32.gmra.mrb[0].mxu0 %v1745
        %v1816 = vpop.f32.mrb[0].mxu0
        %v1817 = vadd.f32 0.0, %v1816
        %v1818 = vpop.f32.mrb[0].mxu0
        %1819 = vdwg.mxu0
        %v1820 = vmul.f32 %v1589, 0.17677669
        %v1821 = vmul.f32 %v1665, 0.17677669
        %v1822 = vmul.f32 %v1741, 0.17677669
        %v1823 = vmul.f32 %v1817, 0.17677669
        %vm1824 = vcmask 64512
        %v1825 = vsel %vm1824, %v1820, -inf
        %1826 = vmax.xlane.f32.xlu0 %v1825
        %v1827 = vpop.xlane.xlu0 %1826
        %v1828 = vsel %vm1824, %v1821, -inf
        %1829 = vmax.xlane.f32.xlu0 %v1828
        %v1830 = vpop.xlane.xlu0 %1829
        %v1831 = vsel %vm1824, %v1822, -inf
        %1832 = vmax.xlane.f32.xlu0 %v1831
        %v1833 = vpop.xlane.xlu0 %1832
        %v1834 = vsel %vm1824, %v1823, -inf
        %1835 = vmax.xlane.f32.xlu0 %v1834
        %v1836 = vpop.xlane.xlu0 %1835
        %v1837 = vsub.f32 %v1820, %v1827
        %v1838 = vsub.f32 %v1821, %v1830
        %v1839 = vsub.f32 %v1822, %v1833
        %v1840 = vsub.f32 %v1823, %v1836
        %v1841 = vmul.f32 %v1837, 1.442695
        %v1842 = vpow.pop %v1841
        %v1843 = vmul.f32 %v1838, 1.442695
        %v1844 = vpow.pop %v1843
        %v1845 = vmul.f32 %v1839, 1.442695
        %v1846 = vpow.pop %v1845
        %v1847 = vmul.f32 %v1840, 1.442695
        %v1848 = vpow.pop %v1847
        %v1849 = vsel %vm1824, %v1842, 0.0
        %1850 = vadd.xlane.f32.xlu0 %v1849
        %v1851 = vpop.xlane.xlu0 %1850
        %v1852 = vsel %vm1824, %v1844, 0.0
        %1853 = vadd.xlane.f32.xlu0 %v1852
        %v1854 = vpop.xlane.xlu0 %1853
        %v1855 = vsel %vm1824, %v1846, 0.0
        %1856 = vadd.xlane.f32.xlu0 %v1855
        %v1857 = vpop.xlane.xlu0 %1856
        %v1858 = vsel %vm1824, %v1848, 0.0
        %1859 = vadd.xlane.f32.xlu0 %v1858
        %v1860 = vpop.xlane.xlu0 %1859
        %v1861 = vrcp.pop %v1851
        %v1862 = vmul.f32 %v1842, %v1861
        %v1863 = vrcp.pop %v1854
        %v1864 = vmul.f32 %v1844, %v1863
        %v1865 = vrcp.pop %v1857
        %v1866 = vmul.f32 %v1846, %v1865
        %v1867 = vrcp.pop %v1860
        %v1868 = vmul.f32 %v1848, %v1867
        %v1870 = vsel %vm1824, %v1862, 0
        %1872 = vmatprep.subr.mxu0 0.0
        %1873 = vmatpush1.msra.mxu0 %v1302
        %1874 = vmatprep.subr.mxu0 0.0
        %1875 = vmatpush1.msra.mxu0 0.0
        %1876 = vmatprep.subr.mxu0 0.0
        %1877 = vmatpush1.msra.mxu0 0.0
        %1878 = vmatprep.subr.mxu0 0.0
        %1879 = vmatpush1.msra.mxu0 0.0
        %1880 = vmatprep.subr.mxu0 0.0
        %1881 = vmatpush1.msra.mxu0 0.0
        %1882 = vmatprep.subr.mxu0 0.0
        %1883 = vmatpush1.msra.mxu0 0.0
        %1884 = vmatprep.subr.mxu0 0.0
        %1885 = vmatpush1.msra.mxu0 0.0
        %1886 = vmatprep.subr.mxu0 0.0
        %1887 = vmatpush1.msra.mxu0 0.0
        %1888 = vmatprep.subr.mxu0 0.0
        %1889 = vmatpush1.msra.mxu0 0.0
        %1890 = vmatprep.subr.mxu0 0.0
        %1891 = vmatpush1.msra.mxu0 0.0
        %1892 = vmatprep.subr.mxu0 0.0
        %1893 = vmatpush1.msra.mxu0 0.0
        %1894 = vmatprep.subr.mxu0 0.0
        %1895 = vmatpush1.msra.mxu0 0.0
        %1896 = vmatprep.subr.mxu0 0.0
        %1897 = vmatpush1.msra.mxu0 0.0
        %1898 = vmatprep.subr.mxu0 0.0
        %1899 = vmatpush1.msra.mxu0 0.0
        %1900 = vmatprep.subr.mxu0 0.0
        %1901 = vmatpush1.msra.mxu0 0.0
        %1902 = vmatprep.subr.mxu0 0.0
        %1903 = vmatpush1.msra.mxu0 0.0
        %1904 = vmatprep.subr.mxu0 0.0
        %1905 = vmatpush1.msra.mxu0 0.0
        %1906 = vmatprep.subr.mxu0 0.0
        %1907 = vmatpush1.msra.mxu0 0.0
        %1908 = vmatprep.subr.mxu0 0.0
        %1909 = vmatpush1.msra.mxu0 0.0
        %1910 = vmatprep.subr.mxu0 0.0
        %1911 = vmatpush1.msra.mxu0 0.0
        %1912 = vmatprep.subr.mxu0 0.0
        %1913 = vmatpush1.msra.mxu0 0.0
        %1914 = vmatprep.subr.mxu0 0.0
        %1915 = vmatpush1.msra.mxu0 0.0
        %1916 = vmatprep.subr.mxu0 0.0
        %1917 = vmatpush1.msra.mxu0 0.0
        %1918 = vmatprep.subr.mxu0 0.0
        %1919 = vmatpush1.msra.mxu0 0.0
        %1920 = vmatprep.subr.mxu0 0.0
        %1921 = vmatpush1.msra.mxu0 0.0
        %1922 = vmatprep.subr.mxu0 0.0
        %1923 = vmatpush1.msra.mxu0 0.0
        %1924 = vmatprep.subr.mxu0 0.0
        %1925 = vmatpush1.msra.mxu0 0.0
        %1926 = vmatprep.subr.mxu0 0.0
        %1927 = vmatpush1.msra.mxu0 0.0
        %1928 = vmatprep.subr.mxu0 0.0
        %1929 = vmatpush1.msra.mxu0 0.0
        %1930 = vmatprep.subr.mxu0 0.0
        %1931 = vmatpush1.msra.mxu0 0.0
        %1932 = vmatprep.subr.mxu0 0.0
        %1933 = vmatpush1.msra.mxu0 0.0
        %1934 = vmatprep.subr.mxu0 0.0
        %1935 = vmatpush1.msra.mxu0 0.0
        %1936 = vmatprep.mubr.f32.mxu0 0.0
        %1937 = vmatmul.mubr.f32.gmra.mrb[0].mxu0 %v1870
        %v1938 = vpop.f32.mrb[0].mxu0
        %v1939 = vadd.f32 0.0, %v1938
        %v1940 = vpop.f32.mrb[0].mxu0
        %1941 = vdwg.mxu0
        %v1943 = vsel %vm1824, %v1864, 0
        %1945 = vmatprep.subr.mxu0 0.0
        %1946 = vmatpush1.msra.mxu0 %v1372
        %1947 = vmatprep.subr.mxu0 0.0
        %1948 = vmatpush1.msra.mxu0 0.0
        %1949 = vmatprep.subr.mxu0 0.0
        %1950 = vmatpush1.msra.mxu0 0.0
        %1951 = vmatprep.subr.mxu0 0.0
        %1952 = vmatpush1.msra.mxu0 0.0
        %1953 = vmatprep.subr.mxu0 0.0
        %1954 = vmatpush1.msra.mxu0 0.0
        %1955 = vmatprep.subr.mxu0 0.0
        %1956 = vmatpush1.msra.mxu0 0.0
        %1957 = vmatprep.subr.mxu0 0.0
        %1958 = vmatpush1.msra.mxu0 0.0
        %1959 = vmatprep.subr.mxu0 0.0
        %1960 = vmatpush1.msra.mxu0 0.0
        %1961 = vmatprep.subr.mxu0 0.0
        %1962 = vmatpush1.msra.mxu0 0.0
        %1963 = vmatprep.subr.mxu0 0.0
        %1964 = vmatpush1.msra.mxu0 0.0
        %1965 = vmatprep.subr.mxu0 0.0
        %1966 = vmatpush1.msra.mxu0 0.0
        %1967 = vmatprep.subr.mxu0 0.0
        %1968 = vmatpush1.msra.mxu0 0.0
        %1969 = vmatprep.subr.mxu0 0.0
        %1970 = vmatpush1.msra.mxu0 0.0
        %1971 = vmatprep.subr.mxu0 0.0
        %1972 = vmatpush1.msra.mxu0 0.0
        %1973 = vmatprep.subr.mxu0 0.0
        %1974 = vmatpush1.msra.mxu0 0.0
        %1975 = vmatprep.subr.mxu0 0.0
        %1976 = vmatpush1.msra.mxu0 0.0
        %1977 = vmatprep.subr.mxu0 0.0
        %1978 = vmatpush1.msra.mxu0 0.0
        %1979 = vmatprep.subr.mxu0 0.0
        %1980 = vmatpush1.msra.mxu0 0.0
        %1981 = vmatprep.subr.mxu0 0.0
        %1982 = vmatpush1.msra.mxu0 0.0
        %1983 = vmatprep.subr.mxu0 0.0
        %1984 = vmatpush1.msra.mxu0 0.0
        %1985 = vmatprep.subr.mxu0 0.0
        %1986 = vmatpush1.msra.mxu0 0.0
        %1987 = vmatprep.subr.mxu0 0.0
        %1988 = vmatpush1.msra.mxu0 0.0
        %1989 = vmatprep.subr.mxu0 0.0
        %1990 = vmatpush1.msra.mxu0 0.0
        %1991 = vmatprep.subr.mxu0 0.0
        %1992 = vmatpush1.msra.mxu0 0.0
        %1993 = vmatprep.subr.mxu0 0.0
        %1994 = vmatpush1.msra.mxu0 0.0
        %1995 = vmatprep.subr.mxu0 0.0
        %1996 = vmatpush1.msra.mxu0 0.0
        %1997 = vmatprep.subr.mxu0 0.0
        %1998 = vmatpush1.msra.mxu0 0.0
        %1999 = vmatprep.subr.mxu0 0.0
        %2000 = vmatpush1.msra.mxu0 0.0
        %2001 = vmatprep.subr.mxu0 0.0
        %2002 = vmatpush1.msra.mxu0 0.0
        %2003 = vmatprep.subr.mxu0 0.0
        %2004 = vmatpush1.msra.mxu0 0.0
        %2005 = vmatprep.subr.mxu0 0.0
        %2006 = vmatpush1.msra.mxu0 0.0
        %2007 = vmatprep.subr.mxu0 0.0
        %2008 = vmatpush1.msra.mxu0 0.0
        %2009 = vmatprep.mubr.f32.mxu0 0.0
        %2010 = vmatmul.mubr.f32.gmra.mrb[0].mxu0 %v1943
        %v2011 = vpop.f32.mrb[0].mxu0
        %v2012 = vadd.f32 0.0, %v2011
        %v2013 = vpop.f32.mrb[0].mxu0
        %2014 = vdwg.mxu0
        %v2016 = vsel %vm1824, %v1866, 0
        %2018 = vmatprep.subr.mxu0 0.0
        %2019 = vmatpush1.msra.mxu0 %v1442
        %2020 = vmatprep.subr.mxu0 0.0
        %2021 = vmatpush1.msra.mxu0 0.0
        %2022 = vmatprep.subr.mxu0 0.0
        %2023 = vmatpush1.msra.mxu0 0.0
        %2024 = vmatprep.subr.mxu0 0.0
        %2025 = vmatpush1.msra.mxu0 0.0
        %2026 = vmatprep.subr.mxu0 0.0
        %2027 = vmatpush1.msra.mxu0 0.0
        %2028 = vmatprep.subr.mxu0 0.0
        %2029 = vmatpush1.msra.mxu0 0.0
        %2030 = vmatprep.subr.mxu0 0.0
        %2031 = vmatpush1.msra.mxu0 0.0
        %2032 = vmatprep.subr.mxu0 0.0
        %2033 = vmatpush1.msra.mxu0 0.0
        %2034 = vmatprep.subr.mxu0 0.0
        %2035 = vmatpush1.msra.mxu0 0.0
        %2036 = vmatprep.subr.mxu0 0.0
        %2037 = vmatpush1.msra.mxu0 0.0
        %2038 = vmatprep.subr.mxu0 0.0
        %2039 = vmatpush1.msra.mxu0 0.0
        %2040 = vmatprep.subr.mxu0 0.0
        %2041 = vmatpush1.msra.mxu0 0.0
        %2042 = vmatprep.subr.mxu0 0.0
        %2043 = vmatpush1.msra.mxu0 0.0
        %2044 = vmatprep.subr.mxu0 0.0
        %2045 = vmatpush1.msra.mxu0 0.0
        %2046 = vmatprep.subr.mxu0 0.0
        %2047 = vmatpush1.msra.mxu0 0.0
        %2048 = vmatprep.subr.mxu0 0.0
        %2049 = vmatpush1.msra.mxu0 0.0
        %2050 = vmatprep.subr.mxu0 0.0
        %2051 = vmatpush1.msra.mxu0 0.0
        %2052 = vmatprep.subr.mxu0 0.0
        %2053 = vmatpush1.msra.mxu0 0.0
        %2054 = vmatprep.subr.mxu0 0.0
        %2055 = vmatpush1.msra.mxu0 0.0
        %2056 = vmatprep.subr.mxu0 0.0
        %2057 = vmatpush1.msra.mxu0 0.0
        %2058 = vmatprep.subr.mxu0 0.0
        %2059 = vmatpush1.msra.mxu0 0.0
        %2060 = vmatprep.subr.mxu0 0.0
        %2061 = vmatpush1.msra.mxu0 0.0
        %2062 = vmatprep.subr.mxu0 0.0
        %2063 = vmatpush1.msra.mxu0 0.0
        %2064 = vmatprep.subr.mxu0 0.0
        %2065 = vmatpush1.msra.mxu0 0.0
        %2066 = vmatprep.subr.mxu0 0.0
        %2067 = vmatpush1.msra.mxu0 0.0
        %2068 = vmatprep.subr.mxu0 0.0
        %2069 = vmatpush1.msra.mxu0 0.0
        %2070 = vmatprep.subr.mxu0 0.0
        %2071 = vmatpush1.msra.mxu0 0.0
        %2072 = vmatprep.subr.mxu0 0.0
        %2073 = vmatpush1.msra.mxu0 0.0
        %2074 = vmatprep.subr.mxu0 0.0
        %2075 = vmatpush1.msra.mxu0 0.0
        %2076 = vmatprep.subr.mxu0 0.0
        %2077 = vmatpush1.msra.mxu0 0.0
        %2078 = vmatprep.subr.mxu0 0.0
        %2079 = vmatpush1.msra.mxu0 0.0
        %2080 = vmatprep.subr.mxu0 0.0
        %2081 = vmatpush1.msra.mxu0 0.0
        %2082 = vmatprep.mubr.f32.mxu0 0.0
        %2083 = vmatmul.mubr.f32.gmra.mrb[0].mxu0 %v2016
        %v2084 = vpop.f32.mrb[0].mxu0
        %v2085 = vadd.f32 0.0, %v2084
        %v2086 = vpop.f32.mrb[0].mxu0
        %2087 = vdwg.mxu0
        %v2089 = vsel %vm1824, %v1868, 0
        %2091 = vmatprep.subr.mxu0 0.0
        %2092 = vmatpush1.msra.mxu0 %v1512
        %2093 = vmatprep.subr.mxu0 0.0
        %2094 = vmatpush1.msra.mxu0 0.0
        %2095 = vmatprep.subr.mxu0 0.0
        %2096 = vmatpush1.msra.mxu0 0.0
        %2097 = vmatprep.subr.mxu0 0.0
        %2098 = vmatpush1.msra.mxu0 0.0
        %2099 = vmatprep.subr.mxu0 0.0
        %2100 = vmatpush1.msra.mxu0 0.0
        %2101 = vmatprep.subr.mxu0 0.0
        %2102 = vmatpush1.msra.mxu0 0.0
        %2103 = vmatprep.subr.mxu0 0.0
        %2104 = vmatpush1.msra.mxu0 0.0
        %2105 = vmatprep.subr.mxu0 0.0
        %2106 = vmatpush1.msra.mxu0 0.0
        %2107 = vmatprep.subr.mxu0 0.0
        %2108 = vmatpush1.msra.mxu0 0.0
        %2109 = vmatprep.subr.mxu0 0.0
        %2110 = vmatpush1.msra.mxu0 0.0
        %2111 = vmatprep.subr.mxu0 0.0
        %2112 = vmatpush1.msra.mxu0 0.0
        %2113 = vmatprep.subr.mxu0 0.0
        %2114 = vmatpush1.msra.mxu0 0.0
        %2115 = vmatprep.subr.mxu0 0.0
        %2116 = vmatpush1.msra.mxu0 0.0
        %2117 = vmatprep.subr.mxu0 0.0
        %2118 = vmatpush1.msra.mxu0 0.0
        %2119 = vmatprep.subr.mxu0 0.0
        %2120 = vmatpush1.msra.mxu0 0.0
        %2121 = vmatprep.subr.mxu0 0.0
        %2122 = vmatpush1.msra.mxu0 0.0
        %2123 = vmatprep.subr.mxu0 0.0
        %2124 = vmatpush1.msra.mxu0 0.0
        %2125 = vmatprep.subr.mxu0 0.0
        %2126 = vmatpush1.msra.mxu0 0.0
        %2127 = vmatprep.subr.mxu0 0.0
        %2128 = vmatpush1.msra.mxu0 0.0
        %2129 = vmatprep.subr.mxu0 0.0
        %2130 = vmatpush1.msra.mxu0 0.0
        %2131 = vmatprep.subr.mxu0 0.0
        %2132 = vmatpush1.msra.mxu0 0.0
        %2133 = vmatprep.subr.mxu0 0.0
        %2134 = vmatpush1.msra.mxu0 0.0
        %2135 = vmatprep.subr.mxu0 0.0
        %2136 = vmatpush1.msra.mxu0 0.0
        %2137 = vmatprep.subr.mxu0 0.0
        %2138 = vmatpush1.msra.mxu0 0.0
        %2139 = vmatprep.subr.mxu0 0.0
        %2140 = vmatpush1.msra.mxu0 0.0
        %2141 = vmatprep.subr.mxu0 0.0
        %2142 = vmatpush1.msra.mxu0 0.0
        %2143 = vmatprep.subr.mxu0 0.0
        %2144 = vmatpush1.msra.mxu0 0.0
        %2145 = vmatprep.subr.mxu0 0.0
        %2146 = vmatpush1.msra.mxu0 0.0
        %2147 = vmatprep.subr.mxu0 0.0
        %2148 = vmatpush1.msra.mxu0 0.0
        %2149 = vmatprep.subr.mxu0 0.0
        %2150 = vmatpush1.msra.mxu0 0.0
        %2151 = vmatprep.subr.mxu0 0.0
        %2152 = vmatpush1.msra.mxu0 0.0
        %2153 = vmatprep.subr.mxu0 0.0
        %2154 = vmatpush1.msra.mxu0 0.0
        %2155 = vmatprep.mubr.f32.mxu0 0.0
        %2156 = vmatmul.mubr.f32.gmra.mrb[0].mxu0 %v2089
        %v2157 = vpop.f32.mrb[0].mxu0
        %v2158 = vadd.f32 0.0, %v2157
        %v2159 = vpop.f32.mrb[0].mxu0
        %2160 = vdwg.mxu0
        %v2161 = vld [vmem:[#allocation7] sm:$0xff]
        %v2162 = vld [vmem:[#allocation7 + $0x8] sm:$0xff]
        %v2163 = vld [vmem:[#allocation7 + $0x10] sm:$0xff]
        %v2164 = vld [vmem:[#allocation7 + $0x18] sm:$0xff]
        %v2165 = vld [vmem:[#allocation7 + $0x20] sm:$0xff]
        %v2166 = vld [vmem:[#allocation7 + $0x28] sm:$0xff]
        %v2167 = vld [vmem:[#allocation7 + $0x30] sm:$0xff]
        %v2168 = vld [vmem:[#allocation7 + $0x38] sm:$0xff]
        %v2169 = vld [vmem:[#allocation7 + $0x40] sm:$0xff]
        %v2170 = vld [vmem:[#allocation7 + $0x48] sm:$0xff]
        %v2171 = vld [vmem:[#allocation7 + $0x50] sm:$0xff]
        %v2172 = vld [vmem:[#allocation7 + $0x58] sm:$0xff]
        %v2173 = vld [vmem:[#allocation7 + $0x60] sm:$0xff]
        %v2174 = vld [vmem:[#allocation7 + $0x68] sm:$0xff]
        %v2175 = vld [vmem:[#allocation7 + $0x70] sm:$0xff]
        %v2176 = vld [vmem:[#allocation7 + $0x78] sm:$0xff]
        %v2178 = vsel %vm1515, %v1939, 0
        %2180 = vmatprep.subr.mxu0 0.0
        %2181 = vmatpush1.msra.mxu0 %v2161
        %2182 = vmatprep.subr.mxu0 0.0
        %2183 = vmatpush1.msra.mxu0 %v2162
        %2184 = vmatprep.subr.mxu0 0.0
        %2185 = vmatpush1.msra.mxu0 %v2163
        %2186 = vmatprep.subr.mxu0 0.0
        %2187 = vmatpush1.msra.mxu0 %v2164
        %2188 = vmatprep.subr.mxu0 0.0
        %2189 = vmatpush1.msra.mxu0 0.0
        %2190 = vmatprep.subr.mxu0 0.0
        %2191 = vmatpush1.msra.mxu0 0.0
        %2192 = vmatprep.subr.mxu0 0.0
        %2193 = vmatpush1.msra.mxu0 0.0
        %2194 = vmatprep.subr.mxu0 0.0
        %2195 = vmatpush1.msra.mxu0 0.0
        %2196 = vmatprep.subr.mxu0 0.0
        %2197 = vmatpush1.msra.mxu0 0.0
        %2198 = vmatprep.subr.mxu0 0.0
        %2199 = vmatpush1.msra.mxu0 0.0
        %2200 = vmatprep.subr.mxu0 0.0
        %2201 = vmatpush1.msra.mxu0 0.0
        %2202 = vmatprep.subr.mxu0 0.0
        %2203 = vmatpush1.msra.mxu0 0.0
        %2204 = vmatprep.subr.mxu0 0.0
        %2205 = vmatpush1.msra.mxu0 0.0
        %2206 = vmatprep.subr.mxu0 0.0
        %2207 = vmatpush1.msra.mxu0 0.0
        %2208 = vmatprep.subr.mxu0 0.0
        %2209 = vmatpush1.msra.mxu0 0.0
        %2210 = vmatprep.subr.mxu0 0.0
        %2211 = vmatpush1.msra.mxu0 0.0
        %2212 = vmatprep.subr.mxu0 0.0
        %2213 = vmatpush1.msra.mxu0 0.0
        %2214 = vmatprep.subr.mxu0 0.0
        %2215 = vmatpush1.msra.mxu0 0.0
        %2216 = vmatprep.subr.mxu0 0.0
        %2217 = vmatpush1.msra.mxu0 0.0
        %2218 = vmatprep.subr.mxu0 0.0
        %2219 = vmatpush1.msra.mxu0 0.0
        %2220 = vmatprep.subr.mxu0 0.0
        %2221 = vmatpush1.msra.mxu0 0.0
        %2222 = vmatprep.subr.mxu0 0.0
        %2223 = vmatpush1.msra.mxu0 0.0
        %2224 = vmatprep.subr.mxu0 0.0
        %2225 = vmatpush1.msra.mxu0 0.0
        %2226 = vmatprep.subr.mxu0 0.0
        %2227 = vmatpush1.msra.mxu0 0.0
        %2228 = vmatprep.subr.mxu0 0.0
        %2229 = vmatpush1.msra.mxu0 0.0
        %2230 = vmatprep.subr.mxu0 0.0
        %2231 = vmatpush1.msra.mxu0 0.0
        %2232 = vmatprep.subr.mxu0 0.0
        %2233 = vmatpush1.msra.mxu0 0.0
        %2234 = vmatprep.subr.mxu0 0.0
        %2235 = vmatpush1.msra.mxu0 0.0
        %2236 = vmatprep.subr.mxu0 0.0
        %2237 = vmatpush1.msra.mxu0 0.0
        %2238 = vmatprep.subr.mxu0 0.0
        %2239 = vmatpush1.msra.mxu0 0.0
        %2240 = vmatprep.subr.mxu0 0.0
        %2241 = vmatpush1.msra.mxu0 0.0
        %2242 = vmatprep.subr.mxu0 0.0
        %2243 = vmatpush1.msra.mxu0 0.0
        %2244 = vmatprep.mubr.f32.mxu0 0.0
        %2245 = vmatmul.mubr.f32.gmra.mrb[0].mxu0 %v2178
        %v2246 = vpop.f32.mrb[0].mxu0
        %v2247 = vadd.f32 0.0, %v2246
        %v2248 = vpop.f32.mrb[0].mxu0
        %2249 = vdwg.mxu0
        %v2251 = vsel %vm1515, %v2012, 0
        %2253 = vmatprep.subr.mxu0 0.0
        %2254 = vmatpush1.msra.mxu0 %v2165
        %2255 = vmatprep.subr.mxu0 0.0
        %2256 = vmatpush1.msra.mxu0 %v2166
        %2257 = vmatprep.subr.mxu0 0.0
        %2258 = vmatpush1.msra.mxu0 %v2167
        %2259 = vmatprep.subr.mxu0 0.0
        %2260 = vmatpush1.msra.mxu0 %v2168
        %2261 = vmatprep.subr.mxu0 0.0
        %2262 = vmatpush1.msra.mxu0 0.0
        %2263 = vmatprep.subr.mxu0 0.0
        %2264 = vmatpush1.msra.mxu0 0.0
        %2265 = vmatprep.subr.mxu0 0.0
        %2266 = vmatpush1.msra.mxu0 0.0
        %2267 = vmatprep.subr.mxu0 0.0
        %2268 = vmatpush1.msra.mxu0 0.0
        %2269 = vmatprep.subr.mxu0 0.0
        %2270 = vmatpush1.msra.mxu0 0.0
        %2271 = vmatprep.subr.mxu0 0.0
        %2272 = vmatpush1.msra.mxu0 0.0
        %2273 = vmatprep.subr.mxu0 0.0
        %2274 = vmatpush1.msra.mxu0 0.0
        %2275 = vmatprep.subr.mxu0 0.0
        %2276 = vmatpush1.msra.mxu0 0.0
        %2277 = vmatprep.subr.mxu0 0.0
        %2278 = vmatpush1.msra.mxu0 0.0
        %2279 = vmatprep.subr.mxu0 0.0
        %2280 = vmatpush1.msra.mxu0 0.0
        %2281 = vmatprep.subr.mxu0 0.0
        %2282 = vmatpush1.msra.mxu0 0.0
        %2283 = vmatprep.subr.mxu0 0.0
        %2284 = vmatpush1.msra.mxu0 0.0
        %2285 = vmatprep.subr.mxu0 0.0
        %2286 = vmatpush1.msra.mxu0 0.0
        %2287 = vmatprep.subr.mxu0 0.0
        %2288 = vmatpush1.msra.mxu0 0.0
        %2289 = vmatprep.subr.mxu0 0.0
        %2290 = vmatpush1.msra.mxu0 0.0
        %2291 = vmatprep.subr.mxu0 0.0
        %2292 = vmatpush1.msra.mxu0 0.0
        %2293 = vmatprep.subr.mxu0 0.0
        %2294 = vmatpush1.msra.mxu0 0.0
        %2295 = vmatprep.subr.mxu0 0.0
        %2296 = vmatpush1.msra.mxu0 0.0
        %2297 = vmatprep.subr.mxu0 0.0
        %2298 = vmatpush1.msra.mxu0 0.0
        %2299 = vmatprep.subr.mxu0 0.0
        %2300 = vmatpush1.msra.mxu0 0.0
        %2301 = vmatprep.subr.mxu0 0.0
        %2302 = vmatpush1.msra.mxu0 0.0
        %2303 = vmatprep.subr.mxu0 0.0
        %2304 = vmatpush1.msra.mxu0 0.0
        %2305 = vmatprep.subr.mxu0 0.0
        %2306 = vmatpush1.msra.mxu0 0.0
        %2307 = vmatprep.subr.mxu0 0.0
        %2308 = vmatpush1.msra.mxu0 0.0
        %2309 = vmatprep.subr.mxu0 0.0
        %2310 = vmatpush1.msra.mxu0 0.0
        %2311 = vmatprep.subr.mxu0 0.0
        %2312 = vmatpush1.msra.mxu0 0.0
        %2313 = vmatprep.subr.mxu0 0.0
        %2314 = vmatpush1.msra.mxu0 0.0
        %2315 = vmatprep.subr.mxu0 0.0
        %2316 = vmatpush1.msra.mxu0 0.0
        %2317 = vmatprep.mubr.f32.mxu0 0.0
        %2318 = vmatmul.mubr.f32.gmra.mrb[0].mxu0 %v2251
        %v2319 = vpop.f32.mrb[0].mxu0
        %v2320 = vadd.f32 0.0, %v2319
        %v2321 = vpop.f32.mrb[0].mxu0
        %2322 = vdwg.mxu0
        %v2324 = vsel %vm1515, %v2085, 0
        %2326 = vmatprep.subr.mxu0 0.0
        %2327 = vmatpush1.msra.mxu0 %v2169
        %2328 = vmatprep.subr.mxu0 0.0
        %2329 = vmatpush1.msra.mxu0 %v2170
        %2330 = vmatprep.subr.mxu0 0.0
        %2331 = vmatpush1.msra.mxu0 %v2171
        %2332 = vmatprep.subr.mxu0 0.0
        %2333 = vmatpush1.msra.mxu0 %v2172
        %2334 = vmatprep.subr.mxu0 0.0
        %2335 = vmatpush1.msra.mxu0 0.0
        %2336 = vmatprep.subr.mxu0 0.0
        %2337 = vmatpush1.msra.mxu0 0.0
        %2338 = vmatprep.subr.mxu0 0.0
        %2339 = vmatpush1.msra.mxu0 0.0
        %2340 = vmatprep.subr.mxu0 0.0
        %2341 = vmatpush1.msra.mxu0 0.0
        %2342 = vmatprep.subr.mxu0 0.0
        %2343 = vmatpush1.msra.mxu0 0.0
        %2344 = vmatprep.subr.mxu0 0.0
        %2345 = vmatpush1.msra.mxu0 0.0
        %2346 = vmatprep.subr.mxu0 0.0
        %2347 = vmatpush1.msra.mxu0 0.0
        %2348 = vmatprep.subr.mxu0 0.0
        %2349 = vmatpush1.msra.mxu0 0.0
        %2350 = vmatprep.subr.mxu0 0.0
        %2351 = vmatpush1.msra.mxu0 0.0
        %2352 = vmatprep.subr.mxu0 0.0
        %2353 = vmatpush1.msra.mxu0 0.0
        %2354 = vmatprep.subr.mxu0 0.0
        %2355 = vmatpush1.msra.mxu0 0.0
        %2356 = vmatprep.subr.mxu0 0.0
        %2357 = vmatpush1.msra.mxu0 0.0
        %2358 = vmatprep.subr.mxu0 0.0
        %2359 = vmatpush1.msra.mxu0 0.0
        %2360 = vmatprep.subr.mxu0 0.0
        %2361 = vmatpush1.msra.mxu0 0.0
        %2362 = vmatprep.subr.mxu0 0.0
        %2363 = vmatpush1.msra.mxu0 0.0
        %2364 = vmatprep.subr.mxu0 0.0
        %2365 = vmatpush1.msra.mxu0 0.0
        %2366 = vmatprep.subr.mxu0 0.0
        %2367 = vmatpush1.msra.mxu0 0.0
        %2368 = vmatprep.subr.mxu0 0.0
        %2369 = vmatpush1.msra.mxu0 0.0
        %2370 = vmatprep.subr.mxu0 0.0
        %2371 = vmatpush1.msra.mxu0 0.0
        %2372 = vmatprep.subr.mxu0 0.0
        %2373 = vmatpush1.msra.mxu0 0.0
        %2374 = vmatprep.subr.mxu0 0.0
        %2375 = vmatpush1.msra.mxu0 0.0
        %2376 = vmatprep.subr.mxu0 0.0
        %2377 = vmatpush1.msra.mxu0 0.0
        %2378 = vmatprep.subr.mxu0 0.0
        %2379 = vmatpush1.msra.mxu0 0.0
        %2380 = vmatprep.subr.mxu0 0.0
        %2381 = vmatpush1.msra.mxu0 0.0
        %2382 = vmatprep.subr.mxu0 0.0
        %2383 = vmatpush1.msra.mxu0 0.0
        %2384 = vmatprep.subr.mxu0 0.0
        %2385 = vmatpush1.msra.mxu0 0.0
        %2386 = vmatprep.subr.mxu0 0.0
        %2387 = vmatpush1.msra.mxu0 0.0
        %2388 = vmatprep.subr.mxu0 0.0
        %2389 = vmatpush1.msra.mxu0 0.0
        %2390 = vmatprep.mubr.f32.mxu0 0.0
        %2391 = vmatmul.mubr.f32.gmra.mrb[0].mxu0 %v2324
        %v2392 = vpop.f32.mrb[0].mxu0
        %v2393 = vadd.f32 0.0, %v2392
        %v2394 = vpop.f32.mrb[0].mxu0
        %2395 = vdwg.mxu0
        %v2397 = vsel %vm1515, %v2158, 0
        %2399 = vmatprep.subr.mxu0 0.0
        %2400 = vmatpush1.msra.mxu0 %v2173
        %2401 = vmatprep.subr.mxu0 0.0
        %2402 = vmatpush1.msra.mxu0 %v2174
        %2403 = vmatprep.subr.mxu0 0.0
        %2404 = vmatpush1.msra.mxu0 %v2175
        %2405 = vmatprep.subr.mxu0 0.0
        %2406 = vmatpush1.msra.mxu0 %v2176
        %2407 = vmatprep.subr.mxu0 0.0
        %2408 = vmatpush1.msra.mxu0 0.0
        %2409 = vmatprep.subr.mxu0 0.0
        %2410 = vmatpush1.msra.mxu0 0.0
        %2411 = vmatprep.subr.mxu0 0.0
        %2412 = vmatpush1.msra.mxu0 0.0
        %2413 = vmatprep.subr.mxu0 0.0
        %2414 = vmatpush1.msra.mxu0 0.0
        %2415 = vmatprep.subr.mxu0 0.0
        %2416 = vmatpush1.msra.mxu0 0.0
        %2417 = vmatprep.subr.mxu0 0.0
        %2418 = vmatpush1.msra.mxu0 0.0
        %2419 = vmatprep.subr.mxu0 0.0
        %2420 = vmatpush1.msra.mxu0 0.0
        %2421 = vmatprep.subr.mxu0 0.0
        %2422 = vmatpush1.msra.mxu0 0.0
        %2423 = vmatprep.subr.mxu0 0.0
        %2424 = vmatpush1.msra.mxu0 0.0
        %2425 = vmatprep.subr.mxu0 0.0
        %2426 = vmatpush1.msra.mxu0 0.0
        %2427 = vmatprep.subr.mxu0 0.0
        %2428 = vmatpush1.msra.mxu0 0.0
        %2429 = vmatprep.subr.mxu0 0.0
        %2430 = vmatpush1.msra.mxu0 0.0
        %2431 = vmatprep.subr.mxu0 0.0
        %2432 = vmatpush1.msra.mxu0 0.0
        %2433 = vmatprep.subr.mxu0 0.0
        %2434 = vmatpush1.msra.mxu0 0.0
        %2435 = vmatprep.subr.mxu0 0.0
        %2436 = vmatpush1.msra.mxu0 0.0
        %2437 = vmatprep.subr.mxu0 0.0
        %2438 = vmatpush1.msra.mxu0 0.0
        %2439 = vmatprep.subr.mxu0 0.0
        %2440 = vmatpush1.msra.mxu0 0.0
        %2441 = vmatprep.subr.mxu0 0.0
        %2442 = vmatpush1.msra.mxu0 0.0
        %2443 = vmatprep.subr.mxu0 0.0
        %2444 = vmatpush1.msra.mxu0 0.0
        %2445 = vmatprep.subr.mxu0 0.0
        %2446 = vmatpush1.msra.mxu0 0.0
        %2447 = vmatprep.subr.mxu0 0.0
        %2448 = vmatpush1.msra.mxu0 0.0
        %2449 = vmatprep.subr.mxu0 0.0
        %2450 = vmatpush1.msra.mxu0 0.0
        %2451 = vmatprep.subr.mxu0 0.0
        %2452 = vmatpush1.msra.mxu0 0.0
        %2453 = vmatprep.subr.mxu0 0.0
        %2454 = vmatpush1.msra.mxu0 0.0
        %2455 = vmatprep.subr.mxu0 0.0
        %2456 = vmatpush1.msra.mxu0 0.0
        %2457 = vmatprep.subr.mxu0 0.0
        %2458 = vmatpush1.msra.mxu0 0.0
        %2459 = vmatprep.subr.mxu0 0.0
        %2460 = vmatpush1.msra.mxu0 0.0
        %2461 = vmatprep.subr.mxu0 0.0
        %2462 = vmatpush1.msra.mxu0 0.0
        %2463 = vmatprep.mubr.f32.mxu0 0.0
        %2464 = vmatmul.mubr.f32.gmra.mrb[0].mxu0 %v2397
        %v2465 = vpop.f32.mrb[0].mxu0
        %v2466 = vadd.f32 0.0, %v2465
        %v2467 = vpop.f32.mrb[0].mxu0
        %2468 = vdwg.mxu0
        %v2469 = vld [vmem:[%s6] sm:$0x1]
        %v2471 = vlaneseq
        %v2472 = vshrl.u32 %v2471, 7
        %v2473 = vsub.s32 0, %v2472
        %v2474 = vrot.slane %v2469, %v2473
        %v2476 = vadd.f32 %v2474, %v2247
        %v2477 = vadd.f32 %v2476, %v2320
        %v2478 = vadd.f32 %v2477, %v2393
        %v2479 = vadd.f32 %v2478, %v2466
        %v2480 = vadd.f32 %v514, %v2479
        %v2481 = vld [vmem:[%s7] sm:$0x1]
        %v2482 = vld [vmem:[%s8] sm:$0x1]
        %2483 = vadd.xlane.f32.xlu0 %v2480
        %v2484 = vpop.xlane.xlu0 %2483
        %v2485 = vmul.f32 %v2484, %v519
        %v2486 = vsub.f32 %v2480, %v2485
        %v2487 = vmul.f32 %v2486, %v2486
        %2488 = vadd.xlane.f32.xlu0 %v2487
        %v2489 = vpop.xlane.xlu0 %2488
        %v2490 = vmul.f32 %v2489, %v519
        %v2491 = vadd.f32 %v2490, 1e-06
        %v2492 = vrsqrt.pop %v2491
        %v2493 = vmul.f32 %v2486, %v2492
        %v2495 = vlaneseq
        %v2496 = vshrl.u32 %v2495, 7
        %v2497 = vsub.s32 0, %v2496
        %v2498 = vrot.slane %v2481, %v2497
        %v2500 = vmul.f32 %v2493, %v2498
        %v2502 = vlaneseq
        %v2503 = vshrl.u32 %v2502, 7
        %v2504 = vsub.s32 0, %v2503
        %v2505 = vrot.slane %v2482, %v2504
        %v2507 = vadd.f32 %v2500, %v2505
        %v2508 = vld [vmem:[#allocation8] sm:$0xff]
        %v2509 = vld [vmem:[#allocation8 + $0x8] sm:$0xff]
        %v2510 = vld [vmem:[#allocation8 + $0x10] sm:$0xff]
        %v2511 = vld [vmem:[#allocation8 + $0x18] sm:$0xff]
        %v2512 = vld [vmem:[#allocation8 + $0x20] sm:$0xff]
        %v2513 = vld [vmem:[#allocation8 + $0x28] sm:$0xff]
        %v2514 = vld [vmem:[#allocation8 + $0x30] sm:$0xff]
        %v2515 = vld [vmem:[#allocation8 + $0x38] sm:$0xff]
        %v2516 = vld [vmem:[#allocation8 + $0x40] sm:$0xff]
        %v2517 = vld [vmem:[#allocation8 + $0x48] sm:$0xff]
        %v2518 = vld [vmem:[#allocation8 + $0x50] sm:$0xff]
        %v2519 = vld [vmem:[#allocation8 + $0x58] sm:$0xff]
        %v2520 = vld [vmem:[#allocation8 + $0x60] sm:$0xff]
        %v2521 = vld [vmem:[#allocation8 + $0x68] sm:$0xff]
        %v2522 = vld [vmem:[#allocation8 + $0x70] sm:$0xff]
        %v2523 = vld [vmem:[#allocation8 + $0x78] sm:$0xff]
        %v2524 = vld [vmem:[#allocation8 + $0x80] sm:$0xff]
        %v2525 = vld [vmem:[#allocation8 + $0x88] sm:$0xff]
        %v2526 = vld [vmem:[#allocation8 + $0x90] sm:$0xff]
        %v2527 = vld [vmem:[#allocation8 + $0x98] sm:$0xff]
        %v2528 = vld [vmem:[#allocation8 + $0xa0] sm:$0xff]
        %v2529 = vld [vmem:[#allocation8 + $0xa8] sm:$0xff]
        %v2530 = vld [vmem:[#allocation8 + $0xb0] sm:$0xff]
        %v2531 = vld [vmem:[#allocation8 + $0xb8] sm:$0xff]
        %v2532 = vld [vmem:[#allocation8 + $0xc0] sm:$0xff]
        %v2533 = vld [vmem:[#allocation8 + $0xc8] sm:$0xff]
        %v2534 = vld [vmem:[#allocation8 + $0xd0] sm:$0xff]
        %v2535 = vld [vmem:[#allocation8 + $0xd8] sm:$0xff]
        %v2536 = vld [vmem:[#allocation8 + $0xe0] sm:$0xff]
        %v2537 = vld [vmem:[#allocation8 + $0xe8] sm:$0xff]
        %v2538 = vld [vmem:[#allocation8 + $0xf0] sm:$0xff]
        %v2539 = vld [vmem:[#allocation8 + $0xf8] sm:$0xff]
        %v2540 = vld [vmem:[#allocation8 + $0x100] sm:$0xff]
        %v2541 = vld [vmem:[#allocation8 + $0x108] sm:$0xff]
        %v2542 = vld [vmem:[#allocation8 + $0x110] sm:$0xff]
        %v2543 = vld [vmem:[#allocation8 + $0x118] sm:$0xff]
        %v2544 = vld [vmem:[#allocation8 + $0x120] sm:$0xff]
        %v2545 = vld [vmem:[#allocation8 + $0x128] sm:$0xff]
        %v2546 = vld [vmem:[#allocation8 + $0x130] sm:$0xff]
        %v2547 = vld [vmem:[#allocation8 + $0x138] sm:$0xff]
        %v2548 = vld [vmem:[#allocation8 + $0x140] sm:$0xff]
        %v2549 = vld [vmem:[#allocation8 + $0x148] sm:$0xff]
        %v2550 = vld [vmem:[#allocation8 + $0x150] sm:$0xff]
        %v2551 = vld [vmem:[#allocation8 + $0x158] sm:$0xff]
        %v2552 = vld [vmem:[#allocation8 + $0x160] sm:$0xff]
        %v2553 = vld [vmem:[#allocation8 + $0x168] sm:$0xff]
        %v2554 = vld [vmem:[#allocation8 + $0x170] sm:$0xff]
        %v2555 = vld [vmem:[#allocation8 + $0x178] sm:$0xff]
        %v2556 = vld [vmem:[#allocation8 + $0x180] sm:$0xff]
        %v2557 = vld [vmem:[#allocation8 + $0x188] sm:$0xff]
        %v2558 = vld [vmem:[#allocation8 + $0x190] sm:$0xff]
        %v2559 = vld [vmem:[#allocation8 + $0x198] sm:$0xff]
        %v2560 = vld [vmem:[#allocation8 + $0x1a0] sm:$0xff]
        %v2561 = vld [vmem:[#allocation8 + $0x1a8] sm:$0xff]
        %v2562 = vld [vmem:[#allocation8 + $0x1b0] sm:$0xff]
        %v2563 = vld [vmem:[#allocation8 + $0x1b8] sm:$0xff]
        %v2564 = vld [vmem:[#allocation8 + $0x1c0] sm:$0xff]
        %v2565 = vld [vmem:[#allocation8 + $0x1c8] sm:$0xff]
        %v2566 = vld [vmem:[#allocation8 + $0x1d0] sm:$0xff]
        %v2567 = vld [vmem:[#allocation8 + $0x1d8] sm:$0xff]
        %v2568 = vld [vmem:[#allocation8 + $0x1e0] sm:$0xff]
        %v2569 = vld [vmem:[#allocation8 + $0x1e8] sm:$0xff]
        %v2570 = vld [vmem:[#allocation8 + $0x1f0] sm:$0xff]
        %v2571 = vld [vmem:[#allocation8 + $0x1f8] sm:$0xff]
        %v2572 = vld [vmem:[%s10] sm:$0xf]
        %v2574 = vlaneseq
        %v2575 = vshrl.u32 %v2574, 7
        %v2576 = vsub.s32 0, %v2575
        %v2577 = vrot.slane %v2572, %v2576
        %v2578 = vlaneseq
        %v2579 = vshrl.u32 %v2578, 7
        %v2580 = vsub.s32 1, %v2579
        %v2581 = vrot.slane %v2572, %v2580
        %v2582 = vlaneseq
        %v2583 = vshrl.u32 %v2582, 7
        %v2584 = vsub.s32 2, %v2583
        %v2585 = vrot.slane %v2572, %v2584
        %v2586 = vlaneseq
        %v2587 = vshrl.u32 %v2586, 7
        %v2588 = vsub.s32 3, %v2587
        %v2589 = vrot.slane %v2572, %v2588
        %2594 = vmatprep.subr.mxu0 %v2509
        %2595 = vmatpush1.msra.mxu0 %v2508
        %2596 = vmatprep.subr.mxu0 %v2513
        %2597 = vmatpush1.msra.mxu0 %v2512
        %2598 = vmatprep.subr.mxu0 %v2517
        %2599 = vmatpush1.msra.mxu0 %v2516
        %2600 = vmatprep.subr.mxu0 %v2521
        %2601 = vmatpush1.msra.mxu0 %v2520
        %2602 = vmatprep.subr.mxu0 %v2525
        %2603 = vmatpush1.msra.mxu0 %v2524
        %2604 = vmatprep.subr.mxu0 %v2529
        %2605 = vmatpush1.msra.mxu0 %v2528
        %2606 = vmatprep.subr.mxu0 %v2533
        %2607 = vmatpush1.msra.mxu0 %v2532
        %2608 = vmatprep.subr.mxu0 %v2537
        %2609 = vmatpush1.msra.mxu0 %v2536
        %2610 = vmatprep.subr.mxu0 %v2541
        %2611 = vmatpush1.msra.mxu0 %v2540
        %2612 = vmatprep.subr.mxu0 %v2545
        %2613 = vmatpush1.msra.mxu0 %v2544
        %2614 = vmatprep.subr.mxu0 %v2549
        %2615 = vmatpush1.msra.mxu0 %v2548
        %2616 = vmatprep.subr.mxu0 %v2553
        %2617 = vmatpush1.msra.mxu0 %v2552
        %2618 = vmatprep.subr.mxu0 %v2557
        %2619 = vmatpush1.msra.mxu0 %v2556
        %2620 = vmatprep.subr.mxu0 %v2561
        %2621 = vmatpush1.msra.mxu0 %v2560
        %2622 = vmatprep.subr.mxu0 %v2565
        %2623 = vmatpush1.msra.mxu0 %v2564
        %2624 = vmatprep.subr.mxu0 %v2569
        %2625 = vmatpush1.msra.mxu0 %v2568
        %2626 = vmatprep.subr.mxu0 0.0
        %2627 = vmatpush1.msra.mxu0 0.0
        %2628 = vmatprep.subr.mxu0 0.0
        %2629 = vmatpush1.msra.mxu0 0.0
        %2630 = vmatprep.subr.mxu0 0.0
        %2631 = vmatpush1.msra.mxu0 0.0
        %2632 = vmatprep.subr.mxu0 0.0
        %2633 = vmatpush1.msra.mxu0 0.0
        %2634 = vmatprep.subr.mxu0 0.0
        %2635 = vmatpush1.msra.mxu0 0.0
        %2636 = vmatprep.subr.mxu0 0.0
        %2637 = vmatpush1.msra.mxu0 0.0
        %2638 = vmatprep.subr.mxu0 0.0
        %2639 = vmatpush1.msra.mxu0 0.0
        %2640 = vmatprep.subr.mxu0 0.0
        %2641 = vmatpush1.msra.mxu0 0.0
        %2642 = vmatprep.subr.mxu0 0.0
        %2643 = vmatpush1.msra.mxu0 0.0
        %2644 = vmatprep.subr.mxu0 0.0
        %2645 = vmatpush1.msra.mxu0 0.0
        %2646 = vmatprep.subr.mxu0 0.0
        %2647 = vmatpush1.msra.mxu0 0.0
        %2648 = vmatprep.subr.mxu0 0.0
        %2649 = vmatpush1.msra.mxu0 0.0
        %2650 = vmatprep.subr.mxu0 0.0
        %2651 = vmatpush1.msra.mxu0 0.0
        %2652 = vmatprep.subr.mxu0 0.0
        %2653 = vmatpush1.msra.mxu0 0.0
        %2654 = vmatprep.subr.mxu0 0.0
        %2655 = vmatpush1.msra.mxu0 0.0
        %2656 = vmatprep.subr.mxu0 0.0
        %2657 = vmatpush1.msra.mxu0 0.0
        %2658 = vmatprep.mubr.f32.mxu0 0.0
        %2659 = vmatmul.mubr.f32.gmra.mrb[0].mxu0 %v2507
        %v2660 = vpop.f32.mrb[0].mxu0
        %v2661 = vadd.f32 %v2577, %v2660
        %v2662 = vpop.f32.mrb[0].mxu0
        %v2663 = vadd.f32 %v2581, %v2662
        %2664 = vdwg.mxu0
        %2665 = vmatprep.subr.mxu0 %v2511
        %2666 = vmatpush1.msra.mxu0 %v2510
        %2667 = vmatprep.subr.mxu0 %v2515
        %2668 = vmatpush1.msra.mxu0 %v2514
        %2669 = vmatprep.subr.mxu0 %v2519
        %2670 = vmatpush1.msra.mxu0 %v2518
        %2671 = vmatprep.subr.mxu0 %v2523
        %2672 = vmatpush1.msra.mxu0 %v2522
        %2673 = vmatprep.subr.mxu0 %v2527
        %2674 = vmatpush1.msra.mxu0 %v2526
        %2675 = vmatprep.subr.mxu0 %v2531
        %2676 = vmatpush1.msra.mxu0 %v2530
        %2677 = vmatprep.subr.mxu0 %v2535
        %2678 = vmatpush1.msra.mxu0 %v2534
        %2679 = vmatprep.subr.mxu0 %v2539
        %2680 = vmatpush1.msra.mxu0 %v2538
        %2681 = vmatprep.subr.mxu0 %v2543
        %2682 = vmatpush1.msra.mxu0 %v2542
        %2683 = vmatprep.subr.mxu0 %v2547
        %2684 = vmatpush1.msra.mxu0 %v2546
        %2685 = vmatprep.subr.mxu0 %v2551
        %2686 = vmatpush1.msra.mxu0 %v2550
        %2687 = vmatprep.subr.mxu0 %v2555
        %2688 = vmatpush1.msra.mxu0 %v2554
        %2689 = vmatprep.subr.mxu0 %v2559
        %2690 = vmatpush1.msra.mxu0 %v2558
        %2691 = vmatprep.subr.mxu0 %v2563
        %2692 = vmatpush1.msra.mxu0 %v2562
        %2693 = vmatprep.subr.mxu0 %v2567
        %2694 = vmatpush1.msra.mxu0 %v2566
        %2695 = vmatprep.subr.mxu0 %v2571
        %2696 = vmatpush1.msra.mxu0 %v2570
        %2697 = vmatprep.subr.mxu0 0.0
        %2698 = vmatpush1.msra.mxu0 0.0
        %2699 = vmatprep.subr.mxu0 0.0
        %2700 = vmatpush1.msra.mxu0 0.0
        %2701 = vmatprep.subr.mxu0 0.0
        %2702 = vmatpush1.msra.mxu0 0.0
        %2703 = vmatprep.subr.mxu0 0.0
        %2704 = vmatpush1.msra.mxu0 0.0
        %2705 = vmatprep.subr.mxu0 0.0
        %2706 = vmatpush1.msra.mxu0 0.0
        %2707 = vmatprep.subr.mxu0 0.0
        %2708 = vmatpush1.msra.mxu0 0.0
        %2709 = vmatprep.subr.mxu0 0.0
        %2710 = vmatpush1.msra.mxu0 0.0
        %2711 = vmatprep.subr.mxu0 0.0
        %2712 = vmatpush1.msra.mxu0 0.0
        %2713 = vmatprep.subr.mxu0 0.0
        %2714 = vmatpush1.msra.mxu0 0.0
        %2715 = vmatprep.subr.mxu0 0.0
        %2716 = vmatpush1.msra.mxu0 0.0
        %2717 = vmatprep.subr.mxu0 0.0
        %2718 = vmatpush1.msra.mxu0 0.0
        %2719 = vmatprep.subr.mxu0 0.0
        %2720 = vmatpush1.msra.mxu0 0.0
        %2721 = vmatprep.subr.mxu0 0.0
        %2722 = vmatpush1.msra.mxu0 0.0
        %2723 = vmatprep.subr.mxu0 0.0
        %2724 = vmatpush1.msra.mxu0 0.0
        %2725 = vmatprep.subr.mxu0 0.0
        %2726 = vmatpush1.msra.mxu0 0.0
        %2727 = vmatprep.subr.mxu0 0.0
        %2728 = vmatpush1.msra.mxu0 0.0
        %2729 = vmatprep.mubr.f32.mxu0 0.0
        %2730 = vmatmul.mubr.f32.gmra.mrb[0].mxu0 %v2507
        %v2731 = vpop.f32.mrb[0].mxu0
        %v2732 = vadd.f32 %v2585, %v2731
        %v2733 = vpop.f32.mrb[0].mxu0
        %v2734 = vadd.f32 %v2589, %v2733
        %2735 = vdwg.mxu0
        %v2736 = vmul.f32 %v2661, 0.5
        %v2737 = vmul.f32 %v2663, 0.5
        %v2738 = vmul.f32 %v2732, 0.5
        %v2739 = vmul.f32 %v2734, 0.5
        %v2740 = vmul.f32 %v2661, 0.70710677
        %v2741 = vmul.f32 %v2663, 0.70710677
        %v2742 = vmul.f32 %v2732, 0.70710677
        %v2743 = vmul.f32 %v2734, 0.70710677
        %vm2744 = vcmp.ge.f32.partialorder %v2740, 0.0
        %vm2745 = vcmp.ge.f32.partialorder %v2741, 0.0
        %vm2746 = vcmp.ge.f32.partialorder %v2742, 0.0
        %vm2747 = vcmp.ge.f32.partialorder %v2743, 0.0
        %v2748 = vsel %vm2744, 1.0, -1.0
        %v2749 = vsel %vm2745, 1.0, -1.0
        %v2750 = vsel %vm2746, 1.0, -1.0
        %v2751 = vsel %vm2747, 1.0, -1.0
        %v2752 = vand.u32 2147483647, %v2740
        %v2753 = vand.u32 2147483647, %v2741
        %v2754 = vand.u32 2147483647, %v2742
        %v2755 = vand.u32 2147483647, %v2743
        %v2756 = vmul.f32 %v2752, 0.3275911
        %v2757 = vmul.f32 %v2753, 0.3275911
        %v2758 = vmul.f32 %v2754, 0.3275911
        %v2759 = vmul.f32 %v2755, 0.3275911
        %v2760 = vadd.f32 %v2756, 1.0
        %v2761 = vadd.f32 %v2757, 1.0
        %v2762 = vadd.f32 %v2758, 1.0
        %v2763 = vadd.f32 %v2759, 1.0
        %v2764 = vrcp.pop %v2760
        %v2765 = vmul.f32 1.0, %v2764
        %v2766 = vrcp.pop %v2761
        %v2767 = vmul.f32 1.0, %v2766
        %v2768 = vrcp.pop %v2762
        %v2769 = vmul.f32 1.0, %v2768
        %v2770 = vrcp.pop %v2763
        %v2771 = vmul.f32 1.0, %v2770
        %v2772 = vmul.f32 %v2765, 1.0614054
        %v2773 = vmul.f32 %v2767, 1.0614054
        %v2774 = vmul.f32 %v2769, 1.0614054
        %v2775 = vmul.f32 %v2771, 1.0614054
        %v2776 = vadd.f32 %v2772, -1.4531521
        %v2777 = vadd.f32 %v2773, -1.4531521
        %v2778 = vadd.f32 %v2774, -1.4531521
        %v2779 = vadd.f32 %v2775, -1.4531521
        %v2780 = vmul.f32 %v2776, %v2765
        %v2781 = vmul.f32 %v2777, %v2767
        %v2782 = vmul.f32 %v2778, %v2769
        %v2783 = vmul.f32 %v2779, %v2771
        %v2784 = vadd.f32 %v2780, 1.4214138
        %v2785 = vadd.f32 %v2781, 1.4214138
        %v2786 = vadd.f32 %v2782, 1.4214138
        %v2787 = vadd.f32 %v2783, 1.4214138
        %v2788 = vmul.f32 %v2784, %v2765
        %v2789 = vmul.f32 %v2785, %v2767
        %v2790 = vmul.f32 %v2786, %v2769
        %v2791 = vmul.f32 %v2787, %v2771
        %v2792 = vadd.f32 %v2788, -0.28449672
        %v2793 = vadd.f32 %v2789, -0.28449672
        %v2794 = vadd.f32 %v2790, -0.28449672
        %v2795 = vadd.f32 %v2791, -0.28449672
        %v2796 = vmul.f32 %v2792, %v2765
        %v2797 = vmul.f32 %v2793, %v2767
        %v2798 = vmul.f32 %v2794, %v2769
        %v2799 = vmul.f32 %v2795, %v2771
        %v2800 = vadd.f32 %v2796, 0.2548296
        %v2801 = vadd.f32 %v2797, 0.2548296
        %v2802 = vadd.f32 %v2798, 0.2548296
        %v2803 = vadd.f32 %v2799, 0.2548296
        %v2804 = vmul.f32 %v2800, %v2765
        %v2805 = vmul.f32 %v2801, %v2767
        %v2806 = vmul.f32 %v2802, %v2769
        %v2807 = vmul.f32 %v2803, %v2771
        %v2808 = vsub.f32 0.0, %v2752
        %v2809 = vsub.f32 0.0, %v2753
        %v2810 = vsub.f32 0.0, %v2754
        %v2811 = vsub.f32 0.0, %v2755
        %v2812 = vmul.f32 %v2808, %v2752
        %v2813 = vmul.f32 %v2809, %v2753
        %v2814 = vmul.f32 %v2810, %v2754
        %v2815 = vmul.f32 %v2811, %v2755
        %v2816 = vmul.f32 %v2812, 1.442695
        %v2817 = vpow.pop %v2816
        %v2818 = vmul.f32 %v2813, 1.442695
        %v2819 = vpow.pop %v2818
        %v2820 = vmul.f32 %v2814, 1.442695
        %v2821 = vpow.pop %v2820
        %v2822 = vmul.f32 %v2815, 1.442695
        %v2823 = vpow.pop %v2822
        %v2824 = vmul.f32 %v2804, %v2817
        %v2825 = vmul.f32 %v2805, %v2819
        %v2826 = vmul.f32 %v2806, %v2821
        %v2827 = vmul.f32 %v2807, %v2823
        %v2828 = vsub.f32 1.0, %v2824
        %v2829 = vsub.f32 1.0, %v2825
        %v2830 = vsub.f32 1.0, %v2826
        %v2831 = vsub.f32 1.0, %v2827
        %v2832 = vmul.f32 %v2748, %v2828
        %v2833 = vmul.f32 %v2749, %v2829
        %v2834 = vmul.f32 %v2750, %v2830
        %v2835 = vmul.f32 %v2751, %v2831
        %v2836 = vadd.f32 %v2832, 1.0
        %v2837 = vadd.f32 %v2833, 1.0
        %v2838 = vadd.f32 %v2834, 1.0
        %v2839 = vadd.f32 %v2835, 1.0
        %v2840 = vmul.f32 %v2736, %v2836
        %v2841 = vmul.f32 %v2737, %v2837
        %v2842 = vmul.f32 %v2738, %v2838
        %v2843 = vmul.f32 %v2739, %v2839
        %v2844 = vld [vmem:[#allocation10] sm:$0xff]
        %v2845 = vld [vmem:[#allocation10 + $0x8] sm:$0xff]
        %v2846 = vld [vmem:[#allocation10 + $0x10] sm:$0xff]
        %v2847 = vld [vmem:[#allocation10 + $0x18] sm:$0xff]
        %v2848 = vld [vmem:[#allocation10 + $0x20] sm:$0xff]
        %v2849 = vld [vmem:[#allocation10 + $0x28] sm:$0xff]
        %v2850 = vld [vmem:[#allocation10 + $0x30] sm:$0xff]
        %v2851 = vld [vmem:[#allocation10 + $0x38] sm:$0xff]
        %v2852 = vld [vmem:[#allocation10 + $0x40] sm:$0xff]
        %v2853 = vld [vmem:[#allocation10 + $0x48] sm:$0xff]
        %v2854 = vld [vmem:[#allocation10 + $0x50] sm:$0xff]
        %v2855 = vld [vmem:[#allocation10 + $0x58] sm:$0xff]
        %v2856 = vld [vmem:[#allocation10 + $0x60] sm:$0xff]
        %v2857 = vld [vmem:[#allocation10 + $0x68] sm:$0xff]
        %v2858 = vld [vmem:[#allocation10 + $0x70] sm:$0xff]
        %v2859 = vld [vmem:[#allocation10 + $0x78] sm:$0xff]
        %v2860 = vld [vmem:[#allocation10 + $0x80] sm:$0xff]
        %v2861 = vld [vmem:[#allocation10 + $0x88] sm:$0xff]
        %v2862 = vld [vmem:[#allocation10 + $0x90] sm:$0xff]
        %v2863 = vld [vmem:[#allocation10 + $0x98] sm:$0xff]
        %v2864 = vld [vmem:[#allocation10 + $0xa0] sm:$0xff]
        %v2865 = vld [vmem:[#allocation10 + $0xa8] sm:$0xff]
        %v2866 = vld [vmem:[#allocation10 + $0xb0] sm:$0xff]
        %v2867 = vld [vmem:[#allocation10 + $0xb8] sm:$0xff]
        %v2868 = vld [vmem:[#allocation10 + $0xc0] sm:$0xff]
        %v2869 = vld [vmem:[#allocation10 + $0xc8] sm:$0xff]
        %v2870 = vld [vmem:[#allocation10 + $0xd0] sm:$0xff]
        %v2871 = vld [vmem:[#allocation10 + $0xd8] sm:$0xff]
        %v2872 = vld [vmem:[#allocation10 + $0xe0] sm:$0xff]
        %v2873 = vld [vmem:[#allocation10 + $0xe8] sm:$0xff]
        %v2874 = vld [vmem:[#allocation10 + $0xf0] sm:$0xff]
        %v2875 = vld [vmem:[#allocation10 + $0xf8] sm:$0xff]
        %v2876 = vld [vmem:[#allocation10 + $0x100] sm:$0xff]
        %v2877 = vld [vmem:[#allocation10 + $0x108] sm:$0xff]
        %v2878 = vld [vmem:[#allocation10 + $0x110] sm:$0xff]
        %v2879 = vld [vmem:[#allocation10 + $0x118] sm:$0xff]
        %v2880 = vld [vmem:[#allocation10 + $0x120] sm:$0xff]
        %v2881 = vld [vmem:[#allocation10 + $0x128] sm:$0xff]
        %v2882 = vld [vmem:[#allocation10 + $0x130] sm:$0xff]
        %v2883 = vld [vmem:[#allocation10 + $0x138] sm:$0xff]
        %v2884 = vld [vmem:[#allocation10 + $0x140] sm:$0xff]
        %v2885 = vld [vmem:[#allocation10 + $0x148] sm:$0xff]
        %v2886 = vld [vmem:[#allocation10 + $0x150] sm:$0xff]
        %v2887 = vld [vmem:[#allocation10 + $0x158] sm:$0xff]
        %v2888 = vld [vmem:[#allocation10 + $0x160] sm:$0xff]
        %v2889 = vld [vmem:[#allocation10 + $0x168] sm:$0xff]
        %v2890 = vld [vmem:[#allocation10 + $0x170] sm:$0xff]
        %v2891 = vld [vmem:[#allocation10 + $0x178] sm:$0xff]
        %v2892 = vld [vmem:[#allocation10 + $0x180] sm:$0xff]
        %v2893 = vld [vmem:[#allocation10 + $0x188] sm:$0xff]
        %v2894 = vld [vmem:[#allocation10 + $0x190] sm:$0xff]
        %v2895 = vld [vmem:[#allocation10 + $0x198] sm:$0xff]
        %v2896 = vld [vmem:[#allocation10 + $0x1a0] sm:$0xff]
        %v2897 = vld [vmem:[#allocation10 + $0x1a8] sm:$0xff]
        %v2898 = vld [vmem:[#allocation10 + $0x1b0] sm:$0xff]
        %v2899 = vld [vmem:[#allocation10 + $0x1b8] sm:$0xff]
        %v2900 = vld [vmem:[#allocation10 + $0x1c0] sm:$0xff]
        %v2901 = vld [vmem:[#allocation10 + $0x1c8] sm:$0xff]
        %v2902 = vld [vmem:[#allocation10 + $0x1d0] sm:$0xff]
        %v2903 = vld [vmem:[#allocation10 + $0x1d8] sm:$0xff]
        %v2904 = vld [vmem:[#allocation10 + $0x1e0] sm:$0xff]
        %v2905 = vld [vmem:[#allocation10 + $0x1e8] sm:$0xff]
        %v2906 = vld [vmem:[#allocation10 + $0x1f0] sm:$0xff]
        %v2907 = vld [vmem:[#allocation10 + $0x1f8] sm:$0xff]
        %v2908 = vld [vmem:[%s12] sm:$0x1]
        %v2910 = vlaneseq
        %v2911 = vshrl.u32 %v2910, 7
        %v2912 = vsub.s32 0, %v2911
        %v2913 = vrot.slane %v2908, %v2912
        %2915 = vmatprep.subr.mxu0 0.0
        %2916 = vmatpush1.msra.mxu0 %v2844
        %2917 = vmatprep.subr.mxu0 0.0
        %2918 = vmatpush1.msra.mxu0 %v2845
        %2919 = vmatprep.subr.mxu0 0.0
        %2920 = vmatpush1.msra.mxu0 %v2846
        %2921 = vmatprep.subr.mxu0 0.0
        %2922 = vmatpush1.msra.mxu0 %v2847
        %2923 = vmatprep.subr.mxu0 0.0
        %2924 = vmatpush1.msra.mxu0 %v2848
        %2925 = vmatprep.subr.mxu0 0.0
        %2926 = vmatpush1.msra.mxu0 %v2849
        %2927 = vmatprep.subr.mxu0 0.0
        %2928 = vmatpush1.msra.mxu0 %v2850
        %2929 = vmatprep.subr.mxu0 0.0
        %2930 = vmatpush1.msra.mxu0 %v2851
        %2931 = vmatprep.subr.mxu0 0.0
        %2932 = vmatpush1.msra.mxu0 %v2852
        %2933 = vmatprep.subr.mxu0 0.0
        %2934 = vmatpush1.msra.mxu0 %v2853
        %2935 = vmatprep.subr.mxu0 0.0
        %2936 = vmatpush1.msra.mxu0 %v2854
        %2937 = vmatprep.subr.mxu0 0.0
        %2938 = vmatpush1.msra.mxu0 %v2855
        %2939 = vmatprep.subr.mxu0 0.0
        %2940 = vmatpush1.msra.mxu0 %v2856
        %2941 = vmatprep.subr.mxu0 0.0
        %2942 = vmatpush1.msra.mxu0 %v2857
        %2943 = vmatprep.subr.mxu0 0.0
        %2944 = vmatpush1.msra.mxu0 %v2858
        %2945 = vmatprep.subr.mxu0 0.0
        %2946 = vmatpush1.msra.mxu0 %v2859
        %2947 = vmatprep.subr.mxu0 0.0
        %2948 = vmatpush1.msra.mxu0 %v2860
        %2949 = vmatprep.subr.mxu0 0.0
        %2950 = vmatpush1.msra.mxu0 %v2861
        %2951 = vmatprep.subr.mxu0 0.0
        %2952 = vmatpush1.msra.mxu0 %v2862
        %2953 = vmatprep.subr.mxu0 0.0
        %2954 = vmatpush1.msra.mxu0 %v2863
        %2955 = vmatprep.subr.mxu0 0.0
        %2956 = vmatpush1.msra.mxu0 %v2864
        %2957 = vmatprep.subr.mxu0 0.0
        %2958 = vmatpush1.msra.mxu0 %v2865
        %2959 = vmatprep.subr.mxu0 0.0
        %2960 = vmatpush1.msra.mxu0 %v2866
        %2961 = vmatprep.subr.mxu0 0.0
        %2962 = vmatpush1.msra.mxu0 %v2867
        %2963 = vmatprep.subr.mxu0 0.0
        %2964 = vmatpush1.msra.mxu0 %v2868
        %2965 = vmatprep.subr.mxu0 0.0
        %2966 = vmatpush1.msra.mxu0 %v2869
        %2967 = vmatprep.subr.mxu0 0.0
        %2968 = vmatpush1.msra.mxu0 %v2870
        %2969 = vmatprep.subr.mxu0 0.0
        %2970 = vmatpush1.msra.mxu0 %v2871
        %2971 = vmatprep.subr.mxu0 0.0
        %2972 = vmatpush1.msra.mxu0 %v2872
        %2973 = vmatprep.subr.mxu0 0.0
        %2974 = vmatpush1.msra.mxu0 %v2873
        %2975 = vmatprep.subr.mxu0 0.0
        %2976 = vmatpush1.msra.mxu0 %v2874
        %2977 = vmatprep.subr.mxu0 0.0
        %2978 = vmatpush1.msra.mxu0 %v2875
        %2979 = vmatprep.mubr.f32.mxu0 %v2841
        %2980 = vmatmul.mubr.f32.gmra.mrb[0].mxu0 %v2840
        %v2981 = vpop.f32.mrb[0].mxu0
        %v2982 = vadd.f32 %v2913, %v2981
        %v2983 = vpop.f32.mrb[0].mxu0
        %2984 = vdwg.mxu0
        %2985 = vmatprep.subr.mxu0 0.0
        %2986 = vmatpush1.msra.mxu0 %v2876
        %2987 = vmatprep.subr.mxu0 0.0
        %2988 = vmatpush1.msra.mxu0 %v2877
        %2989 = vmatprep.subr.mxu0 0.0
        %2990 = vmatpush1.msra.mxu0 %v2878
        %2991 = vmatprep.subr.mxu0 0.0
        %2992 = vmatpush1.msra.mxu0 %v2879
        %2993 = vmatprep.subr.mxu0 0.0
        %2994 = vmatpush1.msra.mxu0 %v2880
        %2995 = vmatprep.subr.mxu0 0.0
        %2996 = vmatpush1.msra.mxu0 %v2881
        %2997 = vmatprep.subr.mxu0 0.0
        %2998 = vmatpush1.msra.mxu0 %v2882
        %2999 = vmatprep.subr.mxu0 0.0
        %3000 = vmatpush1.msra.mxu0 %v2883
        %3001 = vmatprep.subr.mxu0 0.0
        %3002 = vmatpush1.msra.mxu0 %v2884
        %3003 = vmatprep.subr.mxu0 0.0
        %3004 = vmatpush1.msra.mxu0 %v2885
        %3005 = vmatprep.subr.mxu0 0.0
        %3006 = vmatpush1.msra.mxu0 %v2886
        %3007 = vmatprep.subr.mxu0 0.0
        %3008 = vmatpush1.msra.mxu0 %v2887
        %3009 = vmatprep.subr.mxu0 0.0
        %3010 = vmatpush1.msra.mxu0 %v2888
        %3011 = vmatprep.subr.mxu0 0.0
        %3012 = vmatpush1.msra.mxu0 %v2889
        %3013 = vmatprep.subr.mxu0 0.0
        %3014 = vmatpush1.msra.mxu0 %v2890
        %3015 = vmatprep.subr.mxu0 0.0
        %3016 = vmatpush1.msra.mxu0 %v2891
        %3017 = vmatprep.subr.mxu0 0.0
        %3018 = vmatpush1.msra.mxu0 %v2892
        %3019 = vmatprep.subr.mxu0 0.0
        %3020 = vmatpush1.msra.mxu0 %v2893
        %3021 = vmatprep.subr.mxu0 0.0
        %3022 = vmatpush1.msra.mxu0 %v2894
        %3023 = vmatprep.subr.mxu0 0.0
        %3024 = vmatpush1.msra.mxu0 %v2895
        %3025 = vmatprep.subr.mxu0 0.0
        %3026 = vmatpush1.msra.mxu0 %v2896
        %3027 = vmatprep.subr.mxu0 0.0
        %3028 = vmatpush1.msra.mxu0 %v2897
        %3029 = vmatprep.subr.mxu0 0.0
        %3030 = vmatpush1.msra.mxu0 %v2898
        %3031 = vmatprep.subr.mxu0 0.0
        %3032 = vmatpush1.msra.mxu0 %v2899
        %3033 = vmatprep.subr.mxu0 0.0
        %3034 = vmatpush1.msra.mxu0 %v2900
        %3035 = vmatprep.subr.mxu0 0.0
        %3036 = vmatpush1.msra.mxu0 %v2901
        %3037 = vmatprep.subr.mxu0 0.0
        %3038 = vmatpush1.msra.mxu0 %v2902
        %3039 = vmatprep.subr.mxu0 0.0
        %3040 = vmatpush1.msra.mxu0 %v2903
        %3041 = vmatprep.subr.mxu0 0.0
        %3042 = vmatpush1.msra.mxu0 %v2904
        %3043 = vmatprep.subr.mxu0 0.0
        %3044 = vmatpush1.msra.mxu0 %v2905
        %3045 = vmatprep.subr.mxu0 0.0
        %3046 = vmatpush1.msra.mxu0 %v2906
        %3047 = vmatprep.subr.mxu0 0.0
        %3048 = vmatpush1.msra.mxu0 %v2907
        %3049 = vmatprep.mubr.f32.mxu0 %v2843
        %3050 = vmatmul.mubr.f32.gmra.mrb[0].mxu0 %v2842
        %v3051 = vpop.f32.mrb[0].mxu0
        %v3052 = vadd.f32 %v2982, %v3051
        %v3053 = vpop.f32.mrb[0].mxu0
        %3054 = vdwg.mxu0
        %v3055 = vadd.f32 %v2480, %v3052
        %3056 = vst [vmem:[%s513] sm:$0xff] %v3055
        %s3057 = sand.u32 %s318, 1
        %s3058 = scalar_lea.sflag [#allocation4], %s3057
        %s3059 = sand.u32 %s318, 1
        %s3060 = smul.addr %s3059, 8
        %s3061 = scalar_lea.vmem [#allocation11], %s3060
        // Predicated region
        $region93: #{tpu_custom_call.1} parent=71 // pred_check
          %p3062 = pneg %p328
        $region94: #{tpu_custom_call.1} parent=71 // pred_check_branch
          %3064 = sbr.rel (%p3062) target = $region96
        $region95: #{tpu_custom_call.1} parent=71 // pred_region
          %s3066 = ssub.s32 128, 128
          %3067 = vsyncadd %s3058, %s3066
          %s3068 = smul.addr %s32, 128
          %s3069 = scalar_lea.hbm %s13, %s3068
          %s3071 = sshll.u32 %s3061, 4
          %s3072 = int_to_ptr.vmem [resolvable:$true] %s3071
          %3074 = dma.vmem_to_hbm [thread:$0]  %s3072, 128, %s3069, %s3058
        $region96: #{tpu_custom_call.1} parent=71 // pred_fallthru
          _
      $region72: #{tpu_custom_call.1} parent=5 // pred_fallthru
        _
      %p3075 = scmp.le.s32.totalorder 2, %s27
      // Predicated region
      $region97: #{tpu_custom_call.1} parent=5 // pred_check
        %p3076 = pneg %p3075
      $region98: #{tpu_custom_call.1} parent=5 // pred_check_branch
        %3078 = sbr.rel (%p3076) target = $region100
      $region99: #{tpu_custom_call.1} parent=5 // pred_region
        %s3079 = ssub.s32 %s27, 2
        // Predicated region
        $region101: #{tpu_custom_call.1} parent=99 // pred_check
          %p3080 = pneg %p334
        $region102: #{tpu_custom_call.1} parent=99 // pred_check_branch
          %3082 = sbr.rel (%p3080) target = $region104
        $region103: #{tpu_custom_call.1} parent=99 // pred_region
          %s3083 = sand.u32 %s319, 1
          %s3084 = scalar_lea.sflag [#allocation4], %s3083
          %s3085 = sand.u32 %s319, 1
          %s3086 = smul.addr %s3085, 8
          %s3087 = scalar_lea.vmem [#allocation11], %s3086
          %3088 = dma.done %s3084, 128
        $region104: #{tpu_custom_call.1} parent=99 // pred_fallthru
          _
      $region100: #{tpu_custom_call.1} parent=5 // pred_fallthru
        _
    $region6: #{tpu_custom_call.1} parent=1 // loop_footer
      %s31 = sadd.s32 1, %s27
    $region7: #{tpu_custom_call.1} parent=1 // loop_footer_branch
      %26 = sbr.rel target = $region3
    $region8: #{tpu_custom_call.1} parent=1 // loop_exit
      _
    %3089 = vsyncpa [#allocation3], 1
    %s3090 = scalar_lea.sflag [#allocation3], 1
    %3091 = vsyncpa %s3090, 1
    %3092 = vsyncpa [#allocation6], 1
    %3093 = vsyncpa [#allocation9], 1
    %3094 = vsyncpa [#allocation4], 1
    %s3095 = scalar_lea.sflag [#allocation4], 1
    %3096 = vsyncpa %s3095, 1

</llo_original>
